<compile_context>
chip_gen: v6e
topology: v6e:2x2x1
jax: 0.10.0
libtpu: 0.0.40
codegen_flags: <defaults>
</compile_context>

<pallas_src>
import jax
import jax.numpy as jnp
from jax.experimental import pallas as pl
from jax.experimental.pallas import tpu as pltpu

# ----------------------------- config (small ViT) -----------------------------
B = 2            # batch
C = 3            # image channels
IMG = 16         # image height/width
P = 8            # patch size
GRID = IMG // P  # 2
N_PATCH = GRID * GRID      # 4 patches
T = N_PATCH + 1            # +1 cls token -> 5
ROWS = B * T               # 10 token rows processed jointly
D = 32           # transformer width
H = 2            # attention heads
HD = D // H      # head dim 16
MLP = 4 * D      # 128
E_OUT = 16       # CLIP projection / embed dim
LAYERS = 2
EPS = 1e-5
CPP = C * P * P  # flattened patch size (192)


# ------------------------------- kernel helpers -------------------------------
def _layernorm(x, w, b):
    mu = jnp.mean(x, axis=-1, keepdims=True)
    var = jnp.mean((x - mu) * (x - mu), axis=-1, keepdims=True)
    return (x - mu) * jax.lax.rsqrt(var + EPS) * w + b


def _full_spec(shape):
    nd = len(shape)
    return pl.BlockSpec(shape, lambda i, nd=nd: (0,) * nd)


# --------------------------------- fused kernel --------------------------------
def encoder_kernel(xflat_ref, wconv_ref, base_ref, lnio_ref, mask_ref, sel_ref,
                   wqkv_ref, bqkv_ref, wo_ref, vec_ref, wfc_ref, bfc_ref,
                   wpr_ref, proj_ref, o_ref):
    # xflat: (B*T, CPP)   patch pixels; a zero row sits at each cls position
    # wconv: (CPP, D)     conv2d(stride=P, bias=False) as a matmul
    # base:  (B*T, D)     per-batch [cls + pos[0]; pos[1:]]
    # lnio:  (4, D)       rows: ln_pre_w, ln_pre_b, ln_post_w, ln_post_b
    # mask:  (B*T, B*T)   additive block-diagonal batch mask (0 / -1e30)
    # sel:   (B, B*T)     one-hot selector of the cls row of each batch element
    # wqkv:  (L*3*H, D, HD)   per-(layer, q/k/v, head) projection weights
    # bqkv:  (L*3*H, HD)      matching biases
    # wo:    (L*H, HD, D)     per-(layer, head) output-projection slabs
    # vec:   (L*6, D)         rows per layer: ln1_w, ln1_b, b_o, ln2_w, ln2_b, b_pr
    # wfc:   (L, D, MLP)  bfc: (L, MLP)  wpr: (L, MLP, D)
    # proj:  (D, E_OUT)
    # o:     (B, E_OUT)
    scale = 1.0 / (HD ** 0.5)

    # ---- fused patch embed (+ cls via zero rows) + positional embedding ----
    x = jnp.dot(xflat_ref[...], wconv_ref[...],
                preferred_element_type=jnp.float32) + base_ref[...]      # (ROWS, D)

    # ---- ln_pre ----
    x = _layernorm(x, lnio_ref[0], lnio_ref[1])

    mask = mask_ref[...]

    for l in range(LAYERS):                     # static unroll; weights stay resident
        # ---- pre-LN multi-head self-attention over all B*T rows ----
        h = _layernorm(x, vec_ref[l * 6 + 0], vec_ref[l * 6 + 1])
        attn = jnp.zeros((ROWS, D), jnp.float32)
        for hh in range(H):                     # static unroll; weights pre-split
            iq = (l * 3 + 0) * H + hh
            ik = (l * 3 + 1) * H + hh
            iv = (l * 3 + 2) * H + hh
            qh = jnp.dot(h, wqkv_ref[iq],
                         preferred_element_type=jnp.float32) + bqkv_ref[iq]
            kh = jnp.dot(h, wqkv_ref[ik],
                         preferred_element_type=jnp.float32) + bqkv_ref[ik]
            vh = jnp.dot(h, wqkv_ref[iv],
                         preferred_element_type=jnp.float32) + bqkv_ref[iv]
            s = jax.lax.dot_general(qh, kh, (((1,), (1,)), ((), ())),
                                    preferred_element_type=jnp.float32) * scale
            s = s + mask                        # kill cross-batch attention
            s = s - jnp.max(s, axis=-1, keepdims=True)
            p = jnp.exp(s)
            p = p * pl.reciprocal(jnp.sum(p, axis=-1, keepdims=True), approx=True)
            oh = jnp.dot(p, vh, preferred_element_type=jnp.float32)      # (ROWS, HD)
            # concat(heads) @ W_o == sum_h oh @ W_o[h*HD:(h+1)*HD, :]
            attn = attn + jnp.dot(oh, wo_ref[l * H + hh],
                                  preferred_element_type=jnp.float32)
        x = x + attn + vec_ref[l * 6 + 2]       # + b_o

        # ---- pre-LN MLP (QuickGELU, as in CLIP) ----
        h2 = _layernorm(x, vec_ref[l * 6 + 3], vec_ref[l * 6 + 4])
        m = jnp.dot(h2, wfc_ref[l], preferred_element_type=jnp.float32) + bfc_ref[l]
        m = m * jax.nn.sigmoid(1.702 * m)       # QuickGELU
        m = jnp.dot(m, wpr_ref[l], preferred_element_type=jnp.float32) + vec_ref[l * 6 + 5]
        x = x + m

    # ---- head: ln_post on cls rows + projection ----
    cls_x = jnp.dot(sel_ref[...], x, preferred_element_type=jnp.float32)   # (B, D)
    hc = _layernorm(cls_x, lnio_ref[2], lnio_ref[3])
    o_ref[...] = jnp.dot(hc, proj_ref[...], preferred_element_type=jnp.float32)


# ----------------------------- weight repacking --------------------------------
def pack_weights(params):
    blocks = params["blocks"]

    # Per-(layer, q/k/v, head) projection weights & biases -> lane-aligned refs.
    w_list, b_list = [], []
    for blk in blocks:
        w = blk["w_qkv"]                      # (D, 3D), x @ w = [q | k | v]
        bqkv = blk["b_qkv"]                   # (3D,)
        for i in range(3):
            wi = w[:, i * D:(i + 1) * D]      # (D, D)
            bi = bqkv[i * D:(i + 1) * D]      # (D,)
            for hh in range(H):
                w_list.append(wi[:, hh * HD:(hh + 1) * HD])   # (D, HD)
                b_list.append(bi[hh * HD:(hh + 1) * HD])      # (HD,)
    wqkv = jnp.stack(w_list, axis=0)          # (L*3*H, D, HD)
    bqkv = jnp.stack(b_list, axis=0)          # (L*3*H, HD)

    wo = jnp.concatenate([blk["w_o"].reshape(H, HD, D) for blk in blocks], axis=0)
    vec = jnp.concatenate([
        jnp.stack([blk["ln1_w"], blk["ln1_b"], blk["b_o"],
                   blk["ln2_w"], blk["ln2_b"], blk["b_pr"]], axis=0)
        for blk in blocks], axis=0)           # (L*6, D)
    wfc = jnp.stack([blk["w_fc"] for blk in blocks], axis=0)   # (L, D, MLP)
    bfc = jnp.stack([blk["b_fc"] for blk in blocks], axis=0)   # (L, MLP)
    wpr = jnp.stack([blk["w_pr"] for blk in blocks], axis=0)   # (L, MLP, D)

    lnio = jnp.stack([params["ln_pre_w"], params["ln_pre_b"],
                      params["ln_post_w"], params["ln_post_b"]], axis=0)  # (4, D)

    base = jnp.concatenate(
        [params["cls"].reshape(1, D) + params["pos"][0:1], params["pos"][1:]], axis=0)
    base = jnp.tile(base, (B, 1))             # (B*T, D)

    w_conv = params["conv_w"].reshape(D, CPP).T   # (CPP, D)

    # Block-diagonal batch mask and cls-row selector (constants).
    row_b = jnp.repeat(jnp.arange(B), T)
    mask = jnp.where(row_b[:, None] == row_b[None, :], 0.0, -1e30).astype(jnp.float32)
    sel = (jnp.arange(ROWS)[None, :] == (jnp.arange(B) * T)[:, None]).astype(jnp.float32)

    return dict(w_conv=w_conv, base=base, lnio=lnio, mask=mask, sel=sel,
                wqkv=wqkv, bqkv=bqkv, wo=wo, vec=vec,
                wfc=wfc, bfc=bfc, wpr=wpr, proj=params["proj"])


# --------------------------------- wrapper --------------------------------------
def encode_image(image, params):
    """image: (B, C, IMG, IMG) float32, NCHW. Returns (B, E_OUT) float32."""
    pk = pack_weights(params)

    # NCHW -> (B, N_PATCH, C*P*P); insert a zero row per batch at the cls slot so
    # the single patch-embed matmul covers all B*T token rows.
    x = image.reshape(B, C, GRID, P, GRID, P)
    x = x.transpose(0, 2, 4, 1, 3, 5).reshape(B, N_PATCH, CPP)
    xflat = jnp.concatenate(
        [jnp.zeros((B, 1, CPP), jnp.float32), x], axis=1).reshape(ROWS, CPP)

    args = (xflat, pk["w_conv"], pk["base"], pk["lnio"], pk["mask"], pk["sel"],
            pk["wqkv"], pk["bqkv"], pk["wo"], pk["vec"],
            pk["wfc"], pk["bfc"], pk["wpr"], pk["proj"])

    return pl.pallas_call(
        encoder_kernel,
        out_shape=jax.ShapeDtypeStruct((B, E_OUT), jnp.float32),
        grid=(1,),   # single launch; both batches handled jointly inside the body
        in_specs=[_full_spec(a.shape) for a in args],
        out_specs=_full_spec((B, E_OUT)),
        compiler_params=pltpu.CompilerParams(
            dimension_semantics=("arbitrary",)),
    )(*args)


encode_image_jit = jax.jit(encode_image)


# ------------------------------ parameter init ----------------------------------
def init_params(key):
    keys = iter(jax.random.split(key, 64))

    def nrm(shape, scale=0.02):
        return (scale * jax.random.normal(next(keys), shape)).astype(jnp.float32)

    params = {
        "conv_w": nrm((D, C, P, P)),          # Conv2d(C, D, P, stride=P, bias=False)
        "cls": nrm((D,)),
        "pos": nrm((T, D)),
        "ln_pre_w": jnp.ones((D,), jnp.float32),
        "ln_pre_b": jnp.zeros((D,), jnp.float32),
        "ln_post_w": jnp.ones((D,), jnp.float32),
        "ln_post_b": jnp.zeros((D,), jnp.float32),
        "proj": nrm((D, E_OUT)),
        "blocks": [],
    }
    for _ in range(LAYERS):
        params["blocks"].append({
            "ln1_w": jnp.ones((D,), jnp.float32),
            "ln1_b": jnp.zeros((D,), jnp.float32),
            "w_qkv": nrm((D, 3 * D)),
            "b_qkv": jnp.zeros((3 * D,), jnp.float32),
            "w_o": nrm((D, D)),
            "b_o": jnp.zeros((D,), jnp.float32),
            "ln2_w": jnp.ones((D,), jnp.float32),
            "ln2_b": jnp.zeros((D,), jnp.float32),
            "w_fc": nrm((D, MLP)),
            "b_fc": jnp.zeros((MLP,), jnp.float32),
            "w_pr": nrm((MLP, D)),
            "b_pr": jnp.zeros((D,), jnp.float32),
        })
    return params


if __name__ == "__main__":
    key = jax.random.PRNGKey(0)
    pkey, xkey = jax.random.split(key)
    params = init_params(pkey)
    image = jax.random.normal(xkey, (B, C, IMG, IMG), dtype=jnp.float32)

    out = encode_image_jit(image, params)
    out = jax.block_until_ready(out)
    assert out.shape == (B, E_OUT), out.shape
    assert bool(jnp.all(jnp.isfinite(out)))
    print("KERNEL_OK")
</pallas_src>

<mosaic_0001>
module attributes {stable_mosaic.version = 11 : i64} {
  func.func @encoder_kernel(%arg0: i32, %arg1: memref<10x192xf32, #tpu.memory_space<vmem>>, %arg2: memref<192x32xf32, #tpu.memory_space<vmem>>, %arg3: memref<10x32xf32, #tpu.memory_space<vmem>>, %arg4: memref<4x32xf32, #tpu.memory_space<vmem>>, %arg5: memref<10x10xf32, #tpu.memory_space<vmem>>, %arg6: memref<2x10xf32, #tpu.memory_space<vmem>>, %arg7: memref<12x32x16xf32, #tpu.memory_space<vmem>>, %arg8: memref<12x16xf32, #tpu.memory_space<vmem>>, %arg9: memref<4x16x32xf32, #tpu.memory_space<vmem>>, %arg10: memref<12x32xf32, #tpu.memory_space<vmem>>, %arg11: memref<2x32x128xf32, #tpu.memory_space<vmem>>, %arg12: memref<2x128xf32, #tpu.memory_space<vmem>>, %arg13: memref<2x128x32xf32, #tpu.memory_space<vmem>>, %arg14: memref<32x16xf32, #tpu.memory_space<vmem>>, %arg15: memref<2x16xf32, #tpu.memory_space<vmem>>) attributes {dimension_semantics = [#tpu.dimension_semantics<arbitrary>], iteration_bounds = array<i64: 1>, scalar_prefetch = 0 : i64, scratch_operands = 0 : i64, tpu.core_type = #tpu.core_type<tc>, window_params = [{pipeline_mode = #tpu.pipeline_mode<synchronous>, transform_indices = @transform_0, window_bounds = array<i64: 10, 192>}, {pipeline_mode = #tpu.pipeline_mode<synchronous>, transform_indices = @transform_1, window_bounds = array<i64: 192, 32>}, {pipeline_mode = #tpu.pipeline_mode<synchronous>, transform_indices = @transform_2, window_bounds = array<i64: 10, 32>}, {pipeline_mode = #tpu.pipeline_mode<synchronous>, transform_indices = @transform_3, window_bounds = array<i64: 4, 32>}, {pipeline_mode = #tpu.pipeline_mode<synchronous>, transform_indices = @transform_4, window_bounds = array<i64: 10, 10>}, {pipeline_mode = #tpu.pipeline_mode<synchronous>, transform_indices = @transform_5, window_bounds = array<i64: 2, 10>}, {pipeline_mode = #tpu.pipeline_mode<synchronous>, transform_indices = @transform_6, window_bounds = array<i64: 12, 32, 16>}, {pipeline_mode = #tpu.pipeline_mode<synchronous>, transform_indices = @transform_7, window_bounds = array<i64: 12, 16>}, {pipeline_mode = #tpu.pipeline_mode<synchronous>, transform_indices = @transform_8, window_bounds = array<i64: 4, 16, 32>}, {pipeline_mode = #tpu.pipeline_mode<synchronous>, transform_indices = @transform_9, window_bounds = array<i64: 12, 32>}, {pipeline_mode = #tpu.pipeline_mode<synchronous>, transform_indices = @transform_10, window_bounds = array<i64: 2, 32, 128>}, {pipeline_mode = #tpu.pipeline_mode<synchronous>, transform_indices = @transform_11, window_bounds = array<i64: 2, 128>}, {pipeline_mode = #tpu.pipeline_mode<synchronous>, transform_indices = @transform_12, window_bounds = array<i64: 2, 128, 32>}, {pipeline_mode = #tpu.pipeline_mode<synchronous>, transform_indices = @transform_13, window_bounds = array<i64: 32, 16>}, {pipeline_mode = #tpu.pipeline_mode<synchronous>, transform_indices = @transform_14, window_bounds = array<i64: 2, 16>}]} {
    %c0 = arith.constant 0 : index
    %c0_0 = arith.constant 0 : index
    %0 = vector.load %arg1[%c0, %c0_0] : memref<10x192xf32, #tpu.memory_space<vmem>>, vector<10x192xf32>
    %c0_1 = arith.constant 0 : index
    %c0_2 = arith.constant 0 : index
    %1 = vector.load %arg2[%c0_1, %c0_2] : memref<192x32xf32, #tpu.memory_space<vmem>>, vector<192x32xf32>
    %cst = arith.constant dense<0.000000e+00> : vector<10x32xf32>
    %2 = tpu.matmul %0, %1, %cst {dimension_numbers = #tpu.dot_dimension_numbers<[1], [0], [0], [1], [0, 0, 1, 1], [], []>} : vector<10x192xf32>, vector<192x32xf32>, vector<10x32xf32> -> vector<10x32xf32>
    %c0_3 = arith.constant 0 : index
    %c0_4 = arith.constant 0 : index
    %3 = vector.load %arg3[%c0_3, %c0_4] : memref<10x32xf32, #tpu.memory_space<vmem>>, vector<10x32xf32>
    %4 = arith.addf %2, %3 : vector<10x32xf32>
    %c0_5 = arith.constant 0 : index
    %c0_6 = arith.constant 0 : index
    %5 = vector.load %arg4[%c0_5, %c0_6] : memref<4x32xf32, #tpu.memory_space<vmem>>, vector<1x32xf32>
    %6 = vector.shape_cast %5 : vector<1x32xf32> to vector<32xf32>
    %c1 = arith.constant 1 : index
    %c0_7 = arith.constant 0 : index
    %7 = vector.load %arg4[%c1, %c0_7] : memref<4x32xf32, #tpu.memory_space<vmem>>, vector<1x32xf32>
    %8 = vector.shape_cast %7 : vector<1x32xf32> to vector<32xf32>
    %cst_8 = arith.constant dense<0.000000e+00> : vector<10xf32>
    %9 = vector.multi_reduction <add>, %4, %cst_8 [1] : vector<10x32xf32> to vector<10xf32>
    %10 = vector.shape_cast %9 : vector<10xf32> to vector<10x1xf32>
    %cst_9 = arith.constant 3.200000e+01 : f32
    %11 = vector.broadcast %cst_9 : f32 to vector<10x1xf32>
    %12 = arith.divf %10, %11 : vector<10x1xf32>
    %13 = vector.broadcast %12 : vector<10x1xf32> to vector<10x32xf32>
    %14 = arith.subf %4, %13 : vector<10x32xf32>
    %15 = vector.broadcast %12 : vector<10x1xf32> to vector<10x32xf32>
    %16 = arith.subf %4, %15 : vector<10x32xf32>
    %17 = arith.mulf %14, %16 : vector<10x32xf32>
    %cst_10 = arith.constant dense<0.000000e+00> : vector<10xf32>
    %18 = vector.multi_reduction <add>, %17, %cst_10 [1] : vector<10x32xf32> to vector<10xf32>
    %19 = vector.shape_cast %18 : vector<10xf32> to vector<10x1xf32>
    %cst_11 = arith.constant 3.200000e+01 : f32
    %20 = vector.broadcast %cst_11 : f32 to vector<10x1xf32>
    %21 = arith.divf %19, %20 : vector<10x1xf32>
    %22 = vector.broadcast %12 : vector<10x1xf32> to vector<10x32xf32>
    %23 = arith.subf %4, %22 : vector<10x32xf32>
    %cst_12 = arith.constant 9.99999974E-6 : f32
    %24 = vector.broadcast %cst_12 : f32 to vector<10x1xf32>
    %25 = arith.addf %21, %24 : vector<10x1xf32>
    %26 = math.rsqrt %25 : vector<10x1xf32>
    %27 = vector.broadcast %26 : vector<10x1xf32> to vector<10x32xf32>
    %28 = arith.mulf %23, %27 : vector<10x32xf32>
    %29 = vector.shape_cast %6 : vector<32xf32> to vector<1x32xf32>
    %30 = vector.broadcast %29 : vector<1x32xf32> to vector<10x32xf32>
    %31 = arith.mulf %28, %30 : vector<10x32xf32>
    %32 = vector.shape_cast %8 : vector<32xf32> to vector<1x32xf32>
    %33 = vector.broadcast %32 : vector<1x32xf32> to vector<10x32xf32>
    %34 = arith.addf %31, %33 : vector<10x32xf32>
    %c0_13 = arith.constant 0 : index
    %c0_14 = arith.constant 0 : index
    %35 = vector.load %arg5[%c0_13, %c0_14] : memref<10x10xf32, #tpu.memory_space<vmem>>, vector<10x10xf32>
    %c0_15 = arith.constant 0 : index
    %c0_16 = arith.constant 0 : index
    %36 = vector.load %arg10[%c0_15, %c0_16] : memref<12x32xf32, #tpu.memory_space<vmem>>, vector<1x32xf32>
    %37 = vector.shape_cast %36 : vector<1x32xf32> to vector<32xf32>
    %c1_17 = arith.constant 1 : index
    %c0_18 = arith.constant 0 : index
    %38 = vector.load %arg10[%c1_17, %c0_18] : memref<12x32xf32, #tpu.memory_space<vmem>>, vector<1x32xf32>
    %39 = vector.shape_cast %38 : vector<1x32xf32> to vector<32xf32>
    %cst_19 = arith.constant dense<0.000000e+00> : vector<10xf32>
    %40 = vector.multi_reduction <add>, %34, %cst_19 [1] : vector<10x32xf32> to vector<10xf32>
    %41 = vector.shape_cast %40 : vector<10xf32> to vector<10x1xf32>
    %cst_20 = arith.constant 3.200000e+01 : f32
    %42 = vector.broadcast %cst_20 : f32 to vector<10x1xf32>
    %43 = arith.divf %41, %42 : vector<10x1xf32>
    %44 = vector.broadcast %43 : vector<10x1xf32> to vector<10x32xf32>
    %45 = arith.subf %34, %44 : vector<10x32xf32>
    %46 = vector.broadcast %43 : vector<10x1xf32> to vector<10x32xf32>
    %47 = arith.subf %34, %46 : vector<10x32xf32>
    %48 = arith.mulf %45, %47 : vector<10x32xf32>
    %cst_21 = arith.constant dense<0.000000e+00> : vector<10xf32>
    %49 = vector.multi_reduction <add>, %48, %cst_21 [1] : vector<10x32xf32> to vector<10xf32>
    %50 = vector.shape_cast %49 : vector<10xf32> to vector<10x1xf32>
    %cst_22 = arith.constant 3.200000e+01 : f32
    %51 = vector.broadcast %cst_22 : f32 to vector<10x1xf32>
    %52 = arith.divf %50, %51 : vector<10x1xf32>
    %53 = vector.broadcast %43 : vector<10x1xf32> to vector<10x32xf32>
    %54 = arith.subf %34, %53 : vector<10x32xf32>
    %cst_23 = arith.constant 9.99999974E-6 : f32
    %55 = vector.broadcast %cst_23 : f32 to vector<10x1xf32>
    %56 = arith.addf %52, %55 : vector<10x1xf32>
    %57 = math.rsqrt %56 : vector<10x1xf32>
    %58 = vector.broadcast %57 : vector<10x1xf32> to vector<10x32xf32>
    %59 = arith.mulf %54, %58 : vector<10x32xf32>
    %60 = vector.shape_cast %37 : vector<32xf32> to vector<1x32xf32>
    %61 = vector.broadcast %60 : vector<1x32xf32> to vector<10x32xf32>
    %62 = arith.mulf %59, %61 : vector<10x32xf32>
    %63 = vector.shape_cast %39 : vector<32xf32> to vector<1x32xf32>
    %64 = vector.broadcast %63 : vector<1x32xf32> to vector<10x32xf32>
    %65 = arith.addf %62, %64 : vector<10x32xf32>
    %cst_24 = arith.constant 0.000000e+00 : f32
    %66 = vector.broadcast %cst_24 : f32 to vector<10x32xf32>
    %c0_25 = arith.constant 0 : index
    %c0_26 = arith.constant 0 : index
    %c0_27 = arith.constant 0 : index
    %67 = vector.load %arg7[%c0_25, %c0_26, %c0_27] : memref<12x32x16xf32, #tpu.memory_space<vmem>>, vector<1x32x16xf32>
    %68 = vector.shape_cast %67 : vector<1x32x16xf32> to vector<32x16xf32>
    %cst_28 = arith.constant dense<0.000000e+00> : vector<10x16xf32>
    %69 = tpu.matmul %65, %68, %cst_28 {dimension_numbers = #tpu.dot_dimension_numbers<[1], [0], [0], [1], [0, 0, 1, 1], [], []>} : vector<10x32xf32>, vector<32x16xf32>, vector<10x16xf32> -> vector<10x16xf32>
    %c0_29 = arith.constant 0 : index
    %c0_30 = arith.constant 0 : index
    %70 = vector.load %arg8[%c0_29, %c0_30] : memref<12x16xf32, #tpu.memory_space<vmem>>, vector<1x16xf32>
    %71 = vector.shape_cast %70 : vector<1x16xf32> to vector<16xf32>
    %72 = vector.shape_cast %71 : vector<16xf32> to vector<1x16xf32>
    %73 = vector.broadcast %72 : vector<1x16xf32> to vector<10x16xf32>
    %74 = arith.addf %69, %73 : vector<10x16xf32>
    %c2 = arith.constant 2 : index
    %c0_31 = arith.constant 0 : index
    %c0_32 = arith.constant 0 : index
    %75 = vector.load %arg7[%c2, %c0_31, %c0_32] : memref<12x32x16xf32, #tpu.memory_space<vmem>>, vector<1x32x16xf32>
    %76 = vector.shape_cast %75 : vector<1x32x16xf32> to vector<32x16xf32>
    %cst_33 = arith.constant dense<0.000000e+00> : vector<10x16xf32>
    %77 = tpu.matmul %65, %76, %cst_33 {dimension_numbers = #tpu.dot_dimension_numbers<[1], [0], [0], [1], [0, 0, 1, 1], [], []>} : vector<10x32xf32>, vector<32x16xf32>, vector<10x16xf32> -> vector<10x16xf32>
    %c2_34 = arith.constant 2 : index
    %c0_35 = arith.constant 0 : index
    %78 = vector.load %arg8[%c2_34, %c0_35] : memref<12x16xf32, #tpu.memory_space<vmem>>, vector<1x16xf32>
    %79 = vector.shape_cast %78 : vector<1x16xf32> to vector<16xf32>
    %80 = vector.shape_cast %79 : vector<16xf32> to vector<1x16xf32>
    %81 = vector.broadcast %80 : vector<1x16xf32> to vector<10x16xf32>
    %82 = arith.addf %77, %81 : vector<10x16xf32>
    %c4 = arith.constant 4 : index
    %c0_36 = arith.constant 0 : index
    %c0_37 = arith.constant 0 : index
    %83 = vector.load %arg7[%c4, %c0_36, %c0_37] : memref<12x32x16xf32, #tpu.memory_space<vmem>>, vector<1x32x16xf32>
    %84 = vector.shape_cast %83 : vector<1x32x16xf32> to vector<32x16xf32>
    %cst_38 = arith.constant dense<0.000000e+00> : vector<10x16xf32>
    %85 = tpu.matmul %65, %84, %cst_38 {dimension_numbers = #tpu.dot_dimension_numbers<[1], [0], [0], [1], [0, 0, 1, 1], [], []>} : vector<10x32xf32>, vector<32x16xf32>, vector<10x16xf32> -> vector<10x16xf32>
    %c4_39 = arith.constant 4 : index
    %c0_40 = arith.constant 0 : index
    %86 = vector.load %arg8[%c4_39, %c0_40] : memref<12x16xf32, #tpu.memory_space<vmem>>, vector<1x16xf32>
    %87 = vector.shape_cast %86 : vector<1x16xf32> to vector<16xf32>
    %88 = vector.shape_cast %87 : vector<16xf32> to vector<1x16xf32>
    %89 = vector.broadcast %88 : vector<1x16xf32> to vector<10x16xf32>
    %90 = arith.addf %85, %89 : vector<10x16xf32>
    %cst_41 = arith.constant dense<0.000000e+00> : vector<10x10xf32>
    %91 = tpu.matmul %74, %82, %cst_41 {dimension_numbers = #tpu.dot_dimension_numbers<[1], [1], [0], [0], [0, 0, 1, 0], [], []>} : vector<10x16xf32>, vector<10x16xf32>, vector<10x10xf32> -> vector<10x10xf32>
    %cst_42 = arith.constant 2.500000e-01 : f32
    %92 = vector.broadcast %cst_42 : f32 to vector<10x10xf32>
    %93 = arith.mulf %91, %92 : vector<10x10xf32>
    %94 = arith.addf %93, %35 : vector<10x10xf32>
    %cst_43 = arith.constant dense<0xFF800000> : vector<10xf32>
    %95 = vector.multi_reduction <maximumf>, %94, %cst_43 [1] : vector<10x10xf32> to vector<10xf32>
    %96 = vector.shape_cast %95 : vector<10xf32> to vector<10x1xf32>
    %97 = vector.broadcast %96 : vector<10x1xf32> to vector<10x10xf32>
    %98 = arith.subf %94, %97 : vector<10x10xf32>
    %99 = math.exp %98 : vector<10x10xf32>
    %cst_44 = arith.constant dense<0.000000e+00> : vector<10xf32>
    %100 = vector.multi_reduction <add>, %99, %cst_44 [1] : vector<10x10xf32> to vector<10xf32>
    %101 = vector.shape_cast %100 : vector<10xf32> to vector<10x1xf32>
    %102 = tpu.reciprocal %101 {approx = true} : vector<10x1xf32> -> vector<10x1xf32>
    %103 = vector.broadcast %102 : vector<10x1xf32> to vector<10x10xf32>
    %104 = arith.mulf %99, %103 : vector<10x10xf32>
    %cst_45 = arith.constant dense<0.000000e+00> : vector<10x16xf32>
    %105 = tpu.matmul %104, %90, %cst_45 {dimension_numbers = #tpu.dot_dimension_numbers<[1], [0], [0], [1], [0, 0, 1, 1], [], []>} : vector<10x10xf32>, vector<10x16xf32>, vector<10x16xf32> -> vector<10x16xf32>
    %c0_46 = arith.constant 0 : index
    %c0_47 = arith.constant 0 : index
    %c0_48 = arith.constant 0 : index
    %106 = vector.load %arg9[%c0_46, %c0_47, %c0_48] : memref<4x16x32xf32, #tpu.memory_space<vmem>>, vector<1x16x32xf32>
    %107 = vector.shape_cast %106 : vector<1x16x32xf32> to vector<16x32xf32>
    %cst_49 = arith.constant dense<0.000000e+00> : vector<10x32xf32>
    %108 = tpu.matmul %105, %107, %cst_49 {dimension_numbers = #tpu.dot_dimension_numbers<[1], [0], [0], [1], [0, 0, 1, 1], [], []>} : vector<10x16xf32>, vector<16x32xf32>, vector<10x32xf32> -> vector<10x32xf32>
    %109 = arith.addf %66, %108 : vector<10x32xf32>
    %c1_50 = arith.constant 1 : index
    %c0_51 = arith.constant 0 : index
    %c0_52 = arith.constant 0 : index
    %110 = vector.load %arg7[%c1_50, %c0_51, %c0_52] : memref<12x32x16xf32, #tpu.memory_space<vmem>>, vector<1x32x16xf32>
    %111 = vector.shape_cast %110 : vector<1x32x16xf32> to vector<32x16xf32>
    %cst_53 = arith.constant dense<0.000000e+00> : vector<10x16xf32>
    %112 = tpu.matmul %65, %111, %cst_53 {dimension_numbers = #tpu.dot_dimension_numbers<[1], [0], [0], [1], [0, 0, 1, 1], [], []>} : vector<10x32xf32>, vector<32x16xf32>, vector<10x16xf32> -> vector<10x16xf32>
    %c1_54 = arith.constant 1 : index
    %c0_55 = arith.constant 0 : index
    %113 = vector.load %arg8[%c1_54, %c0_55] : memref<12x16xf32, #tpu.memory_space<vmem>>, vector<1x16xf32>
    %114 = vector.shape_cast %113 : vector<1x16xf32> to vector<16xf32>
    %115 = vector.shape_cast %114 : vector<16xf32> to vector<1x16xf32>
    %116 = vector.broadcast %115 : vector<1x16xf32> to vector<10x16xf32>
    %117 = arith.addf %112, %116 : vector<10x16xf32>
    %c3 = arith.constant 3 : index
    %c0_56 = arith.constant 0 : index
    %c0_57 = arith.constant 0 : index
    %118 = vector.load %arg7[%c3, %c0_56, %c0_57] : memref<12x32x16xf32, #tpu.memory_space<vmem>>, vector<1x32x16xf32>
    %119 = vector.shape_cast %118 : vector<1x32x16xf32> to vector<32x16xf32>
    %cst_58 = arith.constant dense<0.000000e+00> : vector<10x16xf32>
    %120 = tpu.matmul %65, %119, %cst_58 {dimension_numbers = #tpu.dot_dimension_numbers<[1], [0], [0], [1], [0, 0, 1, 1], [], []>} : vector<10x32xf32>, vector<32x16xf32>, vector<10x16xf32> -> vector<10x16xf32>
    %c3_59 = arith.constant 3 : index
    %c0_60 = arith.constant 0 : index
    %121 = vector.load %arg8[%c3_59, %c0_60] : memref<12x16xf32, #tpu.memory_space<vmem>>, vector<1x16xf32>
    %122 = vector.shape_cast %121 : vector<1x16xf32> to vector<16xf32>
    %123 = vector.shape_cast %122 : vector<16xf32> to vector<1x16xf32>
    %124 = vector.broadcast %123 : vector<1x16xf32> to vector<10x16xf32>
    %125 = arith.addf %120, %124 : vector<10x16xf32>
    %c5 = arith.constant 5 : index
    %c0_61 = arith.constant 0 : index
    %c0_62 = arith.constant 0 : index
    %126 = vector.load %arg7[%c5, %c0_61, %c0_62] : memref<12x32x16xf32, #tpu.memory_space<vmem>>, vector<1x32x16xf32>
    %127 = vector.shape_cast %126 : vector<1x32x16xf32> to vector<32x16xf32>
    %cst_63 = arith.constant dense<0.000000e+00> : vector<10x16xf32>
    %128 = tpu.matmul %65, %127, %cst_63 {dimension_numbers = #tpu.dot_dimension_numbers<[1], [0], [0], [1], [0, 0, 1, 1], [], []>} : vector<10x32xf32>, vector<32x16xf32>, vector<10x16xf32> -> vector<10x16xf32>
    %c5_64 = arith.constant 5 : index
    %c0_65 = arith.constant 0 : index
    %129 = vector.load %arg8[%c5_64, %c0_65] : memref<12x16xf32, #tpu.memory_space<vmem>>, vector<1x16xf32>
    %130 = vector.shape_cast %129 : vector<1x16xf32> to vector<16xf32>
    %131 = vector.shape_cast %130 : vector<16xf32> to vector<1x16xf32>
    %132 = vector.broadcast %131 : vector<1x16xf32> to vector<10x16xf32>
    %133 = arith.addf %128, %132 : vector<10x16xf32>
    %cst_66 = arith.constant dense<0.000000e+00> : vector<10x10xf32>
    %134 = tpu.matmul %117, %125, %cst_66 {dimension_numbers = #tpu.dot_dimension_numbers<[1], [1], [0], [0], [0, 0, 1, 0], [], []>} : vector<10x16xf32>, vector<10x16xf32>, vector<10x10xf32> -> vector<10x10xf32>
    %cst_67 = arith.constant 2.500000e-01 : f32
    %135 = vector.broadcast %cst_67 : f32 to vector<10x10xf32>
    %136 = arith.mulf %134, %135 : vector<10x10xf32>
    %137 = arith.addf %136, %35 : vector<10x10xf32>
    %cst_68 = arith.constant dense<0xFF800000> : vector<10xf32>
    %138 = vector.multi_reduction <maximumf>, %137, %cst_68 [1] : vector<10x10xf32> to vector<10xf32>
    %139 = vector.shape_cast %138 : vector<10xf32> to vector<10x1xf32>
    %140 = vector.broadcast %139 : vector<10x1xf32> to vector<10x10xf32>
    %141 = arith.subf %137, %140 : vector<10x10xf32>
    %142 = math.exp %141 : vector<10x10xf32>
    %cst_69 = arith.constant dense<0.000000e+00> : vector<10xf32>
    %143 = vector.multi_reduction <add>, %142, %cst_69 [1] : vector<10x10xf32> to vector<10xf32>
    %144 = vector.shape_cast %143 : vector<10xf32> to vector<10x1xf32>
    %145 = tpu.reciprocal %144 {approx = true} : vector<10x1xf32> -> vector<10x1xf32>
    %146 = vector.broadcast %145 : vector<10x1xf32> to vector<10x10xf32>
    %147 = arith.mulf %142, %146 : vector<10x10xf32>
    %cst_70 = arith.constant dense<0.000000e+00> : vector<10x16xf32>
    %148 = tpu.matmul %147, %133, %cst_70 {dimension_numbers = #tpu.dot_dimension_numbers<[1], [0], [0], [1], [0, 0, 1, 1], [], []>} : vector<10x10xf32>, vector<10x16xf32>, vector<10x16xf32> -> vector<10x16xf32>
    %c1_71 = arith.constant 1 : index
    %c0_72 = arith.constant 0 : index
    %c0_73 = arith.constant 0 : index
    %149 = vector.load %arg9[%c1_71, %c0_72, %c0_73] : memref<4x16x32xf32, #tpu.memory_space<vmem>>, vector<1x16x32xf32>
    %150 = vector.shape_cast %149 : vector<1x16x32xf32> to vector<16x32xf32>
    %cst_74 = arith.constant dense<0.000000e+00> : vector<10x32xf32>
    %151 = tpu.matmul %148, %150, %cst_74 {dimension_numbers = #tpu.dot_dimension_numbers<[1], [0], [0], [1], [0, 0, 1, 1], [], []>} : vector<10x16xf32>, vector<16x32xf32>, vector<10x32xf32> -> vector<10x32xf32>
    %152 = arith.addf %109, %151 : vector<10x32xf32>
    %153 = arith.addf %34, %152 : vector<10x32xf32>
    %c2_75 = arith.constant 2 : index
    %c0_76 = arith.constant 0 : index
    %154 = vector.load %arg10[%c2_75, %c0_76] : memref<12x32xf32, #tpu.memory_space<vmem>>, vector<1x32xf32>
    %155 = vector.shape_cast %154 : vector<1x32xf32> to vector<32xf32>
    %156 = vector.shape_cast %155 : vector<32xf32> to vector<1x32xf32>
    %157 = vector.broadcast %156 : vector<1x32xf32> to vector<10x32xf32>
    %158 = arith.addf %153, %157 : vector<10x32xf32>
    %c3_77 = arith.constant 3 : index
    %c0_78 = arith.constant 0 : index
    %159 = vector.load %arg10[%c3_77, %c0_78] : memref<12x32xf32, #tpu.memory_space<vmem>>, vector<1x32xf32>
    %160 = vector.shape_cast %159 : vector<1x32xf32> to vector<32xf32>
    %c4_79 = arith.constant 4 : index
    %c0_80 = arith.constant 0 : index
    %161 = vector.load %arg10[%c4_79, %c0_80] : memref<12x32xf32, #tpu.memory_space<vmem>>, vector<1x32xf32>
    %162 = vector.shape_cast %161 : vector<1x32xf32> to vector<32xf32>
    %cst_81 = arith.constant dense<0.000000e+00> : vector<10xf32>
    %163 = vector.multi_reduction <add>, %158, %cst_81 [1] : vector<10x32xf32> to vector<10xf32>
    %164 = vector.shape_cast %163 : vector<10xf32> to vector<10x1xf32>
    %cst_82 = arith.constant 3.200000e+01 : f32
    %165 = vector.broadcast %cst_82 : f32 to vector<10x1xf32>
    %166 = arith.divf %164, %165 : vector<10x1xf32>
    %167 = vector.broadcast %166 : vector<10x1xf32> to vector<10x32xf32>
    %168 = arith.subf %158, %167 : vector<10x32xf32>
    %169 = vector.broadcast %166 : vector<10x1xf32> to vector<10x32xf32>
    %170 = arith.subf %158, %169 : vector<10x32xf32>
    %171 = arith.mulf %168, %170 : vector<10x32xf32>
    %cst_83 = arith.constant dense<0.000000e+00> : vector<10xf32>
    %172 = vector.multi_reduction <add>, %171, %cst_83 [1] : vector<10x32xf32> to vector<10xf32>
    %173 = vector.shape_cast %172 : vector<10xf32> to vector<10x1xf32>
    %cst_84 = arith.constant 3.200000e+01 : f32
    %174 = vector.broadcast %cst_84 : f32 to vector<10x1xf32>
    %175 = arith.divf %173, %174 : vector<10x1xf32>
    %176 = vector.broadcast %166 : vector<10x1xf32> to vector<10x32xf32>
    %177 = arith.subf %158, %176 : vector<10x32xf32>
    %cst_85 = arith.constant 9.99999974E-6 : f32
    %178 = vector.broadcast %cst_85 : f32 to vector<10x1xf32>
    %179 = arith.addf %175, %178 : vector<10x1xf32>
    %180 = math.rsqrt %179 : vector<10x1xf32>
    %181 = vector.broadcast %180 : vector<10x1xf32> to vector<10x32xf32>
    %182 = arith.mulf %177, %181 : vector<10x32xf32>
    %183 = vector.shape_cast %160 : vector<32xf32> to vector<1x32xf32>
    %184 = vector.broadcast %183 : vector<1x32xf32> to vector<10x32xf32>
    %185 = arith.mulf %182, %184 : vector<10x32xf32>
    %186 = vector.shape_cast %162 : vector<32xf32> to vector<1x32xf32>
    %187 = vector.broadcast %186 : vector<1x32xf32> to vector<10x32xf32>
    %188 = arith.addf %185, %187 : vector<10x32xf32>
    %c0_86 = arith.constant 0 : index
    %c0_87 = arith.constant 0 : index
    %c0_88 = arith.constant 0 : index
    %189 = vector.load %arg11[%c0_86, %c0_87, %c0_88] : memref<2x32x128xf32, #tpu.memory_space<vmem>>, vector<1x32x128xf32>
    %190 = vector.shape_cast %189 : vector<1x32x128xf32> to vector<32x128xf32>
    %cst_89 = arith.constant dense<0.000000e+00> : vector<10x128xf32>
    %191 = tpu.matmul %188, %190, %cst_89 {dimension_numbers = #tpu.dot_dimension_numbers<[1], [0], [0], [1], [0, 0, 1, 1], [], []>} : vector<10x32xf32>, vector<32x128xf32>, vector<10x128xf32> -> vector<10x128xf32>
    %c0_90 = arith.constant 0 : index
    %c0_91 = arith.constant 0 : index
    %192 = vector.load %arg12[%c0_90, %c0_91] : memref<2x128xf32, #tpu.memory_space<vmem>>, vector<1x128xf32>
    %193 = vector.shape_cast %192 : vector<1x128xf32> to vector<128xf32>
    %194 = vector.shape_cast %193 : vector<128xf32> to vector<1x128xf32>
    %195 = vector.broadcast %194 : vector<1x128xf32> to vector<10x128xf32>
    %196 = arith.addf %191, %195 : vector<10x128xf32>
    %cst_92 = arith.constant 1.702000e+00 : f32
    %197 = vector.broadcast %cst_92 : f32 to vector<10x128xf32>
    %198 = arith.mulf %197, %196 : vector<10x128xf32>
    %199 = arith.negf %198 : vector<10x128xf32>
    %200 = math.exp %199 : vector<10x128xf32>
    %cst_93 = arith.constant 1.000000e+00 : f32
    %201 = vector.broadcast %cst_93 : f32 to vector<10x128xf32>
    %202 = arith.addf %201, %200 : vector<10x128xf32>
    %203 = arith.divf %201, %202 : vector<10x128xf32>
    %204 = arith.mulf %196, %203 : vector<10x128xf32>
    %c0_94 = arith.constant 0 : index
    %c0_95 = arith.constant 0 : index
    %c0_96 = arith.constant 0 : index
    %205 = vector.load %arg13[%c0_94, %c0_95, %c0_96] : memref<2x128x32xf32, #tpu.memory_space<vmem>>, vector<1x128x32xf32>
    %206 = vector.shape_cast %205 : vector<1x128x32xf32> to vector<128x32xf32>
    %cst_97 = arith.constant dense<0.000000e+00> : vector<10x32xf32>
    %207 = tpu.matmul %204, %206, %cst_97 {dimension_numbers = #tpu.dot_dimension_numbers<[1], [0], [0], [1], [0, 0, 1, 1], [], []>} : vector<10x128xf32>, vector<128x32xf32>, vector<10x32xf32> -> vector<10x32xf32>
    %c5_98 = arith.constant 5 : index
    %c0_99 = arith.constant 0 : index
    %208 = vector.load %arg10[%c5_98, %c0_99] : memref<12x32xf32, #tpu.memory_space<vmem>>, vector<1x32xf32>
    %209 = vector.shape_cast %208 : vector<1x32xf32> to vector<32xf32>
    %210 = vector.shape_cast %209 : vector<32xf32> to vector<1x32xf32>
    %211 = vector.broadcast %210 : vector<1x32xf32> to vector<10x32xf32>
    %212 = arith.addf %207, %211 : vector<10x32xf32>
    %213 = arith.addf %158, %212 : vector<10x32xf32>
    %c6 = arith.constant 6 : index
    %c0_100 = arith.constant 0 : index
    %214 = vector.load %arg10[%c6, %c0_100] : memref<12x32xf32, #tpu.memory_space<vmem>>, vector<1x32xf32>
    %215 = vector.shape_cast %214 : vector<1x32xf32> to vector<32xf32>
    %c7 = arith.constant 7 : index
    %c0_101 = arith.constant 0 : index
    %216 = vector.load %arg10[%c7, %c0_101] : memref<12x32xf32, #tpu.memory_space<vmem>>, vector<1x32xf32>
    %217 = vector.shape_cast %216 : vector<1x32xf32> to vector<32xf32>
    %cst_102 = arith.constant dense<0.000000e+00> : vector<10xf32>
    %218 = vector.multi_reduction <add>, %213, %cst_102 [1] : vector<10x32xf32> to vector<10xf32>
    %219 = vector.shape_cast %218 : vector<10xf32> to vector<10x1xf32>
    %cst_103 = arith.constant 3.200000e+01 : f32
    %220 = vector.broadcast %cst_103 : f32 to vector<10x1xf32>
    %221 = arith.divf %219, %220 : vector<10x1xf32>
    %222 = vector.broadcast %221 : vector<10x1xf32> to vector<10x32xf32>
    %223 = arith.subf %213, %222 : vector<10x32xf32>
    %224 = vector.broadcast %221 : vector<10x1xf32> to vector<10x32xf32>
    %225 = arith.subf %213, %224 : vector<10x32xf32>
    %226 = arith.mulf %223, %225 : vector<10x32xf32>
    %cst_104 = arith.constant dense<0.000000e+00> : vector<10xf32>
    %227 = vector.multi_reduction <add>, %226, %cst_104 [1] : vector<10x32xf32> to vector<10xf32>
    %228 = vector.shape_cast %227 : vector<10xf32> to vector<10x1xf32>
    %cst_105 = arith.constant 3.200000e+01 : f32
    %229 = vector.broadcast %cst_105 : f32 to vector<10x1xf32>
    %230 = arith.divf %228, %229 : vector<10x1xf32>
    %231 = vector.broadcast %221 : vector<10x1xf32> to vector<10x32xf32>
    %232 = arith.subf %213, %231 : vector<10x32xf32>
    %cst_106 = arith.constant 9.99999974E-6 : f32
    %233 = vector.broadcast %cst_106 : f32 to vector<10x1xf32>
    %234 = arith.addf %230, %233 : vector<10x1xf32>
    %235 = math.rsqrt %234 : vector<10x1xf32>
    %236 = vector.broadcast %235 : vector<10x1xf32> to vector<10x32xf32>
    %237 = arith.mulf %232, %236 : vector<10x32xf32>
    %238 = vector.shape_cast %215 : vector<32xf32> to vector<1x32xf32>
    %239 = vector.broadcast %238 : vector<1x32xf32> to vector<10x32xf32>
    %240 = arith.mulf %237, %239 : vector<10x32xf32>
    %241 = vector.shape_cast %217 : vector<32xf32> to vector<1x32xf32>
    %242 = vector.broadcast %241 : vector<1x32xf32> to vector<10x32xf32>
    %243 = arith.addf %240, %242 : vector<10x32xf32>
    %cst_107 = arith.constant 0.000000e+00 : f32
    %244 = vector.broadcast %cst_107 : f32 to vector<10x32xf32>
    %c6_108 = arith.constant 6 : index
    %c0_109 = arith.constant 0 : index
    %c0_110 = arith.constant 0 : index
    %245 = vector.load %arg7[%c6_108, %c0_109, %c0_110] : memref<12x32x16xf32, #tpu.memory_space<vmem>>, vector<1x32x16xf32>
    %246 = vector.shape_cast %245 : vector<1x32x16xf32> to vector<32x16xf32>
    %cst_111 = arith.constant dense<0.000000e+00> : vector<10x16xf32>
    %247 = tpu.matmul %243, %246, %cst_111 {dimension_numbers = #tpu.dot_dimension_numbers<[1], [0], [0], [1], [0, 0, 1, 1], [], []>} : vector<10x32xf32>, vector<32x16xf32>, vector<10x16xf32> -> vector<10x16xf32>
    %c6_112 = arith.constant 6 : index
    %c0_113 = arith.constant 0 : index
    %248 = vector.load %arg8[%c6_112, %c0_113] : memref<12x16xf32, #tpu.memory_space<vmem>>, vector<1x16xf32>
    %249 = vector.shape_cast %248 : vector<1x16xf32> to vector<16xf32>
    %250 = vector.shape_cast %249 : vector<16xf32> to vector<1x16xf32>
    %251 = vector.broadcast %250 : vector<1x16xf32> to vector<10x16xf32>
    %252 = arith.addf %247, %251 : vector<10x16xf32>
    %c8 = arith.constant 8 : index
    %c0_114 = arith.constant 0 : index
    %c0_115 = arith.constant 0 : index
    %253 = vector.load %arg7[%c8, %c0_114, %c0_115] : memref<12x32x16xf32, #tpu.memory_space<vmem>>, vector<1x32x16xf32>
    %254 = vector.shape_cast %253 : vector<1x32x16xf32> to vector<32x16xf32>
    %cst_116 = arith.constant dense<0.000000e+00> : vector<10x16xf32>
    %255 = tpu.matmul %243, %254, %cst_116 {dimension_numbers = #tpu.dot_dimension_numbers<[1], [0], [0], [1], [0, 0, 1, 1], [], []>} : vector<10x32xf32>, vector<32x16xf32>, vector<10x16xf32> -> vector<10x16xf32>
    %c8_117 = arith.constant 8 : index
    %c0_118 = arith.constant 0 : index
    %256 = vector.load %arg8[%c8_117, %c0_118] : memref<12x16xf32, #tpu.memory_space<vmem>>, vector<1x16xf32>
    %257 = vector.shape_cast %256 : vector<1x16xf32> to vector<16xf32>
    %258 = vector.shape_cast %257 : vector<16xf32> to vector<1x16xf32>
    %259 = vector.broadcast %258 : vector<1x16xf32> to vector<10x16xf32>
    %260 = arith.addf %255, %259 : vector<10x16xf32>
    %c10 = arith.constant 10 : index
    %c0_119 = arith.constant 0 : index
    %c0_120 = arith.constant 0 : index
    %261 = vector.load %arg7[%c10, %c0_119, %c0_120] : memref<12x32x16xf32, #tpu.memory_space<vmem>>, vector<1x32x16xf32>
    %262 = vector.shape_cast %261 : vector<1x32x16xf32> to vector<32x16xf32>
    %cst_121 = arith.constant dense<0.000000e+00> : vector<10x16xf32>
    %263 = tpu.matmul %243, %262, %cst_121 {dimension_numbers = #tpu.dot_dimension_numbers<[1], [0], [0], [1], [0, 0, 1, 1], [], []>} : vector<10x32xf32>, vector<32x16xf32>, vector<10x16xf32> -> vector<10x16xf32>
    %c10_122 = arith.constant 10 : index
    %c0_123 = arith.constant 0 : index
    %264 = vector.load %arg8[%c10_122, %c0_123] : memref<12x16xf32, #tpu.memory_space<vmem>>, vector<1x16xf32>
    %265 = vector.shape_cast %264 : vector<1x16xf32> to vector<16xf32>
    %266 = vector.shape_cast %265 : vector<16xf32> to vector<1x16xf32>
    %267 = vector.broadcast %266 : vector<1x16xf32> to vector<10x16xf32>
    %268 = arith.addf %263, %267 : vector<10x16xf32>
    %cst_124 = arith.constant dense<0.000000e+00> : vector<10x10xf32>
    %269 = tpu.matmul %252, %260, %cst_124 {dimension_numbers = #tpu.dot_dimension_numbers<[1], [1], [0], [0], [0, 0, 1, 0], [], []>} : vector<10x16xf32>, vector<10x16xf32>, vector<10x10xf32> -> vector<10x10xf32>
    %cst_125 = arith.constant 2.500000e-01 : f32
    %270 = vector.broadcast %cst_125 : f32 to vector<10x10xf32>
    %271 = arith.mulf %269, %270 : vector<10x10xf32>
    %272 = arith.addf %271, %35 : vector<10x10xf32>
    %cst_126 = arith.constant dense<0xFF800000> : vector<10xf32>
    %273 = vector.multi_reduction <maximumf>, %272, %cst_126 [1] : vector<10x10xf32> to vector<10xf32>
    %274 = vector.shape_cast %273 : vector<10xf32> to vector<10x1xf32>
    %275 = vector.broadcast %274 : vector<10x1xf32> to vector<10x10xf32>
    %276 = arith.subf %272, %275 : vector<10x10xf32>
    %277 = math.exp %276 : vector<10x10xf32>
    %cst_127 = arith.constant dense<0.000000e+00> : vector<10xf32>
    %278 = vector.multi_reduction <add>, %277, %cst_127 [1] : vector<10x10xf32> to vector<10xf32>
    %279 = vector.shape_cast %278 : vector<10xf32> to vector<10x1xf32>
    %280 = tpu.reciprocal %279 {approx = true} : vector<10x1xf32> -> vector<10x1xf32>
    %281 = vector.broadcast %280 : vector<10x1xf32> to vector<10x10xf32>
    %282 = arith.mulf %277, %281 : vector<10x10xf32>
    %cst_128 = arith.constant dense<0.000000e+00> : vector<10x16xf32>
    %283 = tpu.matmul %282, %268, %cst_128 {dimension_numbers = #tpu.dot_dimension_numbers<[1], [0], [0], [1], [0, 0, 1, 1], [], []>} : vector<10x10xf32>, vector<10x16xf32>, vector<10x16xf32> -> vector<10x16xf32>
    %c2_129 = arith.constant 2 : index
    %c0_130 = arith.constant 0 : index
    %c0_131 = arith.constant 0 : index
    %284 = vector.load %arg9[%c2_129, %c0_130, %c0_131] : memref<4x16x32xf32, #tpu.memory_space<vmem>>, vector<1x16x32xf32>
    %285 = vector.shape_cast %284 : vector<1x16x32xf32> to vector<16x32xf32>
    %cst_132 = arith.constant dense<0.000000e+00> : vector<10x32xf32>
    %286 = tpu.matmul %283, %285, %cst_132 {dimension_numbers = #tpu.dot_dimension_numbers<[1], [0], [0], [1], [0, 0, 1, 1], [], []>} : vector<10x16xf32>, vector<16x32xf32>, vector<10x32xf32> -> vector<10x32xf32>
    %287 = arith.addf %244, %286 : vector<10x32xf32>
    %c7_133 = arith.constant 7 : index
    %c0_134 = arith.constant 0 : index
    %c0_135 = arith.constant 0 : index
    %288 = vector.load %arg7[%c7_133, %c0_134, %c0_135] : memref<12x32x16xf32, #tpu.memory_space<vmem>>, vector<1x32x16xf32>
    %289 = vector.shape_cast %288 : vector<1x32x16xf32> to vector<32x16xf32>
    %cst_136 = arith.constant dense<0.000000e+00> : vector<10x16xf32>
    %290 = tpu.matmul %243, %289, %cst_136 {dimension_numbers = #tpu.dot_dimension_numbers<[1], [0], [0], [1], [0, 0, 1, 1], [], []>} : vector<10x32xf32>, vector<32x16xf32>, vector<10x16xf32> -> vector<10x16xf32>
    %c7_137 = arith.constant 7 : index
    %c0_138 = arith.constant 0 : index
    %291 = vector.load %arg8[%c7_137, %c0_138] : memref<12x16xf32, #tpu.memory_space<vmem>>, vector<1x16xf32>
    %292 = vector.shape_cast %291 : vector<1x16xf32> to vector<16xf32>
    %293 = vector.shape_cast %292 : vector<16xf32> to vector<1x16xf32>
    %294 = vector.broadcast %293 : vector<1x16xf32> to vector<10x16xf32>
    %295 = arith.addf %290, %294 : vector<10x16xf32>
    %c9 = arith.constant 9 : index
    %c0_139 = arith.constant 0 : index
    %c0_140 = arith.constant 0 : index
    %296 = vector.load %arg7[%c9, %c0_139, %c0_140] : memref<12x32x16xf32, #tpu.memory_space<vmem>>, vector<1x32x16xf32>
    %297 = vector.shape_cast %296 : vector<1x32x16xf32> to vector<32x16xf32>
    %cst_141 = arith.constant dense<0.000000e+00> : vector<10x16xf32>
    %298 = tpu.matmul %243, %297, %cst_141 {dimension_numbers = #tpu.dot_dimension_numbers<[1], [0], [0], [1], [0, 0, 1, 1], [], []>} : vector<10x32xf32>, vector<32x16xf32>, vector<10x16xf32> -> vector<10x16xf32>
    %c9_142 = arith.constant 9 : index
    %c0_143 = arith.constant 0 : index
    %299 = vector.load %arg8[%c9_142, %c0_143] : memref<12x16xf32, #tpu.memory_space<vmem>>, vector<1x16xf32>
    %300 = vector.shape_cast %299 : vector<1x16xf32> to vector<16xf32>
    %301 = vector.shape_cast %300 : vector<16xf32> to vector<1x16xf32>
    %302 = vector.broadcast %301 : vector<1x16xf32> to vector<10x16xf32>
    %303 = arith.addf %298, %302 : vector<10x16xf32>
    %c11 = arith.constant 11 : index
    %c0_144 = arith.constant 0 : index
    %c0_145 = arith.constant 0 : index
    %304 = vector.load %arg7[%c11, %c0_144, %c0_145] : memref<12x32x16xf32, #tpu.memory_space<vmem>>, vector<1x32x16xf32>
    %305 = vector.shape_cast %304 : vector<1x32x16xf32> to vector<32x16xf32>
    %cst_146 = arith.constant dense<0.000000e+00> : vector<10x16xf32>
    %306 = tpu.matmul %243, %305, %cst_146 {dimension_numbers = #tpu.dot_dimension_numbers<[1], [0], [0], [1], [0, 0, 1, 1], [], []>} : vector<10x32xf32>, vector<32x16xf32>, vector<10x16xf32> -> vector<10x16xf32>
    %c11_147 = arith.constant 11 : index
    %c0_148 = arith.constant 0 : index
    %307 = vector.load %arg8[%c11_147, %c0_148] : memref<12x16xf32, #tpu.memory_space<vmem>>, vector<1x16xf32>
    %308 = vector.shape_cast %307 : vector<1x16xf32> to vector<16xf32>
    %309 = vector.shape_cast %308 : vector<16xf32> to vector<1x16xf32>
    %310 = vector.broadcast %309 : vector<1x16xf32> to vector<10x16xf32>
    %311 = arith.addf %306, %310 : vector<10x16xf32>
    %cst_149 = arith.constant dense<0.000000e+00> : vector<10x10xf32>
    %312 = tpu.matmul %295, %303, %cst_149 {dimension_numbers = #tpu.dot_dimension_numbers<[1], [1], [0], [0], [0, 0, 1, 0], [], []>} : vector<10x16xf32>, vector<10x16xf32>, vector<10x10xf32> -> vector<10x10xf32>
    %cst_150 = arith.constant 2.500000e-01 : f32
    %313 = vector.broadcast %cst_150 : f32 to vector<10x10xf32>
    %314 = arith.mulf %312, %313 : vector<10x10xf32>
    %315 = arith.addf %314, %35 : vector<10x10xf32>
    %cst_151 = arith.constant dense<0xFF800000> : vector<10xf32>
    %316 = vector.multi_reduction <maximumf>, %315, %cst_151 [1] : vector<10x10xf32> to vector<10xf32>
    %317 = vector.shape_cast %316 : vector<10xf32> to vector<10x1xf32>
    %318 = vector.broadcast %317 : vector<10x1xf32> to vector<10x10xf32>
    %319 = arith.subf %315, %318 : vector<10x10xf32>
    %320 = math.exp %319 : vector<10x10xf32>
    %cst_152 = arith.constant dense<0.000000e+00> : vector<10xf32>
    %321 = vector.multi_reduction <add>, %320, %cst_152 [1] : vector<10x10xf32> to vector<10xf32>
    %322 = vector.shape_cast %321 : vector<10xf32> to vector<10x1xf32>
    %323 = tpu.reciprocal %322 {approx = true} : vector<10x1xf32> -> vector<10x1xf32>
    %324 = vector.broadcast %323 : vector<10x1xf32> to vector<10x10xf32>
    %325 = arith.mulf %320, %324 : vector<10x10xf32>
    %cst_153 = arith.constant dense<0.000000e+00> : vector<10x16xf32>
    %326 = tpu.matmul %325, %311, %cst_153 {dimension_numbers = #tpu.dot_dimension_numbers<[1], [0], [0], [1], [0, 0, 1, 1], [], []>} : vector<10x10xf32>, vector<10x16xf32>, vector<10x16xf32> -> vector<10x16xf32>
    %c3_154 = arith.constant 3 : index
    %c0_155 = arith.constant 0 : index
    %c0_156 = arith.constant 0 : index
    %327 = vector.load %arg9[%c3_154, %c0_155, %c0_156] : memref<4x16x32xf32, #tpu.memory_space<vmem>>, vector<1x16x32xf32>
    %328 = vector.shape_cast %327 : vector<1x16x32xf32> to vector<16x32xf32>
    %cst_157 = arith.constant dense<0.000000e+00> : vector<10x32xf32>
    %329 = tpu.matmul %326, %328, %cst_157 {dimension_numbers = #tpu.dot_dimension_numbers<[1], [0], [0], [1], [0, 0, 1, 1], [], []>} : vector<10x16xf32>, vector<16x32xf32>, vector<10x32xf32> -> vector<10x32xf32>
    %330 = arith.addf %287, %329 : vector<10x32xf32>
    %331 = arith.addf %213, %330 : vector<10x32xf32>
    %c8_158 = arith.constant 8 : index
    %c0_159 = arith.constant 0 : index
    %332 = vector.load %arg10[%c8_158, %c0_159] : memref<12x32xf32, #tpu.memory_space<vmem>>, vector<1x32xf32>
    %333 = vector.shape_cast %332 : vector<1x32xf32> to vector<32xf32>
    %334 = vector.shape_cast %333 : vector<32xf32> to vector<1x32xf32>
    %335 = vector.broadcast %334 : vector<1x32xf32> to vector<10x32xf32>
    %336 = arith.addf %331, %335 : vector<10x32xf32>
    %c9_160 = arith.constant 9 : index
    %c0_161 = arith.constant 0 : index
    %337 = vector.load %arg10[%c9_160, %c0_161] : memref<12x32xf32, #tpu.memory_space<vmem>>, vector<1x32xf32>
    %338 = vector.shape_cast %337 : vector<1x32xf32> to vector<32xf32>
    %c10_162 = arith.constant 10 : index
    %c0_163 = arith.constant 0 : index
    %339 = vector.load %arg10[%c10_162, %c0_163] : memref<12x32xf32, #tpu.memory_space<vmem>>, vector<1x32xf32>
    %340 = vector.shape_cast %339 : vector<1x32xf32> to vector<32xf32>
    %cst_164 = arith.constant dense<0.000000e+00> : vector<10xf32>
    %341 = vector.multi_reduction <add>, %336, %cst_164 [1] : vector<10x32xf32> to vector<10xf32>
    %342 = vector.shape_cast %341 : vector<10xf32> to vector<10x1xf32>
    %cst_165 = arith.constant 3.200000e+01 : f32
    %343 = vector.broadcast %cst_165 : f32 to vector<10x1xf32>
    %344 = arith.divf %342, %343 : vector<10x1xf32>
    %345 = vector.broadcast %344 : vector<10x1xf32> to vector<10x32xf32>
    %346 = arith.subf %336, %345 : vector<10x32xf32>
    %347 = vector.broadcast %344 : vector<10x1xf32> to vector<10x32xf32>
    %348 = arith.subf %336, %347 : vector<10x32xf32>
    %349 = arith.mulf %346, %348 : vector<10x32xf32>
    %cst_166 = arith.constant dense<0.000000e+00> : vector<10xf32>
    %350 = vector.multi_reduction <add>, %349, %cst_166 [1] : vector<10x32xf32> to vector<10xf32>
    %351 = vector.shape_cast %350 : vector<10xf32> to vector<10x1xf32>
    %cst_167 = arith.constant 3.200000e+01 : f32
    %352 = vector.broadcast %cst_167 : f32 to vector<10x1xf32>
    %353 = arith.divf %351, %352 : vector<10x1xf32>
    %354 = vector.broadcast %344 : vector<10x1xf32> to vector<10x32xf32>
    %355 = arith.subf %336, %354 : vector<10x32xf32>
    %cst_168 = arith.constant 9.99999974E-6 : f32
    %356 = vector.broadcast %cst_168 : f32 to vector<10x1xf32>
    %357 = arith.addf %353, %356 : vector<10x1xf32>
    %358 = math.rsqrt %357 : vector<10x1xf32>
    %359 = vector.broadcast %358 : vector<10x1xf32> to vector<10x32xf32>
    %360 = arith.mulf %355, %359 : vector<10x32xf32>
    %361 = vector.shape_cast %338 : vector<32xf32> to vector<1x32xf32>
    %362 = vector.broadcast %361 : vector<1x32xf32> to vector<10x32xf32>
    %363 = arith.mulf %360, %362 : vector<10x32xf32>
    %364 = vector.shape_cast %340 : vector<32xf32> to vector<1x32xf32>
    %365 = vector.broadcast %364 : vector<1x32xf32> to vector<10x32xf32>
    %366 = arith.addf %363, %365 : vector<10x32xf32>
    %c1_169 = arith.constant 1 : index
    %c0_170 = arith.constant 0 : index
    %c0_171 = arith.constant 0 : index
    %367 = vector.load %arg11[%c1_169, %c0_170, %c0_171] : memref<2x32x128xf32, #tpu.memory_space<vmem>>, vector<1x32x128xf32>
    %368 = vector.shape_cast %367 : vector<1x32x128xf32> to vector<32x128xf32>
    %cst_172 = arith.constant dense<0.000000e+00> : vector<10x128xf32>
    %369 = tpu.matmul %366, %368, %cst_172 {dimension_numbers = #tpu.dot_dimension_numbers<[1], [0], [0], [1], [0, 0, 1, 1], [], []>} : vector<10x32xf32>, vector<32x128xf32>, vector<10x128xf32> -> vector<10x128xf32>
    %c1_173 = arith.constant 1 : index
    %c0_174 = arith.constant 0 : index
    %370 = vector.load %arg12[%c1_173, %c0_174] : memref<2x128xf32, #tpu.memory_space<vmem>>, vector<1x128xf32>
    %371 = vector.shape_cast %370 : vector<1x128xf32> to vector<128xf32>
    %372 = vector.shape_cast %371 : vector<128xf32> to vector<1x128xf32>
    %373 = vector.broadcast %372 : vector<1x128xf32> to vector<10x128xf32>
    %374 = arith.addf %369, %373 : vector<10x128xf32>
    %cst_175 = arith.constant 1.702000e+00 : f32
    %375 = vector.broadcast %cst_175 : f32 to vector<10x128xf32>
    %376 = arith.mulf %375, %374 : vector<10x128xf32>
    %377 = arith.negf %376 : vector<10x128xf32>
    %378 = math.exp %377 : vector<10x128xf32>
    %cst_176 = arith.constant 1.000000e+00 : f32
    %379 = vector.broadcast %cst_176 : f32 to vector<10x128xf32>
    %380 = arith.addf %379, %378 : vector<10x128xf32>
    %381 = arith.divf %379, %380 : vector<10x128xf32>
    %382 = arith.mulf %374, %381 : vector<10x128xf32>
    %c1_177 = arith.constant 1 : index
    %c0_178 = arith.constant 0 : index
    %c0_179 = arith.constant 0 : index
    %383 = vector.load %arg13[%c1_177, %c0_178, %c0_179] : memref<2x128x32xf32, #tpu.memory_space<vmem>>, vector<1x128x32xf32>
    %384 = vector.shape_cast %383 : vector<1x128x32xf32> to vector<128x32xf32>
    %cst_180 = arith.constant dense<0.000000e+00> : vector<10x32xf32>
    %385 = tpu.matmul %382, %384, %cst_180 {dimension_numbers = #tpu.dot_dimension_numbers<[1], [0], [0], [1], [0, 0, 1, 1], [], []>} : vector<10x128xf32>, vector<128x32xf32>, vector<10x32xf32> -> vector<10x32xf32>
    %c11_181 = arith.constant 11 : index
    %c0_182 = arith.constant 0 : index
    %386 = vector.load %arg10[%c11_181, %c0_182] : memref<12x32xf32, #tpu.memory_space<vmem>>, vector<1x32xf32>
    %387 = vector.shape_cast %386 : vector<1x32xf32> to vector<32xf32>
    %388 = vector.shape_cast %387 : vector<32xf32> to vector<1x32xf32>
    %389 = vector.broadcast %388 : vector<1x32xf32> to vector<10x32xf32>
    %390 = arith.addf %385, %389 : vector<10x32xf32>
    %391 = arith.addf %336, %390 : vector<10x32xf32>
    %c0_183 = arith.constant 0 : index
    %c0_184 = arith.constant 0 : index
    %392 = vector.load %arg6[%c0_183, %c0_184] : memref<2x10xf32, #tpu.memory_space<vmem>>, vector<2x10xf32>
    %cst_185 = arith.constant dense<0.000000e+00> : vector<2x32xf32>
    %393 = tpu.matmul %392, %391, %cst_185 {dimension_numbers = #tpu.dot_dimension_numbers<[1], [0], [0], [1], [0, 0, 1, 1], [], []>} : vector<2x10xf32>, vector<10x32xf32>, vector<2x32xf32> -> vector<2x32xf32>
    %c2_186 = arith.constant 2 : index
    %c0_187 = arith.constant 0 : index
    %394 = vector.load %arg4[%c2_186, %c0_187] : memref<4x32xf32, #tpu.memory_space<vmem>>, vector<1x32xf32>
    %395 = vector.shape_cast %394 : vector<1x32xf32> to vector<32xf32>
    %c3_188 = arith.constant 3 : index
    %c0_189 = arith.constant 0 : index
    %396 = vector.load %arg4[%c3_188, %c0_189] : memref<4x32xf32, #tpu.memory_space<vmem>>, vector<1x32xf32>
    %397 = vector.shape_cast %396 : vector<1x32xf32> to vector<32xf32>
    %cst_190 = arith.constant dense<0.000000e+00> : vector<2xf32>
    %398 = vector.multi_reduction <add>, %393, %cst_190 [1] : vector<2x32xf32> to vector<2xf32>
    %399 = vector.shape_cast %398 : vector<2xf32> to vector<2x1xf32>
    %cst_191 = arith.constant 3.200000e+01 : f32
    %400 = vector.broadcast %cst_191 : f32 to vector<2x1xf32>
    %401 = arith.divf %399, %400 : vector<2x1xf32>
    %402 = vector.broadcast %401 : vector<2x1xf32> to vector<2x32xf32>
    %403 = arith.subf %393, %402 : vector<2x32xf32>
    %404 = vector.broadcast %401 : vector<2x1xf32> to vector<2x32xf32>
    %405 = arith.subf %393, %404 : vector<2x32xf32>
    %406 = arith.mulf %403, %405 : vector<2x32xf32>
    %cst_192 = arith.constant dense<0.000000e+00> : vector<2xf32>
    %407 = vector.multi_reduction <add>, %406, %cst_192 [1] : vector<2x32xf32> to vector<2xf32>
    %408 = vector.shape_cast %407 : vector<2xf32> to vector<2x1xf32>
    %cst_193 = arith.constant 3.200000e+01 : f32
    %409 = vector.broadcast %cst_193 : f32 to vector<2x1xf32>
    %410 = arith.divf %408, %409 : vector<2x1xf32>
    %411 = vector.broadcast %401 : vector<2x1xf32> to vector<2x32xf32>
    %412 = arith.subf %393, %411 : vector<2x32xf32>
    %cst_194 = arith.constant 9.99999974E-6 : f32
    %413 = vector.broadcast %cst_194 : f32 to vector<2x1xf32>
    %414 = arith.addf %410, %413 : vector<2x1xf32>
    %415 = math.rsqrt %414 : vector<2x1xf32>
    %416 = vector.broadcast %415 : vector<2x1xf32> to vector<2x32xf32>
    %417 = arith.mulf %412, %416 : vector<2x32xf32>
    %418 = vector.shape_cast %395 : vector<32xf32> to vector<1x32xf32>
    %419 = vector.broadcast %418 : vector<1x32xf32> to vector<2x32xf32>
    %420 = arith.mulf %417, %419 : vector<2x32xf32>
    %421 = vector.shape_cast %397 : vector<32xf32> to vector<1x32xf32>
    %422 = vector.broadcast %421 : vector<1x32xf32> to vector<2x32xf32>
    %423 = arith.addf %420, %422 : vector<2x32xf32>
    %c0_195 = arith.constant 0 : index
    %c0_196 = arith.constant 0 : index
    %424 = vector.load %arg14[%c0_195, %c0_196] : memref<32x16xf32, #tpu.memory_space<vmem>>, vector<32x16xf32>
    %cst_197 = arith.constant dense<0.000000e+00> : vector<2x16xf32>
    %425 = tpu.matmul %423, %424, %cst_197 {dimension_numbers = #tpu.dot_dimension_numbers<[1], [0], [0], [1], [0, 0, 1, 1], [], []>} : vector<2x32xf32>, vector<32x16xf32>, vector<2x16xf32> -> vector<2x16xf32>
    %c0_198 = arith.constant 0 : index
    %c0_199 = arith.constant 0 : index
    %426 = vector.load %arg15[%c0_198, %c0_199] : memref<2x16xf32, #tpu.memory_space<vmem>>, vector<2x16xf32>
    tpu.vector_store %arg15[%c0_198, %c0_199], %425 {strides = array<i32>} : memref<2x16xf32, #tpu.memory_space<vmem>>, vector<2x16xf32>,
    return
  }
  func.func @transform_0(%arg0: i32) -> (i32, i32) {
    %c0_i32 = arith.constant 0 : i32
    %c0_i32_0 = arith.constant 0 : i32
    %c0_i32_1 = arith.constant 0 : i32
    return %c0_i32, %c0_i32_0 : i32, i32
  }
  func.func @transform_1(%arg0: i32) -> (i32, i32) {
    %c0_i32 = arith.constant 0 : i32
    %c0_i32_0 = arith.constant 0 : i32
    %c0_i32_1 = arith.constant 0 : i32
    return %c0_i32, %c0_i32_0 : i32, i32
  }
  func.func @transform_2(%arg0: i32) -> (i32, i32) {
    %c0_i32 = arith.constant 0 : i32
    %c0_i32_0 = arith.constant 0 : i32
    %c0_i32_1 = arith.constant 0 : i32
    return %c0_i32, %c0_i32_0 : i32, i32
  }
  func.func @transform_3(%arg0: i32) -> (i32, i32) {
    %c0_i32 = arith.constant 0 : i32
    %c0_i32_0 = arith.constant 0 : i32
    %c0_i32_1 = arith.constant 0 : i32
    return %c0_i32, %c0_i32_0 : i32, i32
  }
  func.func @transform_4(%arg0: i32) -> (i32, i32) {
    %c0_i32 = arith.constant 0 : i32
    %c0_i32_0 = arith.constant 0 : i32
    %c0_i32_1 = arith.constant 0 : i32
    return %c0_i32, %c0_i32_0 : i32, i32
  }
  func.func @transform_5(%arg0: i32) -> (i32, i32) {
    %c0_i32 = arith.constant 0 : i32
    %c0_i32_0 = arith.constant 0 : i32
    %c0_i32_1 = arith.constant 0 : i32
    return %c0_i32, %c0_i32_0 : i32, i32
  }
  func.func @transform_6(%arg0: i32) -> (i32, i32, i32) {
    %c0_i32 = arith.constant 0 : i32
    %c0_i32_0 = arith.constant 0 : i32
    %c0_i32_1 = arith.constant 0 : i32
    %c0_i32_2 = arith.constant 0 : i32
    return %c0_i32, %c0_i32_0, %c0_i32_1 : i32, i32, i32
  }
  func.func @transform_7(%arg0: i32) -> (i32, i32) {
    %c0_i32 = arith.constant 0 : i32
    %c0_i32_0 = arith.constant 0 : i32
    %c0_i32_1 = arith.constant 0 : i32
    return %c0_i32, %c0_i32_0 : i32, i32
  }
  func.func @transform_8(%arg0: i32) -> (i32, i32, i32) {
    %c0_i32 = arith.constant 0 : i32
    %c0_i32_0 = arith.constant 0 : i32
    %c0_i32_1 = arith.constant 0 : i32
    %c0_i32_2 = arith.constant 0 : i32
    return %c0_i32, %c0_i32_0, %c0_i32_1 : i32, i32, i32
  }
  func.func @transform_9(%arg0: i32) -> (i32, i32) {
    %c0_i32 = arith.constant 0 : i32
    %c0_i32_0 = arith.constant 0 : i32
    %c0_i32_1 = arith.constant 0 : i32
    return %c0_i32, %c0_i32_0 : i32, i32
  }
  func.func @transform_10(%arg0: i32) -> (i32, i32, i32) {
    %c0_i32 = arith.constant 0 : i32
    %c0_i32_0 = arith.constant 0 : i32
    %c0_i32_1 = arith.constant 0 : i32
    %c0_i32_2 = arith.constant 0 : i32
    return %c0_i32, %c0_i32_0, %c0_i32_1 : i32, i32, i32
  }
  func.func @transform_11(%arg0: i32) -> (i32, i32) {
    %c0_i32 = arith.constant 0 : i32
    %c0_i32_0 = arith.constant 0 : i32
    %c0_i32_1 = arith.constant 0 : i32
    return %c0_i32, %c0_i32_0 : i32, i32
  }
  func.func @transform_12(%arg0: i32) -> (i32, i32, i32) {
    %c0_i32 = arith.constant 0 : i32
    %c0_i32_0 = arith.constant 0 : i32
    %c0_i32_1 = arith.constant 0 : i32
    %c0_i32_2 = arith.constant 0 : i32
    return %c0_i32, %c0_i32_0, %c0_i32_1 : i32, i32, i32
  }
  func.func @transform_13(%arg0: i32) -> (i32, i32) {
    %c0_i32 = arith.constant 0 : i32
    %c0_i32_0 = arith.constant 0 : i32
    %c0_i32_1 = arith.constant 0 : i32
    return %c0_i32, %c0_i32_0 : i32, i32
  }
  func.func @transform_14(%arg0: i32) -> (i32, i32) {
    %c0_i32 = arith.constant 0 : i32
    %c0_i32_0 = arith.constant 0 : i32
    %c0_i32_1 = arith.constant 0 : i32
    return %c0_i32, %c0_i32_0 : i32, i32
  }
}

</mosaic_0001>

<llo_original>
// kernel: tile.9
$region0: #{tile.9}
  %s0 = inlined_call_operand.vmem [shape: f32[2,5,32], index: 0, kind: input, shape index: {}]
  %s1 = inlined_call_operand.vmem [shape: f32[10,32], index: 1, kind: output, shape index: {}]
  %v2 = vld [vmem:[%s0] sm:$0x1f]
  %vm3 = vcmask 261120
  %4 = vst.msk [vmem:[%s1] sm:$0x1f] %vm3, %v2
  %s5 = scalar_lea.vmem %s0, 8
  %v6 = vld [vmem:[%s5] sm:$0x1f]
  %vm7 = vcmask 261120
  %s8 = scalar_lea.vmem %s1, 5
  %9 = vst.msk [vmem:[%s8] sm:$0x1f] %vm7, %v6

// kernel: eq.15
$region0: #{eq.15}
  %s0 = inlined_call_operand.vmem [shape: s32[2,5], index: 0, kind: input, shape index: {}]
  %s1 = inlined_call_operand.vmem [shape: s32[10], index: 1, kind: output, shape index: {}]
  $region1: #{eq.15} parent=0
    #allocation0 [shape = 'u8[4096]{0}', space=vmem, size = 0x1000, scoped, tag = 'scoped mem for output reshape']
    #allocation1 [shape = 'u8[4096]{0}', space=vmem, size = 0x1000, scoped, tag = 'scoped mem for input reshape']
    %s3 = sshll.u32 1, 2
    %s4 = ssub.s32 %s3, 1
    %v5 = vld [vmem:[%s0] sm:%s4]
    %6 = vst [vmem:[#allocation1] sm:%s4] %v5
    %v7 = vld [vmem:[#allocation1] sm:$0x1]
    %vm8 = vcmask 39936
    %9 = vst.msk [vmem:[#allocation0] sm:$0x1] %vm8, %v7
    %s10 = scalar_lea.vmem [#allocation1], 1
    %v11 = vld [vmem:[%s10] sm:$0x1]
    %12 = vrot.lane.b32.xlu0 %v11, 5
    %v13 = vpop.permute.xlu0 %12
    %vm14 = vcmask 80936
    %15 = vst.msk [vmem:[#allocation0] sm:$0x1] %vm14, %v13
    %s17 = sshll.u32 1, 1
    %s18 = ssub.s32 %s17, 1
    %v20 = vld [vmem:[#allocation0] sm:%s18]
    %s21 = sshll.u32 1, 1
    %s22 = ssub.s32 %s21, 1
    %23 = vst [vmem:[%s1] sm:%s22] %v20

// kernel: encode_image.1
$region0: #{encode_image.1}
  #allocation0 [shape = 'u32[]', space=smem, size = 0x4, offset = 0x4, fixed_abs, tag = 'smem constant byte address 0x4 - core index']
  #allocation1 [shape = 'u32[144,128]{1,0:T(1,128)}', space=vmem, size = 0x12000, scoped, tag = 'internal scratch']
  %s0 = inlined_call_operand.vmem [shape: f32[10,192], index: 0, kind: input, shape index: {}]
  %s1 = inlined_call_operand.vmem [shape: f32[192,32], index: 1, kind: input, shape index: {}]
  %s2 = inlined_call_operand.vmem [shape: f32[10,32], index: 2, kind: input, shape index: {}]
  %s3 = inlined_call_operand.vmem [shape: f32[4,32], index: 3, kind: input, shape index: {}]
  %s4 = inlined_call_operand.vmem [shape: f32[10,10], index: 4, kind: input, shape index: {}]
  %s5 = inlined_call_operand.vmem [shape: f32[2,10], index: 5, kind: input, shape index: {}]
  %s6 = inlined_call_operand.vmem [shape: f32[12,32,16], index: 6, kind: input, shape index: {}]
  %s7 = inlined_call_operand.vmem [shape: f32[12,16], index: 7, kind: input, shape index: {}]
  %s8 = inlined_call_operand.vmem [shape: f32[4,16,32], index: 8, kind: input, shape index: {}]
  %s9 = inlined_call_operand.vmem [shape: f32[12,32], index: 9, kind: input, shape index: {}]
  %s10 = inlined_call_operand.vmem [shape: f32[2,32,128], index: 10, kind: input, shape index: {}]
  %s11 = inlined_call_operand.vmem [shape: f32[2,128], index: 11, kind: input, shape index: {}]
  %s12 = inlined_call_operand.vmem [shape: f32[2,128,32], index: 12, kind: input, shape index: {}]
  %s13 = inlined_call_operand.vmem [shape: f32[32,16], index: 13, kind: input, shape index: {}]
  %s14 = inlined_call_operand.hbm [shape: f32[2,16], index: 14, kind: output, shape index: {}]
  %s15 = sld [smem:[#allocation0]]
  $region66: #{encode_image.1} parent=0
    _
  %s17 = ssub.s32 1, %s15
  %s18 = scalar_select 0, %s17, %s15
  $region1: #{encode_image.1} parent=0
    #allocation2 [shape = 'u8[1024]{0}', space=vmem, size = 0x400, scoped, tag = 'output window, operand 0, single buffered']
    #allocation3 [shape = 's32[1]{0}', space=sflag, size = 0x4, scoped, tag = 'scoped memory for encode_image.1']
    %19 = vsyncpa [#allocation3], 0
    // Predicated region
    $region2: #{encode_image.1} parent=1 // pred_check
      _
    $region3: #{encode_image.1} parent=1 // pred_check_branch
      %21 = sbr.rel (0) target = $region5
    $region4: #{encode_image.1} parent=1 // pred_region
      _
    $region5: #{encode_image.1} parent=1 // pred_fallthru
      _
    // Predicated region
    $region6: #{encode_image.1} parent=1 // pred_check
      _
    $region7: #{encode_image.1} parent=1 // pred_check_branch
      %23 = sbr.rel (0) target = $region9
    $region8: #{encode_image.1} parent=1 // pred_region
      _
    $region9: #{encode_image.1} parent=1 // pred_fallthru
      _
    // Predicated region
    $region10: #{encode_image.1} parent=1 // pred_check
      _
    $region11: #{encode_image.1} parent=1 // pred_check_branch
      %25 = sbr.rel (0) target = $region13
    $region12: #{encode_image.1} parent=1 // pred_region
      _
    $region13: #{encode_image.1} parent=1 // pred_fallthru
      _
    // Predicated region
    $region14: #{encode_image.1} parent=1 // pred_check
      _
    $region15: #{encode_image.1} parent=1 // pred_check_branch
      %27 = sbr.rel (0) target = $region17
    $region16: #{encode_image.1} parent=1 // pred_region
      _
    $region17: #{encode_image.1} parent=1 // pred_fallthru
      _
    // Predicated region
    $region18: #{encode_image.1} parent=1 // pred_check
      _
    $region19: #{encode_image.1} parent=1 // pred_check_branch
      %29 = sbr.rel (0) target = $region21
    $region20: #{encode_image.1} parent=1 // pred_region
      _
    $region21: #{encode_image.1} parent=1 // pred_fallthru
      _
    // Predicated region
    $region22: #{encode_image.1} parent=1 // pred_check
      _
    $region23: #{encode_image.1} parent=1 // pred_check_branch
      %31 = sbr.rel (0) target = $region25
    $region24: #{encode_image.1} parent=1 // pred_region
      _
    $region25: #{encode_image.1} parent=1 // pred_fallthru
      _
    // Predicated region
    $region26: #{encode_image.1} parent=1 // pred_check
      _
    $region27: #{encode_image.1} parent=1 // pred_check_branch
      %33 = sbr.rel (0) target = $region29
    $region28: #{encode_image.1} parent=1 // pred_region
      _
    $region29: #{encode_image.1} parent=1 // pred_fallthru
      _
    // Predicated region
    $region30: #{encode_image.1} parent=1 // pred_check
      _
    $region31: #{encode_image.1} parent=1 // pred_check_branch
      %35 = sbr.rel (0) target = $region33
    $region32: #{encode_image.1} parent=1 // pred_region
      _
    $region33: #{encode_image.1} parent=1 // pred_fallthru
      _
    // Predicated region
    $region34: #{encode_image.1} parent=1 // pred_check
      _
    $region35: #{encode_image.1} parent=1 // pred_check_branch
      %37 = sbr.rel (0) target = $region37
    $region36: #{encode_image.1} parent=1 // pred_region
      _
    $region37: #{encode_image.1} parent=1 // pred_fallthru
      _
    // Predicated region
    $region38: #{encode_image.1} parent=1 // pred_check
      _
    $region39: #{encode_image.1} parent=1 // pred_check_branch
      %39 = sbr.rel (0) target = $region41
    $region40: #{encode_image.1} parent=1 // pred_region
      _
    $region41: #{encode_image.1} parent=1 // pred_fallthru
      _
    // Predicated region
    $region42: #{encode_image.1} parent=1 // pred_check
      _
    $region43: #{encode_image.1} parent=1 // pred_check_branch
      %41 = sbr.rel (0) target = $region45
    $region44: #{encode_image.1} parent=1 // pred_region
      _
    $region45: #{encode_image.1} parent=1 // pred_fallthru
      _
    // Predicated region
    $region46: #{encode_image.1} parent=1 // pred_check
      _
    $region47: #{encode_image.1} parent=1 // pred_check_branch
      %43 = sbr.rel (0) target = $region49
    $region48: #{encode_image.1} parent=1 // pred_region
      _
    $region49: #{encode_image.1} parent=1 // pred_fallthru
      _
    // Predicated region
    $region50: #{encode_image.1} parent=1 // pred_check
      _
    $region51: #{encode_image.1} parent=1 // pred_check_branch
      %45 = sbr.rel (0) target = $region53
    $region52: #{encode_image.1} parent=1 // pred_region
      _
    $region53: #{encode_image.1} parent=1 // pred_fallthru
      _
    // Predicated region
    $region54: #{encode_image.1} parent=1 // pred_check
      _
    $region55: #{encode_image.1} parent=1 // pred_check_branch
      %47 = sbr.rel (0) target = $region57
    $region56: #{encode_image.1} parent=1 // pred_region
      _
    $region57: #{encode_image.1} parent=1 // pred_fallthru
      _
    %v48 = vld [vmem:[%s0] sm:$0xff]
    %v49 = vld [vmem:[%s0 + $0x8] sm:$0xff]
    %v50 = vld [vmem:[%s0 + $0x10] sm:$0x3]
    %v51 = vld [vmem:[%s0 + $0x18] sm:$0x3]
    %v52 = vld [vmem:[%s1] sm:$0xff]
    %v53 = vld [vmem:[%s1 + $0x8] sm:$0xff]
    %v54 = vld [vmem:[%s1 + $0x10] sm:$0xff]
    %v55 = vld [vmem:[%s1 + $0x18] sm:$0xff]
    %v56 = vld [vmem:[%s1 + $0x20] sm:$0xff]
    %v57 = vld [vmem:[%s1 + $0x28] sm:$0xff]
    %v58 = vld [vmem:[%s1 + $0x30] sm:$0xff]
    %v59 = vld [vmem:[%s1 + $0x38] sm:$0xff]
    %v60 = vld [vmem:[%s1 + $0x40] sm:$0xff]
    %v61 = vld [vmem:[%s1 + $0x48] sm:$0xff]
    %v62 = vld [vmem:[%s1 + $0x50] sm:$0xff]
    %v63 = vld [vmem:[%s1 + $0x58] sm:$0xff]
    %v64 = vld [vmem:[%s1 + $0x60] sm:$0xff]
    %v65 = vld [vmem:[%s1 + $0x68] sm:$0xff]
    %v66 = vld [vmem:[%s1 + $0x70] sm:$0xff]
    %v67 = vld [vmem:[%s1 + $0x78] sm:$0xff]
    %v68 = vld [vmem:[%s1 + $0x80] sm:$0xff]
    %v69 = vld [vmem:[%s1 + $0x88] sm:$0xff]
    %v70 = vld [vmem:[%s1 + $0x90] sm:$0xff]
    %v71 = vld [vmem:[%s1 + $0x98] sm:$0xff]
    %v72 = vld [vmem:[%s1 + $0xa0] sm:$0xff]
    %v73 = vld [vmem:[%s1 + $0xa8] sm:$0xff]
    %v74 = vld [vmem:[%s1 + $0xb0] sm:$0xff]
    %v75 = vld [vmem:[%s1 + $0xb8] sm:$0xff]
    %v76 = vld [vmem:[%s2] sm:$0xff]
    %v77 = vld [vmem:[%s2 + $0x8] sm:$0x3]
    %vm78 = vcmask 523264
    %v80 = vsel %vm78, %v49, 0
    %v83 = vsel %vm78, %v51, 0
    %85 = vmatprep.subr.mxu0 0.0
    %86 = vmatpush1.msra.mxu0 %v67
    %87 = vmatprep.subr.mxu0 0.0
    %88 = vmatpush1.msra.mxu0 %v66
    %89 = vmatprep.subr.mxu0 0.0
    %90 = vmatpush1.msra.mxu0 %v65
    %91 = vmatprep.subr.mxu0 0.0
    %92 = vmatpush1.msra.mxu0 %v64
    %93 = vmatprep.subr.mxu0 0.0
    %94 = vmatpush1.msra.mxu0 %v63
    %95 = vmatprep.subr.mxu0 0.0
    %96 = vmatpush1.msra.mxu0 %v62
    %97 = vmatprep.subr.mxu0 0.0
    %98 = vmatpush1.msra.mxu0 %v61
    %99 = vmatprep.subr.mxu0 0.0
    %100 = vmatpush1.msra.mxu0 %v60
    %101 = vmatprep.subr.mxu0 0.0
    %102 = vmatpush1.msra.mxu0 %v59
    %103 = vmatprep.subr.mxu0 0.0
    %104 = vmatpush1.msra.mxu0 %v58
    %105 = vmatprep.subr.mxu0 0.0
    %106 = vmatpush1.msra.mxu0 %v57
    %107 = vmatprep.subr.mxu0 0.0
    %108 = vmatpush1.msra.mxu0 %v56
    %109 = vmatprep.subr.mxu0 0.0
    %110 = vmatpush1.msra.mxu0 %v55
    %111 = vmatprep.subr.mxu0 0.0
    %112 = vmatpush1.msra.mxu0 %v54
    %113 = vmatprep.subr.mxu0 0.0
    %114 = vmatpush1.msra.mxu0 %v53
    %115 = vmatprep.subr.mxu0 0.0
    %116 = vmatpush1.msra.mxu0 %v52
    %117 = vmatprep.subr.mxu0 0.0
    %118 = vmatpush2.msra.mxu0 0.0
    %119 = vmatprep.subr.mxu0 0.0
    %120 = vmatpush2.msra.mxu0 0.0
    %121 = vmatprep.subr.mxu0 0.0
    %122 = vmatpush2.msra.mxu0 0.0
    %123 = vmatprep.subr.mxu0 0.0
    %124 = vmatpush2.msra.mxu0 0.0
    %125 = vmatprep.subr.mxu0 0.0
    %126 = vmatpush2.msra.mxu0 0.0
    %127 = vmatprep.subr.mxu0 0.0
    %128 = vmatpush2.msra.mxu0 0.0
    %129 = vmatprep.subr.mxu0 0.0
    %130 = vmatpush2.msra.mxu0 0.0
    %131 = vmatprep.subr.mxu0 0.0
    %132 = vmatpush2.msra.mxu0 0.0
    %133 = vmatprep.subr.mxu0 0.0
    %134 = vmatpush2.msra.mxu0 %v75
    %135 = vmatprep.subr.mxu0 0.0
    %136 = vmatpush2.msra.mxu0 %v74
    %137 = vmatprep.subr.mxu0 0.0
    %138 = vmatpush2.msra.mxu0 %v73
    %139 = vmatprep.subr.mxu0 0.0
    %140 = vmatpush2.msra.mxu0 %v72
    %141 = vmatprep.subr.mxu0 0.0
    %142 = vmatpush2.msra.mxu0 %v71
    %143 = vmatprep.subr.mxu0 0.0
    %144 = vmatpush2.msra.mxu0 %v70
    %145 = vmatprep.subr.mxu0 0.0
    %146 = vmatpush2.msra.mxu0 %v69
    %147 = vmatprep.subr.mxu0 0.0
    %148 = vmatpush2.msra.mxu0 %v68
    %149 = vmatprep.mubr.f32.mxu0 %v80
    %150 = vmatmul.mubr.f32.gmra.mxu0 %v48
    %v151 = vpop.f32.mrf.mxu0
    %v152 = vadd.f32 %v76, %v151
    %v153 = vpop.f32.mrf.mxu0
    %154 = vmatprep.mubr.f32.mxu0 %v83
    %155 = vmatmul.mubr.f32.gmra.mxu0 %v50
    %v156 = vpop.f32.mrf.mxu0
    %v157 = vadd.f32 %v77, %v156
    %v158 = vpop.f32.mrf.mxu0
    %159 = vdwg.mxu0
    %v160 = vld [vmem:[%s3] sm:$0x1]
    %v161 = vld [vmem:[%s3 + $0x1] sm:$0x1]
    %vm162 = vcmask 261120
    %v163 = vsel %vm162, %v152, 0.0
    %164 = vadd.xlane.f32.xlu0 %v163
    %v165 = vpop.xlane.xlu0 %164
    %vm166 = vcmask 254976
    %v167 = vsel %vm166, %v157, 0.0
    %168 = vadd.xlane.f32.xlu0 %v167
    %v169 = vpop.xlane.xlu0 %168
    %v170 = vrcp.pop 32.0
    %v171 = vmul.f32 %v165, %v170
    %v172 = vmul.f32 %v169, %v170
    %v173 = vsub.f32 %v152, %v171
    %v174 = vsub.f32 %v157, %v172
    %v175 = vmul.f32 %v173, %v173
    %v176 = vmul.f32 %v174, %v174
    %v177 = vsel %vm162, %v175, 0.0
    %178 = vadd.xlane.f32.xlu0 %v177
    %v179 = vpop.xlane.xlu0 %178
    %v180 = vsel %vm166, %v176, 0.0
    %181 = vadd.xlane.f32.xlu0 %v180
    %v182 = vpop.xlane.xlu0 %181
    %v183 = vmul.f32 %v179, %v170
    %v184 = vmul.f32 %v182, %v170
    %v185 = vadd.f32 %v183, 1e-05
    %v186 = vadd.f32 %v184, 1e-05
    %v187 = vrsqrt.pop %v185
    %v188 = vrsqrt.pop %v186
    %v189 = vmul.f32 %v173, %v187
    %v190 = vmul.f32 %v174, %v188
    %v191 = vlaneseq
    %v192 = vshrl.u32 %v191, 7
    %v193 = vsub.s32 0, %v192
    %v194 = vrot.slane %v160, %v193
    %v195 = vmul.f32 %v189, %v194
    %v196 = vmul.f32 %v190, %v194
    %v197 = vlaneseq
    %v198 = vshrl.u32 %v197, 7
    %v199 = vsub.s32 0, %v198
    %v200 = vrot.slane %v161, %v199
    %v201 = vadd.f32 %v195, %v200
    %v202 = vadd.f32 %v196, %v200
    %v203 = vld [vmem:[%s4] sm:$0xff]
    %v204 = vld [vmem:[%s4 + $0x8] sm:$0x3]
    %v205 = vld [vmem:[%s9] sm:$0x1]
    %v206 = vld [vmem:[%s9 + $0x1] sm:$0x1]
    %v207 = vsel %vm162, %v201, 0.0
    %208 = vadd.xlane.f32.xlu0 %v207
    %v209 = vpop.xlane.xlu0 %208
    %v210 = vsel %vm166, %v202, 0.0
    %211 = vadd.xlane.f32.xlu0 %v210
    %v212 = vpop.xlane.xlu0 %211
    %v213 = vmul.f32 %v209, %v170
    %v214 = vmul.f32 %v212, %v170
    %v215 = vsub.f32 %v201, %v213
    %v216 = vsub.f32 %v202, %v214
    %v217 = vmul.f32 %v215, %v215
    %v218 = vmul.f32 %v216, %v216
    %v219 = vsel %vm162, %v217, 0.0
    %220 = vadd.xlane.f32.xlu0 %v219
    %v221 = vpop.xlane.xlu0 %220
    %v222 = vsel %vm166, %v218, 0.0
    %223 = vadd.xlane.f32.xlu0 %v222
    %v224 = vpop.xlane.xlu0 %223
    %v225 = vmul.f32 %v221, %v170
    %v226 = vmul.f32 %v224, %v170
    %v227 = vadd.f32 %v225, 1e-05
    %v228 = vadd.f32 %v226, 1e-05
    %v229 = vrsqrt.pop %v227
    %v230 = vrsqrt.pop %v228
    %v231 = vmul.f32 %v215, %v229
    %v232 = vmul.f32 %v216, %v230
    %v233 = vlaneseq
    %v234 = vshrl.u32 %v233, 7
    %v235 = vsub.s32 0, %v234
    %v236 = vrot.slane %v205, %v235
    %v237 = vmul.f32 %v231, %v236
    %v238 = vmul.f32 %v232, %v236
    %v239 = vlaneseq
    %v240 = vshrl.u32 %v239, 7
    %v241 = vsub.s32 0, %v240
    %v242 = vrot.slane %v206, %v241
    %v243 = vadd.f32 %v237, %v242
    %v244 = vadd.f32 %v238, %v242
    %v245 = vld [vmem:[%s6] sm:$0xff]
    %v246 = vld [vmem:[%s6 + $0x8] sm:$0xff]
    %v247 = vld [vmem:[%s6 + $0x10] sm:$0xff]
    %v248 = vld [vmem:[%s6 + $0x18] sm:$0xff]
    %v249 = vld [vmem:[%s7] sm:$0x1]
    %v250 = vlaneseq
    %v251 = vshrl.u32 %v250, 7
    %v252 = vsub.s32 0, %v251
    %v253 = vrot.slane %v249, %v252
    %v255 = vsel %vm162, %v243, 0
    %v258 = vsel %vm162, %v244, 0
    %260 = vmatprep.subr.mxu0 0.0
    %261 = vmatpush1.msra.mxu0 0.0
    %262 = vmatprep.subr.mxu0 0.0
    %263 = vmatpush1.msra.mxu0 0.0
    %264 = vmatprep.subr.mxu0 0.0
    %265 = vmatpush1.msra.mxu0 0.0
    %266 = vmatprep.subr.mxu0 0.0
    %267 = vmatpush1.msra.mxu0 0.0
    %268 = vmatprep.subr.mxu0 0.0
    %269 = vmatpush1.msra.mxu0 0.0
    %270 = vmatprep.subr.mxu0 0.0
    %271 = vmatpush1.msra.mxu0 0.0
    %272 = vmatprep.subr.mxu0 0.0
    %273 = vmatpush1.msra.mxu0 0.0
    %274 = vmatprep.subr.mxu0 0.0
    %275 = vmatpush1.msra.mxu0 0.0
    %276 = vmatprep.subr.mxu0 0.0
    %277 = vmatpush1.msra.mxu0 0.0
    %278 = vmatprep.subr.mxu0 0.0
    %279 = vmatpush1.msra.mxu0 0.0
    %280 = vmatprep.subr.mxu0 0.0
    %281 = vmatpush1.msra.mxu0 0.0
    %282 = vmatprep.subr.mxu0 0.0
    %283 = vmatpush1.msra.mxu0 0.0
    %284 = vmatprep.subr.mxu0 0.0
    %285 = vmatpush1.msra.mxu0 %v248
    %286 = vmatprep.subr.mxu0 0.0
    %287 = vmatpush1.msra.mxu0 %v247
    %288 = vmatprep.subr.mxu0 0.0
    %289 = vmatpush1.msra.mxu0 %v246
    %290 = vmatprep.subr.mxu0 0.0
    %291 = vmatpush1.msra.mxu0 %v245
    %292 = vmatprep.subr.mxu0 0.0
    %293 = vmatpush2.msra.mxu0 0.0
    %294 = vmatprep.subr.mxu0 0.0
    %295 = vmatpush2.msra.mxu0 0.0
    %296 = vmatprep.subr.mxu0 0.0
    %297 = vmatpush2.msra.mxu0 0.0
    %298 = vmatprep.subr.mxu0 0.0
    %299 = vmatpush2.msra.mxu0 0.0
    %300 = vmatprep.subr.mxu0 0.0
    %301 = vmatpush2.msra.mxu0 0.0
    %302 = vmatprep.subr.mxu0 0.0
    %303 = vmatpush2.msra.mxu0 0.0
    %304 = vmatprep.subr.mxu0 0.0
    %305 = vmatpush2.msra.mxu0 0.0
    %306 = vmatprep.subr.mxu0 0.0
    %307 = vmatpush2.msra.mxu0 0.0
    %308 = vmatprep.subr.mxu0 0.0
    %309 = vmatpush2.msra.mxu0 0.0
    %310 = vmatprep.subr.mxu0 0.0
    %311 = vmatpush2.msra.mxu0 0.0
    %312 = vmatprep.subr.mxu0 0.0
    %313 = vmatpush2.msra.mxu0 0.0
    %314 = vmatprep.subr.mxu0 0.0
    %315 = vmatpush2.msra.mxu0 0.0
    %316 = vmatprep.subr.mxu0 0.0
    %317 = vmatpush2.msra.mxu0 0.0
    %318 = vmatprep.subr.mxu0 0.0
    %319 = vmatpush2.msra.mxu0 0.0
    %320 = vmatprep.subr.mxu0 0.0
    %321 = vmatpush2.msra.mxu0 0.0
    %322 = vmatprep.subr.mxu0 0.0
    %323 = vmatpush2.msra.mxu0 0.0
    %324 = vmatprep.mubr.f32.mxu0 0.0
    %325 = vmatmul.mubr.f32.gmra.mxu0 %v255
    %v326 = vpop.f32.mrf.mxu0
    %v327 = vadd.f32 %v253, %v326
    %v328 = vpop.f32.mrf.mxu0
    %329 = vmatprep.mubr.f32.mxu0 0.0
    %330 = vmatmul.mubr.f32.gmra.mxu0 %v258
    %v331 = vpop.f32.mrf.mxu0
    %v332 = vadd.f32 %v253, %v331
    %v333 = vpop.f32.mrf.mxu0
    %334 = vdwg.mxu0
    %s335 = scalar_lea.vmem %s6, 64
    %v336 = vld [vmem:[%s335] sm:$0xff]
    %v337 = vld [vmem:[%s335 + $0x8] sm:$0xff]
    %v338 = vld [vmem:[%s335 + $0x10] sm:$0xff]
    %v339 = vld [vmem:[%s335 + $0x18] sm:$0xff]
    %v340 = vld [vmem:[%s7 + $0x2] sm:$0x1]
    %v341 = vlaneseq
    %v342 = vshrl.u32 %v341, 7
    %v343 = vsub.s32 0, %v342
    %v344 = vrot.slane %v340, %v343
    %345 = vmatprep.subr.mxu0 0.0
    %346 = vmatpush1.msra.mxu0 0.0
    %347 = vmatprep.subr.mxu0 0.0
    %348 = vmatpush1.msra.mxu0 0.0
    %349 = vmatprep.subr.mxu0 0.0
    %350 = vmatpush1.msra.mxu0 0.0
    %351 = vmatprep.subr.mxu0 0.0
    %352 = vmatpush1.msra.mxu0 0.0
    %353 = vmatprep.subr.mxu0 0.0
    %354 = vmatpush1.msra.mxu0 0.0
    %355 = vmatprep.subr.mxu0 0.0
    %356 = vmatpush1.msra.mxu0 0.0
    %357 = vmatprep.subr.mxu0 0.0
    %358 = vmatpush1.msra.mxu0 0.0
    %359 = vmatprep.subr.mxu0 0.0
    %360 = vmatpush1.msra.mxu0 0.0
    %361 = vmatprep.subr.mxu0 0.0
    %362 = vmatpush1.msra.mxu0 0.0
    %363 = vmatprep.subr.mxu0 0.0
    %364 = vmatpush1.msra.mxu0 0.0
    %365 = vmatprep.subr.mxu0 0.0
    %366 = vmatpush1.msra.mxu0 0.0
    %367 = vmatprep.subr.mxu0 0.0
    %368 = vmatpush1.msra.mxu0 0.0
    %369 = vmatprep.subr.mxu0 0.0
    %370 = vmatpush1.msra.mxu0 %v339
    %371 = vmatprep.subr.mxu0 0.0
    %372 = vmatpush1.msra.mxu0 %v338
    %373 = vmatprep.subr.mxu0 0.0
    %374 = vmatpush1.msra.mxu0 %v337
    %375 = vmatprep.subr.mxu0 0.0
    %376 = vmatpush1.msra.mxu0 %v336
    %377 = vmatprep.subr.mxu0 0.0
    %378 = vmatpush2.msra.mxu0 0.0
    %379 = vmatprep.subr.mxu0 0.0
    %380 = vmatpush2.msra.mxu0 0.0
    %381 = vmatprep.subr.mxu0 0.0
    %382 = vmatpush2.msra.mxu0 0.0
    %383 = vmatprep.subr.mxu0 0.0
    %384 = vmatpush2.msra.mxu0 0.0
    %385 = vmatprep.subr.mxu0 0.0
    %386 = vmatpush2.msra.mxu0 0.0
    %387 = vmatprep.subr.mxu0 0.0
    %388 = vmatpush2.msra.mxu0 0.0
    %389 = vmatprep.subr.mxu0 0.0
    %390 = vmatpush2.msra.mxu0 0.0
    %391 = vmatprep.subr.mxu0 0.0
    %392 = vmatpush2.msra.mxu0 0.0
    %393 = vmatprep.subr.mxu0 0.0
    %394 = vmatpush2.msra.mxu0 0.0
    %395 = vmatprep.subr.mxu0 0.0
    %396 = vmatpush2.msra.mxu0 0.0
    %397 = vmatprep.subr.mxu0 0.0
    %398 = vmatpush2.msra.mxu0 0.0
    %399 = vmatprep.subr.mxu0 0.0
    %400 = vmatpush2.msra.mxu0 0.0
    %401 = vmatprep.subr.mxu0 0.0
    %402 = vmatpush2.msra.mxu0 0.0
    %403 = vmatprep.subr.mxu0 0.0
    %404 = vmatpush2.msra.mxu0 0.0
    %405 = vmatprep.subr.mxu0 0.0
    %406 = vmatpush2.msra.mxu0 0.0
    %407 = vmatprep.subr.mxu0 0.0
    %408 = vmatpush2.msra.mxu0 0.0
    %409 = vmatprep.mubr.f32.mxu0 0.0
    %410 = vmatmul.mubr.f32.gmra.mxu0 %v255
    %v411 = vpop.f32.mrf.mxu0
    %v412 = vadd.f32 %v344, %v411
    %v413 = vpop.f32.mrf.mxu0
    %414 = vmatprep.mubr.f32.mxu0 0.0
    %415 = vmatmul.mubr.f32.gmra.mxu0 %v258
    %v416 = vpop.f32.mrf.mxu0
    %v417 = vadd.f32 %v344, %v416
    %v418 = vpop.f32.mrf.mxu0
    %419 = vdwg.mxu0
    %s420 = scalar_lea.vmem %s6, 128
    %v421 = vld [vmem:[%s420] sm:$0xff]
    %v422 = vld [vmem:[%s420 + $0x8] sm:$0xff]
    %v423 = vld [vmem:[%s420 + $0x10] sm:$0xff]
    %v424 = vld [vmem:[%s420 + $0x18] sm:$0xff]
    %v425 = vld [vmem:[%s7 + $0x4] sm:$0x1]
    %v426 = vlaneseq
    %v427 = vshrl.u32 %v426, 7
    %v428 = vsub.s32 0, %v427
    %v429 = vrot.slane %v425, %v428
    %430 = vmatprep.subr.mxu0 0.0
    %431 = vmatpush1.msra.mxu0 0.0
    %432 = vmatprep.subr.mxu0 0.0
    %433 = vmatpush1.msra.mxu0 0.0
    %434 = vmatprep.subr.mxu0 0.0
    %435 = vmatpush1.msra.mxu0 0.0
    %436 = vmatprep.subr.mxu0 0.0
    %437 = vmatpush1.msra.mxu0 0.0
    %438 = vmatprep.subr.mxu0 0.0
    %439 = vmatpush1.msra.mxu0 0.0
    %440 = vmatprep.subr.mxu0 0.0
    %441 = vmatpush1.msra.mxu0 0.0
    %442 = vmatprep.subr.mxu0 0.0
    %443 = vmatpush1.msra.mxu0 0.0
    %444 = vmatprep.subr.mxu0 0.0
    %445 = vmatpush1.msra.mxu0 0.0
    %446 = vmatprep.subr.mxu0 0.0
    %447 = vmatpush1.msra.mxu0 0.0
    %448 = vmatprep.subr.mxu0 0.0
    %449 = vmatpush1.msra.mxu0 0.0
    %450 = vmatprep.subr.mxu0 0.0
    %451 = vmatpush1.msra.mxu0 0.0
    %452 = vmatprep.subr.mxu0 0.0
    %453 = vmatpush1.msra.mxu0 0.0
    %454 = vmatprep.subr.mxu0 0.0
    %455 = vmatpush1.msra.mxu0 %v424
    %456 = vmatprep.subr.mxu0 0.0
    %457 = vmatpush1.msra.mxu0 %v423
    %458 = vmatprep.subr.mxu0 0.0
    %459 = vmatpush1.msra.mxu0 %v422
    %460 = vmatprep.subr.mxu0 0.0
    %461 = vmatpush1.msra.mxu0 %v421
    %462 = vmatprep.subr.mxu0 0.0
    %463 = vmatpush2.msra.mxu0 0.0
    %464 = vmatprep.subr.mxu0 0.0
    %465 = vmatpush2.msra.mxu0 0.0
    %466 = vmatprep.subr.mxu0 0.0
    %467 = vmatpush2.msra.mxu0 0.0
    %468 = vmatprep.subr.mxu0 0.0
    %469 = vmatpush2.msra.mxu0 0.0
    %470 = vmatprep.subr.mxu0 0.0
    %471 = vmatpush2.msra.mxu0 0.0
    %472 = vmatprep.subr.mxu0 0.0
    %473 = vmatpush2.msra.mxu0 0.0
    %474 = vmatprep.subr.mxu0 0.0
    %475 = vmatpush2.msra.mxu0 0.0
    %476 = vmatprep.subr.mxu0 0.0
    %477 = vmatpush2.msra.mxu0 0.0
    %478 = vmatprep.subr.mxu0 0.0
    %479 = vmatpush2.msra.mxu0 0.0
    %480 = vmatprep.subr.mxu0 0.0
    %481 = vmatpush2.msra.mxu0 0.0
    %482 = vmatprep.subr.mxu0 0.0
    %483 = vmatpush2.msra.mxu0 0.0
    %484 = vmatprep.subr.mxu0 0.0
    %485 = vmatpush2.msra.mxu0 0.0
    %486 = vmatprep.subr.mxu0 0.0
    %487 = vmatpush2.msra.mxu0 0.0
    %488 = vmatprep.subr.mxu0 0.0
    %489 = vmatpush2.msra.mxu0 0.0
    %490 = vmatprep.subr.mxu0 0.0
    %491 = vmatpush2.msra.mxu0 0.0
    %492 = vmatprep.subr.mxu0 0.0
    %493 = vmatpush2.msra.mxu0 0.0
    %494 = vmatprep.mubr.f32.mxu0 0.0
    %495 = vmatmul.mubr.f32.gmra.mxu0 %v255
    %v496 = vpop.f32.mrf.mxu0
    %v497 = vadd.f32 %v429, %v496
    %v498 = vpop.f32.mrf.mxu0
    %499 = vmatprep.mubr.f32.mxu0 0.0
    %500 = vmatmul.mubr.f32.gmra.mxu0 %v258
    %v501 = vpop.f32.mrf.mxu0
    %v502 = vadd.f32 %v429, %v501
    %v503 = vpop.f32.mrf.mxu0
    %504 = vdwg.mxu0
    %vm505 = vcmask 130048
    %v507 = vsel %vm505, %v327, 0
    %v510 = vsel %vm505, %v332, 0
    %v513 = vsel %vm505, %v412, 0
    %v516 = vsel %vm505, %v417, 0
    %518 = vmatprep.subr.mxu0 0.0
    %519 = vmatpush1.xpose.msra.mxu0 0.0
    %520 = vmatprep.subr.mxu0 0.0
    %521 = vmatpush1.xpose.msra.mxu0 0.0
    %522 = vmatprep.subr.mxu0 0.0
    %523 = vmatpush1.xpose.msra.mxu0 0.0
    %524 = vmatprep.subr.mxu0 0.0
    %525 = vmatpush1.xpose.msra.mxu0 0.0
    %526 = vmatprep.subr.mxu0 0.0
    %527 = vmatpush1.xpose.msra.mxu0 0.0
    %528 = vmatprep.subr.mxu0 0.0
    %529 = vmatpush1.xpose.msra.mxu0 0.0
    %530 = vmatprep.subr.mxu0 0.0
    %531 = vmatpush1.xpose.msra.mxu0 0.0
    %532 = vmatprep.subr.mxu0 0.0
    %533 = vmatpush1.xpose.msra.mxu0 0.0
    %534 = vmatprep.subr.mxu0 0.0
    %535 = vmatpush1.xpose.msra.mxu0 0.0
    %536 = vmatprep.subr.mxu0 0.0
    %537 = vmatpush1.xpose.msra.mxu0 0.0
    %538 = vmatprep.subr.mxu0 0.0
    %539 = vmatpush1.xpose.msra.mxu0 0.0
    %540 = vmatprep.subr.mxu0 0.0
    %541 = vmatpush1.xpose.msra.mxu0 0.0
    %542 = vmatprep.subr.mxu0 0.0
    %543 = vmatpush1.xpose.msra.mxu0 0.0
    %544 = vmatprep.subr.mxu0 0.0
    %545 = vmatpush1.xpose.msra.mxu0 0.0
    %546 = vmatprep.subr.mxu0 0.0
    %547 = vmatpush1.xpose.msra.mxu0 %v516
    %548 = vmatprep.subr.mxu0 0.0
    %549 = vmatpush1.xpose.msra.mxu0 %v513
    %550 = vmatprep.subr.mxu0 0.0
    %551 = vmatpush2.xpose.msra.mxu0 0.0
    %552 = vmatprep.subr.mxu0 0.0
    %553 = vmatpush2.xpose.msra.mxu0 0.0
    %554 = vmatprep.subr.mxu0 0.0
    %555 = vmatpush2.xpose.msra.mxu0 0.0
    %556 = vmatprep.subr.mxu0 0.0
    %557 = vmatpush2.xpose.msra.mxu0 0.0
    %558 = vmatprep.subr.mxu0 0.0
    %559 = vmatpush2.xpose.msra.mxu0 0.0
    %560 = vmatprep.subr.mxu0 0.0
    %561 = vmatpush2.xpose.msra.mxu0 0.0
    %562 = vmatprep.subr.mxu0 0.0
    %563 = vmatpush2.xpose.msra.mxu0 0.0
    %564 = vmatprep.subr.mxu0 0.0
    %565 = vmatpush2.xpose.msra.mxu0 0.0
    %566 = vmatprep.subr.mxu0 0.0
    %567 = vmatpush2.xpose.msra.mxu0 0.0
    %568 = vmatprep.subr.mxu0 0.0
    %569 = vmatpush2.xpose.msra.mxu0 0.0
    %570 = vmatprep.subr.mxu0 0.0
    %571 = vmatpush2.xpose.msra.mxu0 0.0
    %572 = vmatprep.subr.mxu0 0.0
    %573 = vmatpush2.xpose.msra.mxu0 0.0
    %574 = vmatprep.subr.mxu0 0.0
    %575 = vmatpush2.xpose.msra.mxu0 0.0
    %576 = vmatprep.subr.mxu0 0.0
    %577 = vmatpush2.xpose.msra.mxu0 0.0
    %578 = vmatprep.subr.mxu0 0.0
    %579 = vmatpush2.xpose.msra.mxu0 0.0
    %580 = vmatprep.subr.mxu0 0.0
    %581 = vmatpush2.xpose.msra.mxu0 0.0
    %582 = vmatprep.mubr.f32.mxu0 0.0
    %583 = vmatmul.mubr.f32.gmra.mxu0 %v507
    %v584 = vpop.f32.mrf.mxu0
    %v585 = vadd.f32 0.0, %v584
    %v586 = vpop.f32.mrf.mxu0
    %587 = vmatprep.mubr.f32.mxu0 0.0
    %588 = vmatmul.mubr.f32.gmra.mxu0 %v510
    %v589 = vpop.f32.mrf.mxu0
    %v590 = vadd.f32 0.0, %v589
    %v591 = vpop.f32.mrf.mxu0
    %592 = vdwg.mxu0
    %v593 = vmul.f32 %v585, 0.25
    %v594 = vmul.f32 %v590, 0.25
    %v595 = vadd.f32 %v593, %v203
    %v596 = vadd.f32 %v594, %v204
    %vm597 = vcmask 80896
    %v598 = vsel %vm597, %v595, -inf
    %599 = vmax.xlane.f32.xlu0 %v598
    %v600 = vpop.xlane.xlu0 %599
    %vm601 = vcmask 74752
    %v602 = vsel %vm601, %v596, -inf
    %603 = vmax.xlane.f32.xlu0 %v602
    %v604 = vpop.xlane.xlu0 %603
    %v605 = vsub.f32 %v595, %v600
    %v606 = vsub.f32 %v596, %v604
    %v607 = vmul.f32 %v605, 1.442695
    %v608 = vpow.pop %v607
    %v609 = vmul.f32 %v606, 1.442695
    %v610 = vpow.pop %v609
    %v611 = vsel %vm597, %v608, 0.0
    %612 = vadd.xlane.f32.xlu0 %v611
    %v613 = vpop.xlane.xlu0 %612
    %v614 = vsel %vm601, %v610, 0.0
    %615 = vadd.xlane.f32.xlu0 %v614
    %v616 = vpop.xlane.xlu0 %615
    %v617 = vrcp.pop %v613
    %v618 = vrcp.pop %v616
    %v619 = vmul.f32 %v608, %v617
    %v620 = vmul.f32 %v610, %v618
    %v622 = vsel %vm597, %v619, 0
    %v625 = vsel %vm597, %v620, 0
    %vm627 = vcmask 1041408
    %v629 = vsel %vm627, %v502, 0
    %631 = vmatprep.subr.mxu0 0.0
    %632 = vmatpush1.msra.mxu0 0.0
    %633 = vmatprep.subr.mxu0 0.0
    %634 = vmatpush1.msra.mxu0 0.0
    %635 = vmatprep.subr.mxu0 0.0
    %636 = vmatpush1.msra.mxu0 0.0
    %637 = vmatprep.subr.mxu0 0.0
    %638 = vmatpush1.msra.mxu0 0.0
    %639 = vmatprep.subr.mxu0 0.0
    %640 = vmatpush1.msra.mxu0 0.0
    %641 = vmatprep.subr.mxu0 0.0
    %642 = vmatpush1.msra.mxu0 0.0
    %643 = vmatprep.subr.mxu0 0.0
    %644 = vmatpush1.msra.mxu0 0.0
    %645 = vmatprep.subr.mxu0 0.0
    %646 = vmatpush1.msra.mxu0 0.0
    %647 = vmatprep.subr.mxu0 0.0
    %648 = vmatpush1.msra.mxu0 0.0
    %649 = vmatprep.subr.mxu0 0.0
    %650 = vmatpush1.msra.mxu0 0.0
    %651 = vmatprep.subr.mxu0 0.0
    %652 = vmatpush1.msra.mxu0 0.0
    %653 = vmatprep.subr.mxu0 0.0
    %654 = vmatpush1.msra.mxu0 0.0
    %655 = vmatprep.subr.mxu0 0.0
    %656 = vmatpush1.msra.mxu0 0.0
    %657 = vmatprep.subr.mxu0 0.0
    %658 = vmatpush1.msra.mxu0 0.0
    %659 = vmatprep.subr.mxu0 0.0
    %660 = vmatpush1.msra.mxu0 %v629
    %661 = vmatprep.subr.mxu0 0.0
    %662 = vmatpush1.msra.mxu0 %v497
    %663 = vmatprep.subr.mxu0 0.0
    %664 = vmatpush2.msra.mxu0 0.0
    %665 = vmatprep.subr.mxu0 0.0
    %666 = vmatpush2.msra.mxu0 0.0
    %667 = vmatprep.subr.mxu0 0.0
    %668 = vmatpush2.msra.mxu0 0.0
    %669 = vmatprep.subr.mxu0 0.0
    %670 = vmatpush2.msra.mxu0 0.0
    %671 = vmatprep.subr.mxu0 0.0
    %672 = vmatpush2.msra.mxu0 0.0
    %673 = vmatprep.subr.mxu0 0.0
    %674 = vmatpush2.msra.mxu0 0.0
    %675 = vmatprep.subr.mxu0 0.0
    %676 = vmatpush2.msra.mxu0 0.0
    %677 = vmatprep.subr.mxu0 0.0
    %678 = vmatpush2.msra.mxu0 0.0
    %679 = vmatprep.subr.mxu0 0.0
    %680 = vmatpush2.msra.mxu0 0.0
    %681 = vmatprep.subr.mxu0 0.0
    %682 = vmatpush2.msra.mxu0 0.0
    %683 = vmatprep.subr.mxu0 0.0
    %684 = vmatpush2.msra.mxu0 0.0
    %685 = vmatprep.subr.mxu0 0.0
    %686 = vmatpush2.msra.mxu0 0.0
    %687 = vmatprep.subr.mxu0 0.0
    %688 = vmatpush2.msra.mxu0 0.0
    %689 = vmatprep.subr.mxu0 0.0
    %690 = vmatpush2.msra.mxu0 0.0
    %691 = vmatprep.subr.mxu0 0.0
    %692 = vmatpush2.msra.mxu0 0.0
    %693 = vmatprep.subr.mxu0 0.0
    %694 = vmatpush2.msra.mxu0 0.0
    %695 = vmatprep.mubr.f32.mxu0 0.0
    %696 = vmatmul.mubr.f32.gmra.mxu0 %v622
    %v697 = vpop.f32.mrf.mxu0
    %v698 = vadd.f32 0.0, %v697
    %v699 = vpop.f32.mrf.mxu0
    %700 = vmatprep.mubr.f32.mxu0 0.0
    %701 = vmatmul.mubr.f32.gmra.mxu0 %v625
    %v702 = vpop.f32.mrf.mxu0
    %v703 = vadd.f32 0.0, %v702
    %v704 = vpop.f32.mrf.mxu0
    %705 = vdwg.mxu0
    %v706 = vld [vmem:[%s8] sm:$0xff]
    %v707 = vld [vmem:[%s8 + $0x8] sm:$0xff]
    %s708 = scalar_lea.vmem %s6, 32
    %v709 = vld [vmem:[%s708] sm:$0xff]
    %v710 = vld [vmem:[%s708 + $0x8] sm:$0xff]
    %v711 = vld [vmem:[%s708 + $0x10] sm:$0xff]
    %v712 = vld [vmem:[%s708 + $0x18] sm:$0xff]
    %v713 = vld [vmem:[%s7 + $0x1] sm:$0x1]
    %v714 = vlaneseq
    %v715 = vshrl.u32 %v714, 7
    %v716 = vsub.s32 0, %v715
    %v717 = vrot.slane %v713, %v716
    %718 = vmatprep.subr.mxu0 0.0
    %719 = vmatpush1.msra.mxu0 0.0
    %720 = vmatprep.subr.mxu0 0.0
    %721 = vmatpush1.msra.mxu0 0.0
    %722 = vmatprep.subr.mxu0 0.0
    %723 = vmatpush1.msra.mxu0 0.0
    %724 = vmatprep.subr.mxu0 0.0
    %725 = vmatpush1.msra.mxu0 0.0
    %726 = vmatprep.subr.mxu0 0.0
    %727 = vmatpush1.msra.mxu0 0.0
    %728 = vmatprep.subr.mxu0 0.0
    %729 = vmatpush1.msra.mxu0 0.0
    %730 = vmatprep.subr.mxu0 0.0
    %731 = vmatpush1.msra.mxu0 0.0
    %732 = vmatprep.subr.mxu0 0.0
    %733 = vmatpush1.msra.mxu0 0.0
    %734 = vmatprep.subr.mxu0 0.0
    %735 = vmatpush1.msra.mxu0 0.0
    %736 = vmatprep.subr.mxu0 0.0
    %737 = vmatpush1.msra.mxu0 0.0
    %738 = vmatprep.subr.mxu0 0.0
    %739 = vmatpush1.msra.mxu0 0.0
    %740 = vmatprep.subr.mxu0 0.0
    %741 = vmatpush1.msra.mxu0 0.0
    %742 = vmatprep.subr.mxu0 0.0
    %743 = vmatpush1.msra.mxu0 %v712
    %744 = vmatprep.subr.mxu0 0.0
    %745 = vmatpush1.msra.mxu0 %v711
    %746 = vmatprep.subr.mxu0 0.0
    %747 = vmatpush1.msra.mxu0 %v710
    %748 = vmatprep.subr.mxu0 0.0
    %749 = vmatpush1.msra.mxu0 %v709
    %750 = vmatprep.subr.mxu0 0.0
    %751 = vmatpush2.msra.mxu0 0.0
    %752 = vmatprep.subr.mxu0 0.0
    %753 = vmatpush2.msra.mxu0 0.0
    %754 = vmatprep.subr.mxu0 0.0
    %755 = vmatpush2.msra.mxu0 0.0
    %756 = vmatprep.subr.mxu0 0.0
    %757 = vmatpush2.msra.mxu0 0.0
    %758 = vmatprep.subr.mxu0 0.0
    %759 = vmatpush2.msra.mxu0 0.0
    %760 = vmatprep.subr.mxu0 0.0
    %761 = vmatpush2.msra.mxu0 0.0
    %762 = vmatprep.subr.mxu0 0.0
    %763 = vmatpush2.msra.mxu0 0.0
    %764 = vmatprep.subr.mxu0 0.0
    %765 = vmatpush2.msra.mxu0 0.0
    %766 = vmatprep.subr.mxu0 0.0
    %767 = vmatpush2.msra.mxu0 0.0
    %768 = vmatprep.subr.mxu0 0.0
    %769 = vmatpush2.msra.mxu0 0.0
    %770 = vmatprep.subr.mxu0 0.0
    %771 = vmatpush2.msra.mxu0 0.0
    %772 = vmatprep.subr.mxu0 0.0
    %773 = vmatpush2.msra.mxu0 0.0
    %774 = vmatprep.subr.mxu0 0.0
    %775 = vmatpush2.msra.mxu0 0.0
    %776 = vmatprep.subr.mxu0 0.0
    %777 = vmatpush2.msra.mxu0 0.0
    %778 = vmatprep.subr.mxu0 0.0
    %779 = vmatpush2.msra.mxu0 0.0
    %780 = vmatprep.subr.mxu0 0.0
    %781 = vmatpush2.msra.mxu0 0.0
    %782 = vmatprep.mubr.f32.mxu0 0.0
    %783 = vmatmul.mubr.f32.gmra.mxu0 %v255
    %v784 = vpop.f32.mrf.mxu0
    %v785 = vadd.f32 %v717, %v784
    %v786 = vpop.f32.mrf.mxu0
    %787 = vmatprep.mubr.f32.mxu0 0.0
    %788 = vmatmul.mubr.f32.gmra.mxu0 %v258
    %v789 = vpop.f32.mrf.mxu0
    %v790 = vadd.f32 %v717, %v789
    %v791 = vpop.f32.mrf.mxu0
    %792 = vdwg.mxu0
    %s793 = scalar_lea.vmem %s6, 96
    %v794 = vld [vmem:[%s793] sm:$0xff]
    %v795 = vld [vmem:[%s793 + $0x8] sm:$0xff]
    %v796 = vld [vmem:[%s793 + $0x10] sm:$0xff]
    %v797 = vld [vmem:[%s793 + $0x18] sm:$0xff]
    %v798 = vld [vmem:[%s7 + $0x3] sm:$0x1]
    %v799 = vlaneseq
    %v800 = vshrl.u32 %v799, 7
    %v801 = vsub.s32 0, %v800
    %v802 = vrot.slane %v798, %v801
    %803 = vmatprep.subr.mxu0 0.0
    %804 = vmatpush1.msra.mxu0 0.0
    %805 = vmatprep.subr.mxu0 0.0
    %806 = vmatpush1.msra.mxu0 0.0
    %807 = vmatprep.subr.mxu0 0.0
    %808 = vmatpush1.msra.mxu0 0.0
    %809 = vmatprep.subr.mxu0 0.0
    %810 = vmatpush1.msra.mxu0 0.0
    %811 = vmatprep.subr.mxu0 0.0
    %812 = vmatpush1.msra.mxu0 0.0
    %813 = vmatprep.subr.mxu0 0.0
    %814 = vmatpush1.msra.mxu0 0.0
    %815 = vmatprep.subr.mxu0 0.0
    %816 = vmatpush1.msra.mxu0 0.0
    %817 = vmatprep.subr.mxu0 0.0
    %818 = vmatpush1.msra.mxu0 0.0
    %819 = vmatprep.subr.mxu0 0.0
    %820 = vmatpush1.msra.mxu0 0.0
    %821 = vmatprep.subr.mxu0 0.0
    %822 = vmatpush1.msra.mxu0 0.0
    %823 = vmatprep.subr.mxu0 0.0
    %824 = vmatpush1.msra.mxu0 0.0
    %825 = vmatprep.subr.mxu0 0.0
    %826 = vmatpush1.msra.mxu0 0.0
    %827 = vmatprep.subr.mxu0 0.0
    %828 = vmatpush1.msra.mxu0 %v797
    %829 = vmatprep.subr.mxu0 0.0
    %830 = vmatpush1.msra.mxu0 %v796
    %831 = vmatprep.subr.mxu0 0.0
    %832 = vmatpush1.msra.mxu0 %v795
    %833 = vmatprep.subr.mxu0 0.0
    %834 = vmatpush1.msra.mxu0 %v794
    %835 = vmatprep.subr.mxu0 0.0
    %836 = vmatpush2.msra.mxu0 0.0
    %837 = vmatprep.subr.mxu0 0.0
    %838 = vmatpush2.msra.mxu0 0.0
    %839 = vmatprep.subr.mxu0 0.0
    %840 = vmatpush2.msra.mxu0 0.0
    %841 = vmatprep.subr.mxu0 0.0
    %842 = vmatpush2.msra.mxu0 0.0
    %843 = vmatprep.subr.mxu0 0.0
    %844 = vmatpush2.msra.mxu0 0.0
    %845 = vmatprep.subr.mxu0 0.0
    %846 = vmatpush2.msra.mxu0 0.0
    %847 = vmatprep.subr.mxu0 0.0
    %848 = vmatpush2.msra.mxu0 0.0
    %849 = vmatprep.subr.mxu0 0.0
    %850 = vmatpush2.msra.mxu0 0.0
    %851 = vmatprep.subr.mxu0 0.0
    %852 = vmatpush2.msra.mxu0 0.0
    %853 = vmatprep.subr.mxu0 0.0
    %854 = vmatpush2.msra.mxu0 0.0
    %855 = vmatprep.subr.mxu0 0.0
    %856 = vmatpush2.msra.mxu0 0.0
    %857 = vmatprep.subr.mxu0 0.0
    %858 = vmatpush2.msra.mxu0 0.0
    %859 = vmatprep.subr.mxu0 0.0
    %860 = vmatpush2.msra.mxu0 0.0
    %861 = vmatprep.subr.mxu0 0.0
    %862 = vmatpush2.msra.mxu0 0.0
    %863 = vmatprep.subr.mxu0 0.0
    %864 = vmatpush2.msra.mxu0 0.0
    %865 = vmatprep.subr.mxu0 0.0
    %866 = vmatpush2.msra.mxu0 0.0
    %867 = vmatprep.mubr.f32.mxu0 0.0
    %868 = vmatmul.mubr.f32.gmra.mxu0 %v255
    %v869 = vpop.f32.mrf.mxu0
    %v870 = vadd.f32 %v802, %v869
    %v871 = vpop.f32.mrf.mxu0
    %872 = vmatprep.mubr.f32.mxu0 0.0
    %873 = vmatmul.mubr.f32.gmra.mxu0 %v258
    %v874 = vpop.f32.mrf.mxu0
    %v875 = vadd.f32 %v802, %v874
    %v876 = vpop.f32.mrf.mxu0
    %877 = vdwg.mxu0
    %s878 = scalar_lea.vmem %s6, 160
    %v879 = vld [vmem:[%s878] sm:$0xff]
    %v880 = vld [vmem:[%s878 + $0x8] sm:$0xff]
    %v881 = vld [vmem:[%s878 + $0x10] sm:$0xff]
    %v882 = vld [vmem:[%s878 + $0x18] sm:$0xff]
    %v883 = vld [vmem:[%s7 + $0x5] sm:$0x1]
    %v884 = vlaneseq
    %v885 = vshrl.u32 %v884, 7
    %v886 = vsub.s32 0, %v885
    %v887 = vrot.slane %v883, %v886
    %888 = vmatprep.subr.mxu0 0.0
    %889 = vmatpush1.msra.mxu0 0.0
    %890 = vmatprep.subr.mxu0 0.0
    %891 = vmatpush1.msra.mxu0 0.0
    %892 = vmatprep.subr.mxu0 0.0
    %893 = vmatpush1.msra.mxu0 0.0
    %894 = vmatprep.subr.mxu0 0.0
    %895 = vmatpush1.msra.mxu0 0.0
    %896 = vmatprep.subr.mxu0 0.0
    %897 = vmatpush1.msra.mxu0 0.0
    %898 = vmatprep.subr.mxu0 0.0
    %899 = vmatpush1.msra.mxu0 0.0
    %900 = vmatprep.subr.mxu0 0.0
    %901 = vmatpush1.msra.mxu0 0.0
    %902 = vmatprep.subr.mxu0 0.0
    %903 = vmatpush1.msra.mxu0 0.0
    %904 = vmatprep.subr.mxu0 0.0
    %905 = vmatpush1.msra.mxu0 0.0
    %906 = vmatprep.subr.mxu0 0.0
    %907 = vmatpush1.msra.mxu0 0.0
    %908 = vmatprep.subr.mxu0 0.0
    %909 = vmatpush1.msra.mxu0 0.0
    %910 = vmatprep.subr.mxu0 0.0
    %911 = vmatpush1.msra.mxu0 0.0
    %912 = vmatprep.subr.mxu0 0.0
    %913 = vmatpush1.msra.mxu0 %v882
    %914 = vmatprep.subr.mxu0 0.0
    %915 = vmatpush1.msra.mxu0 %v881
    %916 = vmatprep.subr.mxu0 0.0
    %917 = vmatpush1.msra.mxu0 %v880
    %918 = vmatprep.subr.mxu0 0.0
    %919 = vmatpush1.msra.mxu0 %v879
    %920 = vmatprep.subr.mxu0 0.0
    %921 = vmatpush2.msra.mxu0 0.0
    %922 = vmatprep.subr.mxu0 0.0
    %923 = vmatpush2.msra.mxu0 0.0
    %924 = vmatprep.subr.mxu0 0.0
    %925 = vmatpush2.msra.mxu0 0.0
    %926 = vmatprep.subr.mxu0 0.0
    %927 = vmatpush2.msra.mxu0 0.0
    %928 = vmatprep.subr.mxu0 0.0
    %929 = vmatpush2.msra.mxu0 0.0
    %930 = vmatprep.subr.mxu0 0.0
    %931 = vmatpush2.msra.mxu0 0.0
    %932 = vmatprep.subr.mxu0 0.0
    %933 = vmatpush2.msra.mxu0 0.0
    %934 = vmatprep.subr.mxu0 0.0
    %935 = vmatpush2.msra.mxu0 0.0
    %936 = vmatprep.subr.mxu0 0.0
    %937 = vmatpush2.msra.mxu0 0.0
    %938 = vmatprep.subr.mxu0 0.0
    %939 = vmatpush2.msra.mxu0 0.0
    %940 = vmatprep.subr.mxu0 0.0
    %941 = vmatpush2.msra.mxu0 0.0
    %942 = vmatprep.subr.mxu0 0.0
    %943 = vmatpush2.msra.mxu0 0.0
    %944 = vmatprep.subr.mxu0 0.0
    %945 = vmatpush2.msra.mxu0 0.0
    %946 = vmatprep.subr.mxu0 0.0
    %947 = vmatpush2.msra.mxu0 0.0
    %948 = vmatprep.subr.mxu0 0.0
    %949 = vmatpush2.msra.mxu0 0.0
    %950 = vmatprep.subr.mxu0 0.0
    %951 = vmatpush2.msra.mxu0 0.0
    %952 = vmatprep.mubr.f32.mxu0 0.0
    %953 = vmatmul.mubr.f32.gmra.mxu0 %v255
    %v954 = vpop.f32.mrf.mxu0
    %v955 = vadd.f32 %v887, %v954
    %v956 = vpop.f32.mrf.mxu0
    %957 = vmatprep.mubr.f32.mxu0 0.0
    %958 = vmatmul.mubr.f32.gmra.mxu0 %v258
    %v959 = vpop.f32.mrf.mxu0
    %v960 = vadd.f32 %v887, %v959
    %v961 = vpop.f32.mrf.mxu0
    %962 = vdwg.mxu0
    %v964 = vsel %vm505, %v785, 0
    %v967 = vsel %vm505, %v790, 0
    %v970 = vsel %vm505, %v870, 0
    %v973 = vsel %vm505, %v875, 0
    %975 = vmatprep.subr.mxu0 0.0
    %976 = vmatpush1.xpose.msra.mxu0 0.0
    %977 = vmatprep.subr.mxu0 0.0
    %978 = vmatpush1.xpose.msra.mxu0 0.0
    %979 = vmatprep.subr.mxu0 0.0
    %980 = vmatpush1.xpose.msra.mxu0 0.0
    %981 = vmatprep.subr.mxu0 0.0
    %982 = vmatpush1.xpose.msra.mxu0 0.0
    %983 = vmatprep.subr.mxu0 0.0
    %984 = vmatpush1.xpose.msra.mxu0 0.0
    %985 = vmatprep.subr.mxu0 0.0
    %986 = vmatpush1.xpose.msra.mxu0 0.0
    %987 = vmatprep.subr.mxu0 0.0
    %988 = vmatpush1.xpose.msra.mxu0 0.0
    %989 = vmatprep.subr.mxu0 0.0
    %990 = vmatpush1.xpose.msra.mxu0 0.0
    %991 = vmatprep.subr.mxu0 0.0
    %992 = vmatpush1.xpose.msra.mxu0 0.0
    %993 = vmatprep.subr.mxu0 0.0
    %994 = vmatpush1.xpose.msra.mxu0 0.0
    %995 = vmatprep.subr.mxu0 0.0
    %996 = vmatpush1.xpose.msra.mxu0 0.0
    %997 = vmatprep.subr.mxu0 0.0
    %998 = vmatpush1.xpose.msra.mxu0 0.0
    %999 = vmatprep.subr.mxu0 0.0
    %1000 = vmatpush1.xpose.msra.mxu0 0.0
    %1001 = vmatprep.subr.mxu0 0.0
    %1002 = vmatpush1.xpose.msra.mxu0 0.0
    %1003 = vmatprep.subr.mxu0 0.0
    %1004 = vmatpush1.xpose.msra.mxu0 %v973
    %1005 = vmatprep.subr.mxu0 0.0
    %1006 = vmatpush1.xpose.msra.mxu0 %v970
    %1007 = vmatprep.subr.mxu0 0.0
    %1008 = vmatpush2.xpose.msra.mxu0 0.0
    %1009 = vmatprep.subr.mxu0 0.0
    %1010 = vmatpush2.xpose.msra.mxu0 0.0
    %1011 = vmatprep.subr.mxu0 0.0
    %1012 = vmatpush2.xpose.msra.mxu0 0.0
    %1013 = vmatprep.subr.mxu0 0.0
    %1014 = vmatpush2.xpose.msra.mxu0 0.0
    %1015 = vmatprep.subr.mxu0 0.0
    %1016 = vmatpush2.xpose.msra.mxu0 0.0
    %1017 = vmatprep.subr.mxu0 0.0
    %1018 = vmatpush2.xpose.msra.mxu0 0.0
    %1019 = vmatprep.subr.mxu0 0.0
    %1020 = vmatpush2.xpose.msra.mxu0 0.0
    %1021 = vmatprep.subr.mxu0 0.0
    %1022 = vmatpush2.xpose.msra.mxu0 0.0
    %1023 = vmatprep.subr.mxu0 0.0
    %1024 = vmatpush2.xpose.msra.mxu0 0.0
    %1025 = vmatprep.subr.mxu0 0.0
    %1026 = vmatpush2.xpose.msra.mxu0 0.0
    %1027 = vmatprep.subr.mxu0 0.0
    %1028 = vmatpush2.xpose.msra.mxu0 0.0
    %1029 = vmatprep.subr.mxu0 0.0
    %1030 = vmatpush2.xpose.msra.mxu0 0.0
    %1031 = vmatprep.subr.mxu0 0.0
    %1032 = vmatpush2.xpose.msra.mxu0 0.0
    %1033 = vmatprep.subr.mxu0 0.0
    %1034 = vmatpush2.xpose.msra.mxu0 0.0
    %1035 = vmatprep.subr.mxu0 0.0
    %1036 = vmatpush2.xpose.msra.mxu0 0.0
    %1037 = vmatprep.subr.mxu0 0.0
    %1038 = vmatpush2.xpose.msra.mxu0 0.0
    %1039 = vmatprep.mubr.f32.mxu0 0.0
    %1040 = vmatmul.mubr.f32.gmra.mxu0 %v964
    %v1041 = vpop.f32.mrf.mxu0
    %v1042 = vadd.f32 0.0, %v1041
    %v1043 = vpop.f32.mrf.mxu0
    %1044 = vmatprep.mubr.f32.mxu0 0.0
    %1045 = vmatmul.mubr.f32.gmra.mxu0 %v967
    %v1046 = vpop.f32.mrf.mxu0
    %v1047 = vadd.f32 0.0, %v1046
    %v1048 = vpop.f32.mrf.mxu0
    %1049 = vdwg.mxu0
    %v1050 = vmul.f32 %v1042, 0.25
    %v1051 = vmul.f32 %v1047, 0.25
    %v1052 = vadd.f32 %v1050, %v203
    %v1053 = vadd.f32 %v1051, %v204
    %v1054 = vsel %vm597, %v1052, -inf
    %1055 = vmax.xlane.f32.xlu0 %v1054
    %v1056 = vpop.xlane.xlu0 %1055
    %v1057 = vsel %vm601, %v1053, -inf
    %1058 = vmax.xlane.f32.xlu0 %v1057
    %v1059 = vpop.xlane.xlu0 %1058
    %v1060 = vsub.f32 %v1052, %v1056
    %v1061 = vsub.f32 %v1053, %v1059
    %v1062 = vmul.f32 %v1060, 1.442695
    %v1063 = vpow.pop %v1062
    %v1064 = vmul.f32 %v1061, 1.442695
    %v1065 = vpow.pop %v1064
    %v1066 = vsel %vm597, %v1063, 0.0
    %1067 = vadd.xlane.f32.xlu0 %v1066
    %v1068 = vpop.xlane.xlu0 %1067
    %v1069 = vsel %vm601, %v1065, 0.0
    %1070 = vadd.xlane.f32.xlu0 %v1069
    %v1071 = vpop.xlane.xlu0 %1070
    %v1072 = vrcp.pop %v1068
    %v1073 = vrcp.pop %v1071
    %v1074 = vmul.f32 %v1063, %v1072
    %v1075 = vmul.f32 %v1065, %v1073
    %v1077 = vsel %vm597, %v1074, 0
    %v1080 = vsel %vm597, %v1075, 0
    %v1083 = vsel %vm627, %v960, 0
    %1085 = vmatprep.subr.mxu0 0.0
    %1086 = vmatpush1.msra.mxu0 0.0
    %1087 = vmatprep.subr.mxu0 0.0
    %1088 = vmatpush1.msra.mxu0 0.0
    %1089 = vmatprep.subr.mxu0 0.0
    %1090 = vmatpush1.msra.mxu0 0.0
    %1091 = vmatprep.subr.mxu0 0.0
    %1092 = vmatpush1.msra.mxu0 0.0
    %1093 = vmatprep.subr.mxu0 0.0
    %1094 = vmatpush1.msra.mxu0 0.0
    %1095 = vmatprep.subr.mxu0 0.0
    %1096 = vmatpush1.msra.mxu0 0.0
    %1097 = vmatprep.subr.mxu0 0.0
    %1098 = vmatpush1.msra.mxu0 0.0
    %1099 = vmatprep.subr.mxu0 0.0
    %1100 = vmatpush1.msra.mxu0 0.0
    %1101 = vmatprep.subr.mxu0 0.0
    %1102 = vmatpush1.msra.mxu0 0.0
    %1103 = vmatprep.subr.mxu0 0.0
    %1104 = vmatpush1.msra.mxu0 0.0
    %1105 = vmatprep.subr.mxu0 0.0
    %1106 = vmatpush1.msra.mxu0 0.0
    %1107 = vmatprep.subr.mxu0 0.0
    %1108 = vmatpush1.msra.mxu0 0.0
    %1109 = vmatprep.subr.mxu0 0.0
    %1110 = vmatpush1.msra.mxu0 0.0
    %1111 = vmatprep.subr.mxu0 0.0
    %1112 = vmatpush1.msra.mxu0 0.0
    %1113 = vmatprep.subr.mxu0 0.0
    %1114 = vmatpush1.msra.mxu0 %v1083
    %1115 = vmatprep.subr.mxu0 0.0
    %1116 = vmatpush1.msra.mxu0 %v955
    %1117 = vmatprep.subr.mxu0 0.0
    %1118 = vmatpush2.msra.mxu0 0.0
    %1119 = vmatprep.subr.mxu0 0.0
    %1120 = vmatpush2.msra.mxu0 0.0
    %1121 = vmatprep.subr.mxu0 0.0
    %1122 = vmatpush2.msra.mxu0 0.0
    %1123 = vmatprep.subr.mxu0 0.0
    %1124 = vmatpush2.msra.mxu0 0.0
    %1125 = vmatprep.subr.mxu0 0.0
    %1126 = vmatpush2.msra.mxu0 0.0
    %1127 = vmatprep.subr.mxu0 0.0
    %1128 = vmatpush2.msra.mxu0 0.0
    %1129 = vmatprep.subr.mxu0 0.0
    %1130 = vmatpush2.msra.mxu0 0.0
    %1131 = vmatprep.subr.mxu0 0.0
    %1132 = vmatpush2.msra.mxu0 0.0
    %1133 = vmatprep.subr.mxu0 0.0
    %1134 = vmatpush2.msra.mxu0 0.0
    %1135 = vmatprep.subr.mxu0 0.0
    %1136 = vmatpush2.msra.mxu0 0.0
    %1137 = vmatprep.subr.mxu0 0.0
    %1138 = vmatpush2.msra.mxu0 0.0
    %1139 = vmatprep.subr.mxu0 0.0
    %1140 = vmatpush2.msra.mxu0 0.0
    %1141 = vmatprep.subr.mxu0 0.0
    %1142 = vmatpush2.msra.mxu0 0.0
    %1143 = vmatprep.subr.mxu0 0.0
    %1144 = vmatpush2.msra.mxu0 0.0
    %1145 = vmatprep.subr.mxu0 0.0
    %1146 = vmatpush2.msra.mxu0 0.0
    %1147 = vmatprep.subr.mxu0 0.0
    %1148 = vmatpush2.msra.mxu0 0.0
    %1149 = vmatprep.mubr.f32.mxu0 0.0
    %1150 = vmatmul.mubr.f32.gmra.mxu0 %v1077
    %v1151 = vpop.f32.mrf.mxu0
    %v1152 = vadd.f32 0.0, %v1151
    %v1153 = vpop.f32.mrf.mxu0
    %1154 = vmatprep.mubr.f32.mxu0 0.0
    %1155 = vmatmul.mubr.f32.gmra.mxu0 %v1080
    %v1156 = vpop.f32.mrf.mxu0
    %v1157 = vadd.f32 0.0, %v1156
    %v1158 = vpop.f32.mrf.mxu0
    %1159 = vdwg.mxu0
    %s1160 = scalar_lea.vmem %s8, 16
    %v1161 = vld [vmem:[%s1160] sm:$0xff]
    %v1162 = vld [vmem:[%s1160 + $0x8] sm:$0xff]
    %v1164 = vsel %vm505, %v1152, 0
    %v1167 = vsel %vm505, %v1157, 0
    %1169 = vmatprep.subr.mxu0 0.0
    %1170 = vmatpush1.msra.mxu0 0.0
    %1171 = vmatprep.subr.mxu0 0.0
    %1172 = vmatpush1.msra.mxu0 0.0
    %1173 = vmatprep.subr.mxu0 0.0
    %1174 = vmatpush1.msra.mxu0 0.0
    %1175 = vmatprep.subr.mxu0 0.0
    %1176 = vmatpush1.msra.mxu0 0.0
    %1177 = vmatprep.subr.mxu0 0.0
    %1178 = vmatpush1.msra.mxu0 0.0
    %1179 = vmatprep.subr.mxu0 0.0
    %1180 = vmatpush1.msra.mxu0 0.0
    %1181 = vmatprep.subr.mxu0 0.0
    %1182 = vmatpush1.msra.mxu0 0.0
    %1183 = vmatprep.subr.mxu0 0.0
    %1184 = vmatpush1.msra.mxu0 0.0
    %1185 = vmatprep.subr.mxu0 0.0
    %1186 = vmatpush1.msra.mxu0 0.0
    %1187 = vmatprep.subr.mxu0 0.0
    %1188 = vmatpush1.msra.mxu0 0.0
    %1189 = vmatprep.subr.mxu0 0.0
    %1190 = vmatpush1.msra.mxu0 0.0
    %1191 = vmatprep.subr.mxu0 0.0
    %1192 = vmatpush1.msra.mxu0 0.0
    %1193 = vmatprep.subr.mxu0 0.0
    %1194 = vmatpush1.msra.mxu0 0.0
    %1195 = vmatprep.subr.mxu0 0.0
    %1196 = vmatpush1.msra.mxu0 0.0
    %1197 = vmatprep.subr.mxu0 0.0
    %1198 = vmatpush1.msra.mxu0 %v1162
    %1199 = vmatprep.subr.mxu0 0.0
    %1200 = vmatpush1.msra.mxu0 %v1161
    %1201 = vmatprep.subr.mxu0 0.0
    %1202 = vmatpush2.msra.mxu0 0.0
    %1203 = vmatprep.subr.mxu0 0.0
    %1204 = vmatpush2.msra.mxu0 0.0
    %1205 = vmatprep.subr.mxu0 0.0
    %1206 = vmatpush2.msra.mxu0 0.0
    %1207 = vmatprep.subr.mxu0 0.0
    %1208 = vmatpush2.msra.mxu0 0.0
    %1209 = vmatprep.subr.mxu0 0.0
    %1210 = vmatpush2.msra.mxu0 0.0
    %1211 = vmatprep.subr.mxu0 0.0
    %1212 = vmatpush2.msra.mxu0 0.0
    %1213 = vmatprep.subr.mxu0 0.0
    %1214 = vmatpush2.msra.mxu0 0.0
    %1215 = vmatprep.subr.mxu0 0.0
    %1216 = vmatpush2.msra.mxu0 0.0
    %1217 = vmatprep.subr.mxu0 0.0
    %1218 = vmatpush2.msra.mxu0 0.0
    %1219 = vmatprep.subr.mxu0 0.0
    %1220 = vmatpush2.msra.mxu0 0.0
    %1221 = vmatprep.subr.mxu0 0.0
    %1222 = vmatpush2.msra.mxu0 0.0
    %1223 = vmatprep.subr.mxu0 0.0
    %1224 = vmatpush2.msra.mxu0 0.0
    %1225 = vmatprep.subr.mxu0 0.0
    %1226 = vmatpush2.msra.mxu0 0.0
    %1227 = vmatprep.subr.mxu0 0.0
    %1228 = vmatpush2.msra.mxu0 0.0
    %1229 = vmatprep.subr.mxu0 0.0
    %1230 = vmatpush2.msra.mxu0 0.0
    %1231 = vmatprep.subr.mxu0 0.0
    %1232 = vmatpush2.msra.mxu0 0.0
    %1233 = vmatprep.mubr.f32.mxu0 0.0
    %1234 = vmatmul.mubr.f32.gmra.mxu0 %v1164
    %v1235 = vpop.f32.mrf.mxu0
    %v1236 = vadd.f32 0.0, %v1235
    %v1237 = vpop.f32.mrf.mxu0
    %1238 = vmatprep.mubr.f32.mxu0 0.0
    %1239 = vmatmul.mubr.f32.gmra.mxu0 %v1167
    %v1240 = vpop.f32.mrf.mxu0
    %v1241 = vadd.f32 0.0, %v1240
    %v1242 = vpop.f32.mrf.mxu0
    %1243 = vdwg.mxu0
    %v1245 = vsel %vm505, %v698, 0
    %v1248 = vsel %vm505, %v703, 0
    %1250 = vmatprep.subr.mxu0 0.0
    %1251 = vmatpush1.msra.mxu0 0.0
    %1252 = vmatprep.subr.mxu0 0.0
    %1253 = vmatpush1.msra.mxu0 0.0
    %1254 = vmatprep.subr.mxu0 0.0
    %1255 = vmatpush1.msra.mxu0 0.0
    %1256 = vmatprep.subr.mxu0 0.0
    %1257 = vmatpush1.msra.mxu0 0.0
    %1258 = vmatprep.subr.mxu0 0.0
    %1259 = vmatpush1.msra.mxu0 0.0
    %1260 = vmatprep.subr.mxu0 0.0
    %1261 = vmatpush1.msra.mxu0 0.0
    %1262 = vmatprep.subr.mxu0 0.0
    %1263 = vmatpush1.msra.mxu0 0.0
    %1264 = vmatprep.subr.mxu0 0.0
    %1265 = vmatpush1.msra.mxu0 0.0
    %1266 = vmatprep.subr.mxu0 0.0
    %1267 = vmatpush1.msra.mxu0 0.0
    %1268 = vmatprep.subr.mxu0 0.0
    %1269 = vmatpush1.msra.mxu0 0.0
    %1270 = vmatprep.subr.mxu0 0.0
    %1271 = vmatpush1.msra.mxu0 0.0
    %1272 = vmatprep.subr.mxu0 0.0
    %1273 = vmatpush1.msra.mxu0 0.0
    %1274 = vmatprep.subr.mxu0 0.0
    %1275 = vmatpush1.msra.mxu0 0.0
    %1276 = vmatprep.subr.mxu0 0.0
    %1277 = vmatpush1.msra.mxu0 0.0
    %1278 = vmatprep.subr.mxu0 0.0
    %1279 = vmatpush1.msra.mxu0 %v707
    %1280 = vmatprep.subr.mxu0 0.0
    %1281 = vmatpush1.msra.mxu0 %v706
    %1282 = vmatprep.subr.mxu0 0.0
    %1283 = vmatpush2.msra.mxu0 0.0
    %1284 = vmatprep.subr.mxu0 0.0
    %1285 = vmatpush2.msra.mxu0 0.0
    %1286 = vmatprep.subr.mxu0 0.0
    %1287 = vmatpush2.msra.mxu0 0.0
    %1288 = vmatprep.subr.mxu0 0.0
    %1289 = vmatpush2.msra.mxu0 0.0
    %1290 = vmatprep.subr.mxu0 0.0
    %1291 = vmatpush2.msra.mxu0 0.0
    %1292 = vmatprep.subr.mxu0 0.0
    %1293 = vmatpush2.msra.mxu0 0.0
    %1294 = vmatprep.subr.mxu0 0.0
    %1295 = vmatpush2.msra.mxu0 0.0
    %1296 = vmatprep.subr.mxu0 0.0
    %1297 = vmatpush2.msra.mxu0 0.0
    %1298 = vmatprep.subr.mxu0 0.0
    %1299 = vmatpush2.msra.mxu0 0.0
    %1300 = vmatprep.subr.mxu0 0.0
    %1301 = vmatpush2.msra.mxu0 0.0
    %1302 = vmatprep.subr.mxu0 0.0
    %1303 = vmatpush2.msra.mxu0 0.0
    %1304 = vmatprep.subr.mxu0 0.0
    %1305 = vmatpush2.msra.mxu0 0.0
    %1306 = vmatprep.subr.mxu0 0.0
    %1307 = vmatpush2.msra.mxu0 0.0
    %1308 = vmatprep.subr.mxu0 0.0
    %1309 = vmatpush2.msra.mxu0 0.0
    %1310 = vmatprep.subr.mxu0 0.0
    %1311 = vmatpush2.msra.mxu0 0.0
    %1312 = vmatprep.subr.mxu0 0.0
    %1313 = vmatpush2.msra.mxu0 0.0
    %1314 = vmatprep.mubr.f32.mxu0 0.0
    %1315 = vmatmul.mubr.f32.gmra.mxu0 %v1245
    %v1316 = vpop.f32.mrf.mxu0
    %v1317 = vadd.f32 %v1236, %v1316
    %v1318 = vpop.f32.mrf.mxu0
    %1319 = vmatprep.mubr.f32.mxu0 0.0
    %1320 = vmatmul.mubr.f32.gmra.mxu0 %v1248
    %v1321 = vpop.f32.mrf.mxu0
    %v1322 = vadd.f32 %v1241, %v1321
    %v1323 = vpop.f32.mrf.mxu0
    %1324 = vdwg.mxu0
    %v1325 = vadd.f32 %v201, %v1317
    %v1326 = vadd.f32 %v202, %v1322
    %v1327 = vld [vmem:[%s9 + $0x2] sm:$0x1]
    %v1328 = vlaneseq
    %v1329 = vshrl.u32 %v1328, 7
    %v1330 = vsub.s32 0, %v1329
    %v1331 = vrot.slane %v1327, %v1330
    %v1332 = vadd.f32 %v1325, %v1331
    %v1333 = vadd.f32 %v1326, %v1331
    %v1334 = vld [vmem:[%s9 + $0x3] sm:$0x1]
    %v1335 = vld [vmem:[%s9 + $0x4] sm:$0x1]
    %v1336 = vsel %vm162, %v1332, 0.0
    %1337 = vadd.xlane.f32.xlu0 %v1336
    %v1338 = vpop.xlane.xlu0 %1337
    %v1339 = vsel %vm166, %v1333, 0.0
    %1340 = vadd.xlane.f32.xlu0 %v1339
    %v1341 = vpop.xlane.xlu0 %1340
    %v1342 = vmul.f32 %v1338, %v170
    %v1343 = vmul.f32 %v1341, %v170
    %v1344 = vsub.f32 %v1332, %v1342
    %v1345 = vsub.f32 %v1333, %v1343
    %v1346 = vmul.f32 %v1344, %v1344
    %v1347 = vmul.f32 %v1345, %v1345
    %v1348 = vsel %vm162, %v1346, 0.0
    %1349 = vadd.xlane.f32.xlu0 %v1348
    %v1350 = vpop.xlane.xlu0 %1349
    %v1351 = vsel %vm166, %v1347, 0.0
    %1352 = vadd.xlane.f32.xlu0 %v1351
    %v1353 = vpop.xlane.xlu0 %1352
    %v1354 = vmul.f32 %v1350, %v170
    %v1355 = vmul.f32 %v1353, %v170
    %v1356 = vadd.f32 %v1354, 1e-05
    %v1357 = vadd.f32 %v1355, 1e-05
    %v1358 = vrsqrt.pop %v1356
    %v1359 = vrsqrt.pop %v1357
    %v1360 = vmul.f32 %v1344, %v1358
    %v1361 = vmul.f32 %v1345, %v1359
    %v1362 = vlaneseq
    %v1363 = vshrl.u32 %v1362, 7
    %v1364 = vsub.s32 0, %v1363
    %v1365 = vrot.slane %v1334, %v1364
    %v1366 = vmul.f32 %v1360, %v1365
    %v1367 = vmul.f32 %v1361, %v1365
    %v1368 = vlaneseq
    %v1369 = vshrl.u32 %v1368, 7
    %v1370 = vsub.s32 0, %v1369
    %v1371 = vrot.slane %v1335, %v1370
    %v1372 = vadd.f32 %v1366, %v1371
    %v1373 = vadd.f32 %v1367, %v1371
    %v1374 = vld [vmem:[%s10] sm:$0xff]
    %v1375 = vld [vmem:[%s10 + $0x8] sm:$0xff]
    %v1376 = vld [vmem:[%s10 + $0x10] sm:$0xff]
    %v1377 = vld [vmem:[%s10 + $0x18] sm:$0xff]
    %v1378 = vld [vmem:[%s11] sm:$0x1]
    %v1379 = vlaneseq
    %v1380 = vshrl.u32 %v1379, 7
    %v1381 = vsub.s32 0, %v1380
    %v1382 = vrot.slane %v1378, %v1381
    %v1384 = vsel %vm162, %v1372, 0
    %v1387 = vsel %vm162, %v1373, 0
    %1389 = vmatprep.subr.mxu0 0.0
    %1390 = vmatpush1.msra.mxu0 0.0
    %1391 = vmatprep.subr.mxu0 0.0
    %1392 = vmatpush1.msra.mxu0 0.0
    %1393 = vmatprep.subr.mxu0 0.0
    %1394 = vmatpush1.msra.mxu0 0.0
    %1395 = vmatprep.subr.mxu0 0.0
    %1396 = vmatpush1.msra.mxu0 0.0
    %1397 = vmatprep.subr.mxu0 0.0
    %1398 = vmatpush1.msra.mxu0 0.0
    %1399 = vmatprep.subr.mxu0 0.0
    %1400 = vmatpush1.msra.mxu0 0.0
    %1401 = vmatprep.subr.mxu0 0.0
    %1402 = vmatpush1.msra.mxu0 0.0
    %1403 = vmatprep.subr.mxu0 0.0
    %1404 = vmatpush1.msra.mxu0 0.0
    %1405 = vmatprep.subr.mxu0 0.0
    %1406 = vmatpush1.msra.mxu0 0.0
    %1407 = vmatprep.subr.mxu0 0.0
    %1408 = vmatpush1.msra.mxu0 0.0
    %1409 = vmatprep.subr.mxu0 0.0
    %1410 = vmatpush1.msra.mxu0 0.0
    %1411 = vmatprep.subr.mxu0 0.0
    %1412 = vmatpush1.msra.mxu0 0.0
    %1413 = vmatprep.subr.mxu0 0.0
    %1414 = vmatpush1.msra.mxu0 %v1377
    %1415 = vmatprep.subr.mxu0 0.0
    %1416 = vmatpush1.msra.mxu0 %v1376
    %1417 = vmatprep.subr.mxu0 0.0
    %1418 = vmatpush1.msra.mxu0 %v1375
    %1419 = vmatprep.subr.mxu0 0.0
    %1420 = vmatpush1.msra.mxu0 %v1374
    %1421 = vmatprep.subr.mxu0 0.0
    %1422 = vmatpush2.msra.mxu0 0.0
    %1423 = vmatprep.subr.mxu0 0.0
    %1424 = vmatpush2.msra.mxu0 0.0
    %1425 = vmatprep.subr.mxu0 0.0
    %1426 = vmatpush2.msra.mxu0 0.0
    %1427 = vmatprep.subr.mxu0 0.0
    %1428 = vmatpush2.msra.mxu0 0.0
    %1429 = vmatprep.subr.mxu0 0.0
    %1430 = vmatpush2.msra.mxu0 0.0
    %1431 = vmatprep.subr.mxu0 0.0
    %1432 = vmatpush2.msra.mxu0 0.0
    %1433 = vmatprep.subr.mxu0 0.0
    %1434 = vmatpush2.msra.mxu0 0.0
    %1435 = vmatprep.subr.mxu0 0.0
    %1436 = vmatpush2.msra.mxu0 0.0
    %1437 = vmatprep.subr.mxu0 0.0
    %1438 = vmatpush2.msra.mxu0 0.0
    %1439 = vmatprep.subr.mxu0 0.0
    %1440 = vmatpush2.msra.mxu0 0.0
    %1441 = vmatprep.subr.mxu0 0.0
    %1442 = vmatpush2.msra.mxu0 0.0
    %1443 = vmatprep.subr.mxu0 0.0
    %1444 = vmatpush2.msra.mxu0 0.0
    %1445 = vmatprep.subr.mxu0 0.0
    %1446 = vmatpush2.msra.mxu0 0.0
    %1447 = vmatprep.subr.mxu0 0.0
    %1448 = vmatpush2.msra.mxu0 0.0
    %1449 = vmatprep.subr.mxu0 0.0
    %1450 = vmatpush2.msra.mxu0 0.0
    %1451 = vmatprep.subr.mxu0 0.0
    %1452 = vmatpush2.msra.mxu0 0.0
    %1453 = vmatprep.mubr.f32.mxu0 0.0
    %1454 = vmatmul.mubr.f32.gmra.mxu0 %v1384
    %v1455 = vpop.f32.mrf.mxu0
    %v1456 = vadd.f32 %v1382, %v1455
    %v1457 = vpop.f32.mrf.mxu0
    %1458 = vmatprep.mubr.f32.mxu0 0.0
    %1459 = vmatmul.mubr.f32.gmra.mxu0 %v1387
    %v1460 = vpop.f32.mrf.mxu0
    %v1461 = vadd.f32 %v1382, %v1460
    %v1462 = vpop.f32.mrf.mxu0
    %1463 = vdwg.mxu0
    %v1464 = vmul.f32 %v1456, 1.702
    %v1465 = vmul.f32 %v1461, 1.702
    %v1466 = vxor.u32 %v1464, 2147483648
    %v1467 = vxor.u32 %v1465, 2147483648
    %v1468 = vmul.f32 %v1466, 1.442695
    %v1469 = vpow.pop %v1468
    %v1470 = vmul.f32 %v1467, 1.442695
    %v1471 = vpow.pop %v1470
    %v1472 = vadd.f32 %v1469, 1.0
    %v1473 = vadd.f32 %v1471, 1.0
    %v1474 = vrcp.pop %v1472
    %v1475 = vmul.f32 1.0, %v1474
    %v1476 = vrcp.pop %v1473
    %v1477 = vmul.f32 1.0, %v1476
    %v1478 = vmul.f32 %v1456, %v1475
    %v1479 = vmul.f32 %v1461, %v1477
    %v1480 = vld [vmem:[%s12] sm:$0xff]
    %v1481 = vld [vmem:[%s12 + $0x8] sm:$0xff]
    %v1482 = vld [vmem:[%s12 + $0x10] sm:$0xff]
    %v1483 = vld [vmem:[%s12 + $0x18] sm:$0xff]
    %v1484 = vld [vmem:[%s12 + $0x20] sm:$0xff]
    %v1485 = vld [vmem:[%s12 + $0x28] sm:$0xff]
    %v1486 = vld [vmem:[%s12 + $0x30] sm:$0xff]
    %v1487 = vld [vmem:[%s12 + $0x38] sm:$0xff]
    %v1488 = vld [vmem:[%s12 + $0x40] sm:$0xff]
    %v1489 = vld [vmem:[%s12 + $0x48] sm:$0xff]
    %v1490 = vld [vmem:[%s12 + $0x50] sm:$0xff]
    %v1491 = vld [vmem:[%s12 + $0x58] sm:$0xff]
    %v1492 = vld [vmem:[%s12 + $0x60] sm:$0xff]
    %v1493 = vld [vmem:[%s12 + $0x68] sm:$0xff]
    %v1494 = vld [vmem:[%s12 + $0x70] sm:$0xff]
    %v1495 = vld [vmem:[%s12 + $0x78] sm:$0xff]
    %v1496 = vld [vmem:[%s9 + $0x5] sm:$0x1]
    %v1497 = vlaneseq
    %v1498 = vshrl.u32 %v1497, 7
    %v1499 = vsub.s32 0, %v1498
    %v1500 = vrot.slane %v1496, %v1499
    %1501 = vmatprep.subr.mxu0 0.0
    %1502 = vmatpush1.msra.mxu0 %v1495
    %1503 = vmatprep.subr.mxu0 0.0
    %1504 = vmatpush1.msra.mxu0 %v1494
    %1505 = vmatprep.subr.mxu0 0.0
    %1506 = vmatpush1.msra.mxu0 %v1493
    %1507 = vmatprep.subr.mxu0 0.0
    %1508 = vmatpush1.msra.mxu0 %v1492
    %1509 = vmatprep.subr.mxu0 0.0
    %1510 = vmatpush1.msra.mxu0 %v1491
    %1511 = vmatprep.subr.mxu0 0.0
    %1512 = vmatpush1.msra.mxu0 %v1490
    %1513 = vmatprep.subr.mxu0 0.0
    %1514 = vmatpush1.msra.mxu0 %v1489
    %1515 = vmatprep.subr.mxu0 0.0
    %1516 = vmatpush1.msra.mxu0 %v1488
    %1517 = vmatprep.subr.mxu0 0.0
    %1518 = vmatpush1.msra.mxu0 %v1487
    %1519 = vmatprep.subr.mxu0 0.0
    %1520 = vmatpush1.msra.mxu0 %v1486
    %1521 = vmatprep.subr.mxu0 0.0
    %1522 = vmatpush1.msra.mxu0 %v1485
    %1523 = vmatprep.subr.mxu0 0.0
    %1524 = vmatpush1.msra.mxu0 %v1484
    %1525 = vmatprep.subr.mxu0 0.0
    %1526 = vmatpush1.msra.mxu0 %v1483
    %1527 = vmatprep.subr.mxu0 0.0
    %1528 = vmatpush1.msra.mxu0 %v1482
    %1529 = vmatprep.subr.mxu0 0.0
    %1530 = vmatpush1.msra.mxu0 %v1481
    %1531 = vmatprep.subr.mxu0 0.0
    %1532 = vmatpush1.msra.mxu0 %v1480
    %1533 = vmatprep.subr.mxu0 0.0
    %1534 = vmatpush2.msra.mxu0 0.0
    %1535 = vmatprep.subr.mxu0 0.0
    %1536 = vmatpush2.msra.mxu0 0.0
    %1537 = vmatprep.subr.mxu0 0.0
    %1538 = vmatpush2.msra.mxu0 0.0
    %1539 = vmatprep.subr.mxu0 0.0
    %1540 = vmatpush2.msra.mxu0 0.0
    %1541 = vmatprep.subr.mxu0 0.0
    %1542 = vmatpush2.msra.mxu0 0.0
    %1543 = vmatprep.subr.mxu0 0.0
    %1544 = vmatpush2.msra.mxu0 0.0
    %1545 = vmatprep.subr.mxu0 0.0
    %1546 = vmatpush2.msra.mxu0 0.0
    %1547 = vmatprep.subr.mxu0 0.0
    %1548 = vmatpush2.msra.mxu0 0.0
    %1549 = vmatprep.subr.mxu0 0.0
    %1550 = vmatpush2.msra.mxu0 0.0
    %1551 = vmatprep.subr.mxu0 0.0
    %1552 = vmatpush2.msra.mxu0 0.0
    %1553 = vmatprep.subr.mxu0 0.0
    %1554 = vmatpush2.msra.mxu0 0.0
    %1555 = vmatprep.subr.mxu0 0.0
    %1556 = vmatpush2.msra.mxu0 0.0
    %1557 = vmatprep.subr.mxu0 0.0
    %1558 = vmatpush2.msra.mxu0 0.0
    %1559 = vmatprep.subr.mxu0 0.0
    %1560 = vmatpush2.msra.mxu0 0.0
    %1561 = vmatprep.subr.mxu0 0.0
    %1562 = vmatpush2.msra.mxu0 0.0
    %1563 = vmatprep.subr.mxu0 0.0
    %1564 = vmatpush2.msra.mxu0 0.0
    %1565 = vmatprep.mubr.f32.mxu0 0.0
    %1566 = vmatmul.mubr.f32.gmra.mxu0 %v1478
    %v1567 = vpop.f32.mrf.mxu0
    %v1568 = vadd.f32 %v1500, %v1567
    %v1569 = vpop.f32.mrf.mxu0
    %1570 = vmatprep.mubr.f32.mxu0 0.0
    %1571 = vmatmul.mubr.f32.gmra.mxu0 %v1479
    %v1572 = vpop.f32.mrf.mxu0
    %v1573 = vadd.f32 %v1500, %v1572
    %v1574 = vpop.f32.mrf.mxu0
    %1575 = vdwg.mxu0
    %v1576 = vadd.f32 %v1332, %v1568
    %v1577 = vadd.f32 %v1333, %v1573
    %v1578 = vld [vmem:[%s9 + $0x6] sm:$0x1]
    %v1579 = vld [vmem:[%s9 + $0x7] sm:$0x1]
    %v1580 = vsel %vm162, %v1576, 0.0
    %1581 = vadd.xlane.f32.xlu0 %v1580
    %v1582 = vpop.xlane.xlu0 %1581
    %v1583 = vsel %vm166, %v1577, 0.0
    %1584 = vadd.xlane.f32.xlu0 %v1583
    %v1585 = vpop.xlane.xlu0 %1584
    %v1586 = vmul.f32 %v1582, %v170
    %v1587 = vmul.f32 %v1585, %v170
    %v1588 = vsub.f32 %v1576, %v1586
    %v1589 = vsub.f32 %v1577, %v1587
    %v1590 = vmul.f32 %v1588, %v1588
    %v1591 = vmul.f32 %v1589, %v1589
    %v1592 = vsel %vm162, %v1590, 0.0
    %1593 = vadd.xlane.f32.xlu0 %v1592
    %v1594 = vpop.xlane.xlu0 %1593
    %v1595 = vsel %vm166, %v1591, 0.0
    %1596 = vadd.xlane.f32.xlu0 %v1595
    %v1597 = vpop.xlane.xlu0 %1596
    %v1598 = vmul.f32 %v1594, %v170
    %v1599 = vmul.f32 %v1597, %v170
    %v1600 = vadd.f32 %v1598, 1e-05
    %v1601 = vadd.f32 %v1599, 1e-05
    %v1602 = vrsqrt.pop %v1600
    %v1603 = vrsqrt.pop %v1601
    %v1604 = vmul.f32 %v1588, %v1602
    %v1605 = vmul.f32 %v1589, %v1603
    %v1606 = vlaneseq
    %v1607 = vshrl.u32 %v1606, 7
    %v1608 = vsub.s32 0, %v1607
    %v1609 = vrot.slane %v1578, %v1608
    %v1610 = vmul.f32 %v1604, %v1609
    %v1611 = vmul.f32 %v1605, %v1609
    %v1612 = vlaneseq
    %v1613 = vshrl.u32 %v1612, 7
    %v1614 = vsub.s32 0, %v1613
    %v1615 = vrot.slane %v1579, %v1614
    %v1616 = vadd.f32 %v1610, %v1615
    %v1617 = vadd.f32 %v1611, %v1615
    %s1618 = scalar_lea.vmem %s6, 192
    %v1619 = vld [vmem:[%s1618] sm:$0xff]
    %v1620 = vld [vmem:[%s1618 + $0x8] sm:$0xff]
    %v1621 = vld [vmem:[%s1618 + $0x10] sm:$0xff]
    %v1622 = vld [vmem:[%s1618 + $0x18] sm:$0xff]
    %v1623 = vld [vmem:[%s7 + $0x6] sm:$0x1]
    %v1624 = vlaneseq
    %v1625 = vshrl.u32 %v1624, 7
    %v1626 = vsub.s32 0, %v1625
    %v1627 = vrot.slane %v1623, %v1626
    %v1629 = vsel %vm162, %v1616, 0
    %v1632 = vsel %vm162, %v1617, 0
    %1634 = vmatprep.subr.mxu0 0.0
    %1635 = vmatpush1.msra.mxu0 0.0
    %1636 = vmatprep.subr.mxu0 0.0
    %1637 = vmatpush1.msra.mxu0 0.0
    %1638 = vmatprep.subr.mxu0 0.0
    %1639 = vmatpush1.msra.mxu0 0.0
    %1640 = vmatprep.subr.mxu0 0.0
    %1641 = vmatpush1.msra.mxu0 0.0
    %1642 = vmatprep.subr.mxu0 0.0
    %1643 = vmatpush1.msra.mxu0 0.0
    %1644 = vmatprep.subr.mxu0 0.0
    %1645 = vmatpush1.msra.mxu0 0.0
    %1646 = vmatprep.subr.mxu0 0.0
    %1647 = vmatpush1.msra.mxu0 0.0
    %1648 = vmatprep.subr.mxu0 0.0
    %1649 = vmatpush1.msra.mxu0 0.0
    %1650 = vmatprep.subr.mxu0 0.0
    %1651 = vmatpush1.msra.mxu0 0.0
    %1652 = vmatprep.subr.mxu0 0.0
    %1653 = vmatpush1.msra.mxu0 0.0
    %1654 = vmatprep.subr.mxu0 0.0
    %1655 = vmatpush1.msra.mxu0 0.0
    %1656 = vmatprep.subr.mxu0 0.0
    %1657 = vmatpush1.msra.mxu0 0.0
    %1658 = vmatprep.subr.mxu0 0.0
    %1659 = vmatpush1.msra.mxu0 %v1622
    %1660 = vmatprep.subr.mxu0 0.0
    %1661 = vmatpush1.msra.mxu0 %v1621
    %1662 = vmatprep.subr.mxu0 0.0
    %1663 = vmatpush1.msra.mxu0 %v1620
    %1664 = vmatprep.subr.mxu0 0.0
    %1665 = vmatpush1.msra.mxu0 %v1619
    %1666 = vmatprep.subr.mxu0 0.0
    %1667 = vmatpush2.msra.mxu0 0.0
    %1668 = vmatprep.subr.mxu0 0.0
    %1669 = vmatpush2.msra.mxu0 0.0
    %1670 = vmatprep.subr.mxu0 0.0
    %1671 = vmatpush2.msra.mxu0 0.0
    %1672 = vmatprep.subr.mxu0 0.0
    %1673 = vmatpush2.msra.mxu0 0.0
    %1674 = vmatprep.subr.mxu0 0.0
    %1675 = vmatpush2.msra.mxu0 0.0
    %1676 = vmatprep.subr.mxu0 0.0
    %1677 = vmatpush2.msra.mxu0 0.0
    %1678 = vmatprep.subr.mxu0 0.0
    %1679 = vmatpush2.msra.mxu0 0.0
    %1680 = vmatprep.subr.mxu0 0.0
    %1681 = vmatpush2.msra.mxu0 0.0
    %1682 = vmatprep.subr.mxu0 0.0
    %1683 = vmatpush2.msra.mxu0 0.0
    %1684 = vmatprep.subr.mxu0 0.0
    %1685 = vmatpush2.msra.mxu0 0.0
    %1686 = vmatprep.subr.mxu0 0.0
    %1687 = vmatpush2.msra.mxu0 0.0
    %1688 = vmatprep.subr.mxu0 0.0
    %1689 = vmatpush2.msra.mxu0 0.0
    %1690 = vmatprep.subr.mxu0 0.0
    %1691 = vmatpush2.msra.mxu0 0.0
    %1692 = vmatprep.subr.mxu0 0.0
    %1693 = vmatpush2.msra.mxu0 0.0
    %1694 = vmatprep.subr.mxu0 0.0
    %1695 = vmatpush2.msra.mxu0 0.0
    %1696 = vmatprep.subr.mxu0 0.0
    %1697 = vmatpush2.msra.mxu0 0.0
    %1698 = vmatprep.mubr.f32.mxu0 0.0
    %1699 = vmatmul.mubr.f32.gmra.mxu0 %v1629
    %v1700 = vpop.f32.mrf.mxu0
    %v1701 = vadd.f32 %v1627, %v1700
    %v1702 = vpop.f32.mrf.mxu0
    %1703 = vmatprep.mubr.f32.mxu0 0.0
    %1704 = vmatmul.mubr.f32.gmra.mxu0 %v1632
    %v1705 = vpop.f32.mrf.mxu0
    %v1706 = vadd.f32 %v1627, %v1705
    %v1707 = vpop.f32.mrf.mxu0
    %1708 = vdwg.mxu0
    %s1709 = scalar_lea.vmem %s6, 256
    %v1710 = vld [vmem:[%s1709] sm:$0xff]
    %v1711 = vld [vmem:[%s1709 + $0x8] sm:$0xff]
    %v1712 = vld [vmem:[%s1709 + $0x10] sm:$0xff]
    %v1713 = vld [vmem:[%s1709 + $0x18] sm:$0xff]
    %v1714 = vld [vmem:[%s7 + $0x8] sm:$0x1]
    %v1715 = vlaneseq
    %v1716 = vshrl.u32 %v1715, 7
    %v1717 = vsub.s32 0, %v1716
    %v1718 = vrot.slane %v1714, %v1717
    %1719 = vmatprep.subr.mxu0 0.0
    %1720 = vmatpush1.msra.mxu0 0.0
    %1721 = vmatprep.subr.mxu0 0.0
    %1722 = vmatpush1.msra.mxu0 0.0
    %1723 = vmatprep.subr.mxu0 0.0
    %1724 = vmatpush1.msra.mxu0 0.0
    %1725 = vmatprep.subr.mxu0 0.0
    %1726 = vmatpush1.msra.mxu0 0.0
    %1727 = vmatprep.subr.mxu0 0.0
    %1728 = vmatpush1.msra.mxu0 0.0
    %1729 = vmatprep.subr.mxu0 0.0
    %1730 = vmatpush1.msra.mxu0 0.0
    %1731 = vmatprep.subr.mxu0 0.0
    %1732 = vmatpush1.msra.mxu0 0.0
    %1733 = vmatprep.subr.mxu0 0.0
    %1734 = vmatpush1.msra.mxu0 0.0
    %1735 = vmatprep.subr.mxu0 0.0
    %1736 = vmatpush1.msra.mxu0 0.0
    %1737 = vmatprep.subr.mxu0 0.0
    %1738 = vmatpush1.msra.mxu0 0.0
    %1739 = vmatprep.subr.mxu0 0.0
    %1740 = vmatpush1.msra.mxu0 0.0
    %1741 = vmatprep.subr.mxu0 0.0
    %1742 = vmatpush1.msra.mxu0 0.0
    %1743 = vmatprep.subr.mxu0 0.0
    %1744 = vmatpush1.msra.mxu0 %v1713
    %1745 = vmatprep.subr.mxu0 0.0
    %1746 = vmatpush1.msra.mxu0 %v1712
    %1747 = vmatprep.subr.mxu0 0.0
    %1748 = vmatpush1.msra.mxu0 %v1711
    %1749 = vmatprep.subr.mxu0 0.0
    %1750 = vmatpush1.msra.mxu0 %v1710
    %1751 = vmatprep.subr.mxu0 0.0
    %1752 = vmatpush2.msra.mxu0 0.0
    %1753 = vmatprep.subr.mxu0 0.0
    %1754 = vmatpush2.msra.mxu0 0.0
    %1755 = vmatprep.subr.mxu0 0.0
    %1756 = vmatpush2.msra.mxu0 0.0
    %1757 = vmatprep.subr.mxu0 0.0
    %1758 = vmatpush2.msra.mxu0 0.0
    %1759 = vmatprep.subr.mxu0 0.0
    %1760 = vmatpush2.msra.mxu0 0.0
    %1761 = vmatprep.subr.mxu0 0.0
    %1762 = vmatpush2.msra.mxu0 0.0
    %1763 = vmatprep.subr.mxu0 0.0
    %1764 = vmatpush2.msra.mxu0 0.0
    %1765 = vmatprep.subr.mxu0 0.0
    %1766 = vmatpush2.msra.mxu0 0.0
    %1767 = vmatprep.subr.mxu0 0.0
    %1768 = vmatpush2.msra.mxu0 0.0
    %1769 = vmatprep.subr.mxu0 0.0
    %1770 = vmatpush2.msra.mxu0 0.0
    %1771 = vmatprep.subr.mxu0 0.0
    %1772 = vmatpush2.msra.mxu0 0.0
    %1773 = vmatprep.subr.mxu0 0.0
    %1774 = vmatpush2.msra.mxu0 0.0
    %1775 = vmatprep.subr.mxu0 0.0
    %1776 = vmatpush2.msra.mxu0 0.0
    %1777 = vmatprep.subr.mxu0 0.0
    %1778 = vmatpush2.msra.mxu0 0.0
    %1779 = vmatprep.subr.mxu0 0.0
    %1780 = vmatpush2.msra.mxu0 0.0
    %1781 = vmatprep.subr.mxu0 0.0
    %1782 = vmatpush2.msra.mxu0 0.0
    %1783 = vmatprep.mubr.f32.mxu0 0.0
    %1784 = vmatmul.mubr.f32.gmra.mxu0 %v1629
    %v1785 = vpop.f32.mrf.mxu0
    %v1786 = vadd.f32 %v1718, %v1785
    %v1787 = vpop.f32.mrf.mxu0
    %1788 = vmatprep.mubr.f32.mxu0 0.0
    %1789 = vmatmul.mubr.f32.gmra.mxu0 %v1632
    %v1790 = vpop.f32.mrf.mxu0
    %v1791 = vadd.f32 %v1718, %v1790
    %v1792 = vpop.f32.mrf.mxu0
    %1793 = vdwg.mxu0
    %s1794 = scalar_lea.vmem %s6, 320
    %v1795 = vld [vmem:[%s1794] sm:$0xff]
    %v1796 = vld [vmem:[%s1794 + $0x8] sm:$0xff]
    %v1797 = vld [vmem:[%s1794 + $0x10] sm:$0xff]
    %v1798 = vld [vmem:[%s1794 + $0x18] sm:$0xff]
    %v1799 = vld [vmem:[%s7 + $0xa] sm:$0x1]
    %v1800 = vlaneseq
    %v1801 = vshrl.u32 %v1800, 7
    %v1802 = vsub.s32 0, %v1801
    %v1803 = vrot.slane %v1799, %v1802
    %1804 = vmatprep.subr.mxu0 0.0
    %1805 = vmatpush1.msra.mxu0 0.0
    %1806 = vmatprep.subr.mxu0 0.0
    %1807 = vmatpush1.msra.mxu0 0.0
    %1808 = vmatprep.subr.mxu0 0.0
    %1809 = vmatpush1.msra.mxu0 0.0
    %1810 = vmatprep.subr.mxu0 0.0
    %1811 = vmatpush1.msra.mxu0 0.0
    %1812 = vmatprep.subr.mxu0 0.0
    %1813 = vmatpush1.msra.mxu0 0.0
    %1814 = vmatprep.subr.mxu0 0.0
    %1815 = vmatpush1.msra.mxu0 0.0
    %1816 = vmatprep.subr.mxu0 0.0
    %1817 = vmatpush1.msra.mxu0 0.0
    %1818 = vmatprep.subr.mxu0 0.0
    %1819 = vmatpush1.msra.mxu0 0.0
    %1820 = vmatprep.subr.mxu0 0.0
    %1821 = vmatpush1.msra.mxu0 0.0
    %1822 = vmatprep.subr.mxu0 0.0
    %1823 = vmatpush1.msra.mxu0 0.0
    %1824 = vmatprep.subr.mxu0 0.0
    %1825 = vmatpush1.msra.mxu0 0.0
    %1826 = vmatprep.subr.mxu0 0.0
    %1827 = vmatpush1.msra.mxu0 0.0
    %1828 = vmatprep.subr.mxu0 0.0
    %1829 = vmatpush1.msra.mxu0 %v1798
    %1830 = vmatprep.subr.mxu0 0.0
    %1831 = vmatpush1.msra.mxu0 %v1797
    %1832 = vmatprep.subr.mxu0 0.0
    %1833 = vmatpush1.msra.mxu0 %v1796
    %1834 = vmatprep.subr.mxu0 0.0
    %1835 = vmatpush1.msra.mxu0 %v1795
    %1836 = vmatprep.subr.mxu0 0.0
    %1837 = vmatpush2.msra.mxu0 0.0
    %1838 = vmatprep.subr.mxu0 0.0
    %1839 = vmatpush2.msra.mxu0 0.0
    %1840 = vmatprep.subr.mxu0 0.0
    %1841 = vmatpush2.msra.mxu0 0.0
    %1842 = vmatprep.subr.mxu0 0.0
    %1843 = vmatpush2.msra.mxu0 0.0
    %1844 = vmatprep.subr.mxu0 0.0
    %1845 = vmatpush2.msra.mxu0 0.0
    %1846 = vmatprep.subr.mxu0 0.0
    %1847 = vmatpush2.msra.mxu0 0.0
    %1848 = vmatprep.subr.mxu0 0.0
    %1849 = vmatpush2.msra.mxu0 0.0
    %1850 = vmatprep.subr.mxu0 0.0
    %1851 = vmatpush2.msra.mxu0 0.0
    %1852 = vmatprep.subr.mxu0 0.0
    %1853 = vmatpush2.msra.mxu0 0.0
    %1854 = vmatprep.subr.mxu0 0.0
    %1855 = vmatpush2.msra.mxu0 0.0
    %1856 = vmatprep.subr.mxu0 0.0
    %1857 = vmatpush2.msra.mxu0 0.0
    %1858 = vmatprep.subr.mxu0 0.0
    %1859 = vmatpush2.msra.mxu0 0.0
    %1860 = vmatprep.subr.mxu0 0.0
    %1861 = vmatpush2.msra.mxu0 0.0
    %1862 = vmatprep.subr.mxu0 0.0
    %1863 = vmatpush2.msra.mxu0 0.0
    %1864 = vmatprep.subr.mxu0 0.0
    %1865 = vmatpush2.msra.mxu0 0.0
    %1866 = vmatprep.subr.mxu0 0.0
    %1867 = vmatpush2.msra.mxu0 0.0
    %1868 = vmatprep.mubr.f32.mxu0 0.0
    %1869 = vmatmul.mubr.f32.gmra.mxu0 %v1629
    %v1870 = vpop.f32.mrf.mxu0
    %v1871 = vadd.f32 %v1803, %v1870
    %v1872 = vpop.f32.mrf.mxu0
    %1873 = vmatprep.mubr.f32.mxu0 0.0
    %1874 = vmatmul.mubr.f32.gmra.mxu0 %v1632
    %v1875 = vpop.f32.mrf.mxu0
    %v1876 = vadd.f32 %v1803, %v1875
    %v1877 = vpop.f32.mrf.mxu0
    %1878 = vdwg.mxu0
    %v1880 = vsel %vm505, %v1701, 0
    %v1883 = vsel %vm505, %v1706, 0
    %v1886 = vsel %vm505, %v1786, 0
    %v1889 = vsel %vm505, %v1791, 0
    %1891 = vmatprep.subr.mxu0 0.0
    %1892 = vmatpush1.xpose.msra.mxu0 0.0
    %1893 = vmatprep.subr.mxu0 0.0
    %1894 = vmatpush1.xpose.msra.mxu0 0.0
    %1895 = vmatprep.subr.mxu0 0.0
    %1896 = vmatpush1.xpose.msra.mxu0 0.0
    %1897 = vmatprep.subr.mxu0 0.0
    %1898 = vmatpush1.xpose.msra.mxu0 0.0
    %1899 = vmatprep.subr.mxu0 0.0
    %1900 = vmatpush1.xpose.msra.mxu0 0.0
    %1901 = vmatprep.subr.mxu0 0.0
    %1902 = vmatpush1.xpose.msra.mxu0 0.0
    %1903 = vmatprep.subr.mxu0 0.0
    %1904 = vmatpush1.xpose.msra.mxu0 0.0
    %1905 = vmatprep.subr.mxu0 0.0
    %1906 = vmatpush1.xpose.msra.mxu0 0.0
    %1907 = vmatprep.subr.mxu0 0.0
    %1908 = vmatpush1.xpose.msra.mxu0 0.0
    %1909 = vmatprep.subr.mxu0 0.0
    %1910 = vmatpush1.xpose.msra.mxu0 0.0
    %1911 = vmatprep.subr.mxu0 0.0
    %1912 = vmatpush1.xpose.msra.mxu0 0.0
    %1913 = vmatprep.subr.mxu0 0.0
    %1914 = vmatpush1.xpose.msra.mxu0 0.0
    %1915 = vmatprep.subr.mxu0 0.0
    %1916 = vmatpush1.xpose.msra.mxu0 0.0
    %1917 = vmatprep.subr.mxu0 0.0
    %1918 = vmatpush1.xpose.msra.mxu0 0.0
    %1919 = vmatprep.subr.mxu0 0.0
    %1920 = vmatpush1.xpose.msra.mxu0 %v1889
    %1921 = vmatprep.subr.mxu0 0.0
    %1922 = vmatpush1.xpose.msra.mxu0 %v1886
    %1923 = vmatprep.subr.mxu0 0.0
    %1924 = vmatpush2.xpose.msra.mxu0 0.0
    %1925 = vmatprep.subr.mxu0 0.0
    %1926 = vmatpush2.xpose.msra.mxu0 0.0
    %1927 = vmatprep.subr.mxu0 0.0
    %1928 = vmatpush2.xpose.msra.mxu0 0.0
    %1929 = vmatprep.subr.mxu0 0.0
    %1930 = vmatpush2.xpose.msra.mxu0 0.0
    %1931 = vmatprep.subr.mxu0 0.0
    %1932 = vmatpush2.xpose.msra.mxu0 0.0
    %1933 = vmatprep.subr.mxu0 0.0
    %1934 = vmatpush2.xpose.msra.mxu0 0.0
    %1935 = vmatprep.subr.mxu0 0.0
    %1936 = vmatpush2.xpose.msra.mxu0 0.0
    %1937 = vmatprep.subr.mxu0 0.0
    %1938 = vmatpush2.xpose.msra.mxu0 0.0
    %1939 = vmatprep.subr.mxu0 0.0
    %1940 = vmatpush2.xpose.msra.mxu0 0.0
    %1941 = vmatprep.subr.mxu0 0.0
    %1942 = vmatpush2.xpose.msra.mxu0 0.0
    %1943 = vmatprep.subr.mxu0 0.0
    %1944 = vmatpush2.xpose.msra.mxu0 0.0
    %1945 = vmatprep.subr.mxu0 0.0
    %1946 = vmatpush2.xpose.msra.mxu0 0.0
    %1947 = vmatprep.subr.mxu0 0.0
    %1948 = vmatpush2.xpose.msra.mxu0 0.0
    %1949 = vmatprep.subr.mxu0 0.0
    %1950 = vmatpush2.xpose.msra.mxu0 0.0
    %1951 = vmatprep.subr.mxu0 0.0
    %1952 = vmatpush2.xpose.msra.mxu0 0.0
    %1953 = vmatprep.subr.mxu0 0.0
    %1954 = vmatpush2.xpose.msra.mxu0 0.0
    %1955 = vmatprep.mubr.f32.mxu0 0.0
    %1956 = vmatmul.mubr.f32.gmra.mxu0 %v1880
    %v1957 = vpop.f32.mrf.mxu0
    %v1958 = vadd.f32 0.0, %v1957
    %v1959 = vpop.f32.mrf.mxu0
    %1960 = vmatprep.mubr.f32.mxu0 0.0
    %1961 = vmatmul.mubr.f32.gmra.mxu0 %v1883
    %v1962 = vpop.f32.mrf.mxu0
    %v1963 = vadd.f32 0.0, %v1962
    %v1964 = vpop.f32.mrf.mxu0
    %1965 = vdwg.mxu0
    %v1966 = vmul.f32 %v1958, 0.25
    %v1967 = vmul.f32 %v1963, 0.25
    %v1968 = vadd.f32 %v1966, %v203
    %v1969 = vadd.f32 %v1967, %v204
    %v1970 = vsel %vm597, %v1968, -inf
    %1971 = vmax.xlane.f32.xlu0 %v1970
    %v1972 = vpop.xlane.xlu0 %1971
    %v1973 = vsel %vm601, %v1969, -inf
    %1974 = vmax.xlane.f32.xlu0 %v1973
    %v1975 = vpop.xlane.xlu0 %1974
    %v1976 = vsub.f32 %v1968, %v1972
    %v1977 = vsub.f32 %v1969, %v1975
    %v1978 = vmul.f32 %v1976, 1.442695
    %v1979 = vpow.pop %v1978
    %v1980 = vmul.f32 %v1977, 1.442695
    %v1981 = vpow.pop %v1980
    %v1982 = vsel %vm597, %v1979, 0.0
    %1983 = vadd.xlane.f32.xlu0 %v1982
    %v1984 = vpop.xlane.xlu0 %1983
    %v1985 = vsel %vm601, %v1981, 0.0
    %1986 = vadd.xlane.f32.xlu0 %v1985
    %v1987 = vpop.xlane.xlu0 %1986
    %v1988 = vrcp.pop %v1984
    %v1989 = vrcp.pop %v1987
    %v1990 = vmul.f32 %v1979, %v1988
    %v1991 = vmul.f32 %v1981, %v1989
    %v1993 = vsel %vm597, %v1990, 0
    %v1996 = vsel %vm597, %v1991, 0
    %v1999 = vsel %vm627, %v1876, 0
    %2001 = vmatprep.subr.mxu0 0.0
    %2002 = vmatpush1.msra.mxu0 0.0
    %2003 = vmatprep.subr.mxu0 0.0
    %2004 = vmatpush1.msra.mxu0 0.0
    %2005 = vmatprep.subr.mxu0 0.0
    %2006 = vmatpush1.msra.mxu0 0.0
    %2007 = vmatprep.subr.mxu0 0.0
    %2008 = vmatpush1.msra.mxu0 0.0
    %2009 = vmatprep.subr.mxu0 0.0
    %2010 = vmatpush1.msra.mxu0 0.0
    %2011 = vmatprep.subr.mxu0 0.0
    %2012 = vmatpush1.msra.mxu0 0.0
    %2013 = vmatprep.subr.mxu0 0.0
    %2014 = vmatpush1.msra.mxu0 0.0
    %2015 = vmatprep.subr.mxu0 0.0
    %2016 = vmatpush1.msra.mxu0 0.0
    %2017 = vmatprep.subr.mxu0 0.0
    %2018 = vmatpush1.msra.mxu0 0.0
    %2019 = vmatprep.subr.mxu0 0.0
    %2020 = vmatpush1.msra.mxu0 0.0
    %2021 = vmatprep.subr.mxu0 0.0
    %2022 = vmatpush1.msra.mxu0 0.0
    %2023 = vmatprep.subr.mxu0 0.0
    %2024 = vmatpush1.msra.mxu0 0.0
    %2025 = vmatprep.subr.mxu0 0.0
    %2026 = vmatpush1.msra.mxu0 0.0
    %2027 = vmatprep.subr.mxu0 0.0
    %2028 = vmatpush1.msra.mxu0 0.0
    %2029 = vmatprep.subr.mxu0 0.0
    %2030 = vmatpush1.msra.mxu0 %v1999
    %2031 = vmatprep.subr.mxu0 0.0
    %2032 = vmatpush1.msra.mxu0 %v1871
    %2033 = vmatprep.subr.mxu0 0.0
    %2034 = vmatpush2.msra.mxu0 0.0
    %2035 = vmatprep.subr.mxu0 0.0
    %2036 = vmatpush2.msra.mxu0 0.0
    %2037 = vmatprep.subr.mxu0 0.0
    %2038 = vmatpush2.msra.mxu0 0.0
    %2039 = vmatprep.subr.mxu0 0.0
    %2040 = vmatpush2.msra.mxu0 0.0
    %2041 = vmatprep.subr.mxu0 0.0
    %2042 = vmatpush2.msra.mxu0 0.0
    %2043 = vmatprep.subr.mxu0 0.0
    %2044 = vmatpush2.msra.mxu0 0.0
    %2045 = vmatprep.subr.mxu0 0.0
    %2046 = vmatpush2.msra.mxu0 0.0
    %2047 = vmatprep.subr.mxu0 0.0
    %2048 = vmatpush2.msra.mxu0 0.0
    %2049 = vmatprep.subr.mxu0 0.0
    %2050 = vmatpush2.msra.mxu0 0.0
    %2051 = vmatprep.subr.mxu0 0.0
    %2052 = vmatpush2.msra.mxu0 0.0
    %2053 = vmatprep.subr.mxu0 0.0
    %2054 = vmatpush2.msra.mxu0 0.0
    %2055 = vmatprep.subr.mxu0 0.0
    %2056 = vmatpush2.msra.mxu0 0.0
    %2057 = vmatprep.subr.mxu0 0.0
    %2058 = vmatpush2.msra.mxu0 0.0
    %2059 = vmatprep.subr.mxu0 0.0
    %2060 = vmatpush2.msra.mxu0 0.0
    %2061 = vmatprep.subr.mxu0 0.0
    %2062 = vmatpush2.msra.mxu0 0.0
    %2063 = vmatprep.subr.mxu0 0.0
    %2064 = vmatpush2.msra.mxu0 0.0
    %2065 = vmatprep.mubr.f32.mxu0 0.0
    %2066 = vmatmul.mubr.f32.gmra.mxu0 %v1993
    %v2067 = vpop.f32.mrf.mxu0
    %v2068 = vadd.f32 0.0, %v2067
    %v2069 = vpop.f32.mrf.mxu0
    %2070 = vmatprep.mubr.f32.mxu0 0.0
    %2071 = vmatmul.mubr.f32.gmra.mxu0 %v1996
    %v2072 = vpop.f32.mrf.mxu0
    %v2073 = vadd.f32 0.0, %v2072
    %v2074 = vpop.f32.mrf.mxu0
    %2075 = vdwg.mxu0
    %s2076 = scalar_lea.vmem %s8, 32
    %v2077 = vld [vmem:[%s2076] sm:$0xff]
    %v2078 = vld [vmem:[%s2076 + $0x8] sm:$0xff]
    %s2079 = scalar_lea.vmem %s6, 224
    %v2080 = vld [vmem:[%s2079] sm:$0xff]
    %v2081 = vld [vmem:[%s2079 + $0x8] sm:$0xff]
    %v2082 = vld [vmem:[%s2079 + $0x10] sm:$0xff]
    %v2083 = vld [vmem:[%s2079 + $0x18] sm:$0xff]
    %v2084 = vld [vmem:[%s7 + $0x7] sm:$0x1]
    %v2085 = vlaneseq
    %v2086 = vshrl.u32 %v2085, 7
    %v2087 = vsub.s32 0, %v2086
    %v2088 = vrot.slane %v2084, %v2087
    %2089 = vmatprep.subr.mxu0 0.0
    %2090 = vmatpush1.msra.mxu0 0.0
    %2091 = vmatprep.subr.mxu0 0.0
    %2092 = vmatpush1.msra.mxu0 0.0
    %2093 = vmatprep.subr.mxu0 0.0
    %2094 = vmatpush1.msra.mxu0 0.0
    %2095 = vmatprep.subr.mxu0 0.0
    %2096 = vmatpush1.msra.mxu0 0.0
    %2097 = vmatprep.subr.mxu0 0.0
    %2098 = vmatpush1.msra.mxu0 0.0
    %2099 = vmatprep.subr.mxu0 0.0
    %2100 = vmatpush1.msra.mxu0 0.0
    %2101 = vmatprep.subr.mxu0 0.0
    %2102 = vmatpush1.msra.mxu0 0.0
    %2103 = vmatprep.subr.mxu0 0.0
    %2104 = vmatpush1.msra.mxu0 0.0
    %2105 = vmatprep.subr.mxu0 0.0
    %2106 = vmatpush1.msra.mxu0 0.0
    %2107 = vmatprep.subr.mxu0 0.0
    %2108 = vmatpush1.msra.mxu0 0.0
    %2109 = vmatprep.subr.mxu0 0.0
    %2110 = vmatpush1.msra.mxu0 0.0
    %2111 = vmatprep.subr.mxu0 0.0
    %2112 = vmatpush1.msra.mxu0 0.0
    %2113 = vmatprep.subr.mxu0 0.0
    %2114 = vmatpush1.msra.mxu0 %v2083
    %2115 = vmatprep.subr.mxu0 0.0
    %2116 = vmatpush1.msra.mxu0 %v2082
    %2117 = vmatprep.subr.mxu0 0.0
    %2118 = vmatpush1.msra.mxu0 %v2081
    %2119 = vmatprep.subr.mxu0 0.0
    %2120 = vmatpush1.msra.mxu0 %v2080
    %2121 = vmatprep.subr.mxu0 0.0
    %2122 = vmatpush2.msra.mxu0 0.0
    %2123 = vmatprep.subr.mxu0 0.0
    %2124 = vmatpush2.msra.mxu0 0.0
    %2125 = vmatprep.subr.mxu0 0.0
    %2126 = vmatpush2.msra.mxu0 0.0
    %2127 = vmatprep.subr.mxu0 0.0
    %2128 = vmatpush2.msra.mxu0 0.0
    %2129 = vmatprep.subr.mxu0 0.0
    %2130 = vmatpush2.msra.mxu0 0.0
    %2131 = vmatprep.subr.mxu0 0.0
    %2132 = vmatpush2.msra.mxu0 0.0
    %2133 = vmatprep.subr.mxu0 0.0
    %2134 = vmatpush2.msra.mxu0 0.0
    %2135 = vmatprep.subr.mxu0 0.0
    %2136 = vmatpush2.msra.mxu0 0.0
    %2137 = vmatprep.subr.mxu0 0.0
    %2138 = vmatpush2.msra.mxu0 0.0
    %2139 = vmatprep.subr.mxu0 0.0
    %2140 = vmatpush2.msra.mxu0 0.0
    %2141 = vmatprep.subr.mxu0 0.0
    %2142 = vmatpush2.msra.mxu0 0.0
    %2143 = vmatprep.subr.mxu0 0.0
    %2144 = vmatpush2.msra.mxu0 0.0
    %2145 = vmatprep.subr.mxu0 0.0
    %2146 = vmatpush2.msra.mxu0 0.0
    %2147 = vmatprep.subr.mxu0 0.0
    %2148 = vmatpush2.msra.mxu0 0.0
    %2149 = vmatprep.subr.mxu0 0.0
    %2150 = vmatpush2.msra.mxu0 0.0
    %2151 = vmatprep.subr.mxu0 0.0
    %2152 = vmatpush2.msra.mxu0 0.0
    %2153 = vmatprep.mubr.f32.mxu0 0.0
    %2154 = vmatmul.mubr.f32.gmra.mxu0 %v1629
    %v2155 = vpop.f32.mrf.mxu0
    %v2156 = vadd.f32 %v2088, %v2155
    %v2157 = vpop.f32.mrf.mxu0
    %2158 = vmatprep.mubr.f32.mxu0 0.0
    %2159 = vmatmul.mubr.f32.gmra.mxu0 %v1632
    %v2160 = vpop.f32.mrf.mxu0
    %v2161 = vadd.f32 %v2088, %v2160
    %v2162 = vpop.f32.mrf.mxu0
    %2163 = vdwg.mxu0
    %s2164 = scalar_lea.vmem %s6, 288
    %v2165 = vld [vmem:[%s2164] sm:$0xff]
    %v2166 = vld [vmem:[%s2164 + $0x8] sm:$0xff]
    %v2167 = vld [vmem:[%s2164 + $0x10] sm:$0xff]
    %v2168 = vld [vmem:[%s2164 + $0x18] sm:$0xff]
    %v2169 = vld [vmem:[%s7 + $0x9] sm:$0x1]
    %v2170 = vlaneseq
    %v2171 = vshrl.u32 %v2170, 7
    %v2172 = vsub.s32 0, %v2171
    %v2173 = vrot.slane %v2169, %v2172
    %2174 = vmatprep.subr.mxu0 0.0
    %2175 = vmatpush1.msra.mxu0 0.0
    %2176 = vmatprep.subr.mxu0 0.0
    %2177 = vmatpush1.msra.mxu0 0.0
    %2178 = vmatprep.subr.mxu0 0.0
    %2179 = vmatpush1.msra.mxu0 0.0
    %2180 = vmatprep.subr.mxu0 0.0
    %2181 = vmatpush1.msra.mxu0 0.0
    %2182 = vmatprep.subr.mxu0 0.0
    %2183 = vmatpush1.msra.mxu0 0.0
    %2184 = vmatprep.subr.mxu0 0.0
    %2185 = vmatpush1.msra.mxu0 0.0
    %2186 = vmatprep.subr.mxu0 0.0
    %2187 = vmatpush1.msra.mxu0 0.0
    %2188 = vmatprep.subr.mxu0 0.0
    %2189 = vmatpush1.msra.mxu0 0.0
    %2190 = vmatprep.subr.mxu0 0.0
    %2191 = vmatpush1.msra.mxu0 0.0
    %2192 = vmatprep.subr.mxu0 0.0
    %2193 = vmatpush1.msra.mxu0 0.0
    %2194 = vmatprep.subr.mxu0 0.0
    %2195 = vmatpush1.msra.mxu0 0.0
    %2196 = vmatprep.subr.mxu0 0.0
    %2197 = vmatpush1.msra.mxu0 0.0
    %2198 = vmatprep.subr.mxu0 0.0
    %2199 = vmatpush1.msra.mxu0 %v2168
    %2200 = vmatprep.subr.mxu0 0.0
    %2201 = vmatpush1.msra.mxu0 %v2167
    %2202 = vmatprep.subr.mxu0 0.0
    %2203 = vmatpush1.msra.mxu0 %v2166
    %2204 = vmatprep.subr.mxu0 0.0
    %2205 = vmatpush1.msra.mxu0 %v2165
    %2206 = vmatprep.subr.mxu0 0.0
    %2207 = vmatpush2.msra.mxu0 0.0
    %2208 = vmatprep.subr.mxu0 0.0
    %2209 = vmatpush2.msra.mxu0 0.0
    %2210 = vmatprep.subr.mxu0 0.0
    %2211 = vmatpush2.msra.mxu0 0.0
    %2212 = vmatprep.subr.mxu0 0.0
    %2213 = vmatpush2.msra.mxu0 0.0
    %2214 = vmatprep.subr.mxu0 0.0
    %2215 = vmatpush2.msra.mxu0 0.0
    %2216 = vmatprep.subr.mxu0 0.0
    %2217 = vmatpush2.msra.mxu0 0.0
    %2218 = vmatprep.subr.mxu0 0.0
    %2219 = vmatpush2.msra.mxu0 0.0
    %2220 = vmatprep.subr.mxu0 0.0
    %2221 = vmatpush2.msra.mxu0 0.0
    %2222 = vmatprep.subr.mxu0 0.0
    %2223 = vmatpush2.msra.mxu0 0.0
    %2224 = vmatprep.subr.mxu0 0.0
    %2225 = vmatpush2.msra.mxu0 0.0
    %2226 = vmatprep.subr.mxu0 0.0
    %2227 = vmatpush2.msra.mxu0 0.0
    %2228 = vmatprep.subr.mxu0 0.0
    %2229 = vmatpush2.msra.mxu0 0.0
    %2230 = vmatprep.subr.mxu0 0.0
    %2231 = vmatpush2.msra.mxu0 0.0
    %2232 = vmatprep.subr.mxu0 0.0
    %2233 = vmatpush2.msra.mxu0 0.0
    %2234 = vmatprep.subr.mxu0 0.0
    %2235 = vmatpush2.msra.mxu0 0.0
    %2236 = vmatprep.subr.mxu0 0.0
    %2237 = vmatpush2.msra.mxu0 0.0
    %2238 = vmatprep.mubr.f32.mxu0 0.0
    %2239 = vmatmul.mubr.f32.gmra.mxu0 %v1629
    %v2240 = vpop.f32.mrf.mxu0
    %v2241 = vadd.f32 %v2173, %v2240
    %v2242 = vpop.f32.mrf.mxu0
    %2243 = vmatprep.mubr.f32.mxu0 0.0
    %2244 = vmatmul.mubr.f32.gmra.mxu0 %v1632
    %v2245 = vpop.f32.mrf.mxu0
    %v2246 = vadd.f32 %v2173, %v2245
    %v2247 = vpop.f32.mrf.mxu0
    %2248 = vdwg.mxu0
    %s2249 = scalar_lea.vmem %s6, 352
    %v2250 = vld [vmem:[%s2249] sm:$0xff]
    %v2251 = vld [vmem:[%s2249 + $0x8] sm:$0xff]
    %v2252 = vld [vmem:[%s2249 + $0x10] sm:$0xff]
    %v2253 = vld [vmem:[%s2249 + $0x18] sm:$0xff]
    %v2254 = vld [vmem:[%s7 + $0xb] sm:$0x1]
    %v2255 = vlaneseq
    %v2256 = vshrl.u32 %v2255, 7
    %v2257 = vsub.s32 0, %v2256
    %v2258 = vrot.slane %v2254, %v2257
    %2259 = vmatprep.subr.mxu0 0.0
    %2260 = vmatpush1.msra.mxu0 0.0
    %2261 = vmatprep.subr.mxu0 0.0
    %2262 = vmatpush1.msra.mxu0 0.0
    %2263 = vmatprep.subr.mxu0 0.0
    %2264 = vmatpush1.msra.mxu0 0.0
    %2265 = vmatprep.subr.mxu0 0.0
    %2266 = vmatpush1.msra.mxu0 0.0
    %2267 = vmatprep.subr.mxu0 0.0
    %2268 = vmatpush1.msra.mxu0 0.0
    %2269 = vmatprep.subr.mxu0 0.0
    %2270 = vmatpush1.msra.mxu0 0.0
    %2271 = vmatprep.subr.mxu0 0.0
    %2272 = vmatpush1.msra.mxu0 0.0
    %2273 = vmatprep.subr.mxu0 0.0
    %2274 = vmatpush1.msra.mxu0 0.0
    %2275 = vmatprep.subr.mxu0 0.0
    %2276 = vmatpush1.msra.mxu0 0.0
    %2277 = vmatprep.subr.mxu0 0.0
    %2278 = vmatpush1.msra.mxu0 0.0
    %2279 = vmatprep.subr.mxu0 0.0
    %2280 = vmatpush1.msra.mxu0 0.0
    %2281 = vmatprep.subr.mxu0 0.0
    %2282 = vmatpush1.msra.mxu0 0.0
    %2283 = vmatprep.subr.mxu0 0.0
    %2284 = vmatpush1.msra.mxu0 %v2253
    %2285 = vmatprep.subr.mxu0 0.0
    %2286 = vmatpush1.msra.mxu0 %v2252
    %2287 = vmatprep.subr.mxu0 0.0
    %2288 = vmatpush1.msra.mxu0 %v2251
    %2289 = vmatprep.subr.mxu0 0.0
    %2290 = vmatpush1.msra.mxu0 %v2250
    %2291 = vmatprep.subr.mxu0 0.0
    %2292 = vmatpush2.msra.mxu0 0.0
    %2293 = vmatprep.subr.mxu0 0.0
    %2294 = vmatpush2.msra.mxu0 0.0
    %2295 = vmatprep.subr.mxu0 0.0
    %2296 = vmatpush2.msra.mxu0 0.0
    %2297 = vmatprep.subr.mxu0 0.0
    %2298 = vmatpush2.msra.mxu0 0.0
    %2299 = vmatprep.subr.mxu0 0.0
    %2300 = vmatpush2.msra.mxu0 0.0
    %2301 = vmatprep.subr.mxu0 0.0
    %2302 = vmatpush2.msra.mxu0 0.0
    %2303 = vmatprep.subr.mxu0 0.0
    %2304 = vmatpush2.msra.mxu0 0.0
    %2305 = vmatprep.subr.mxu0 0.0
    %2306 = vmatpush2.msra.mxu0 0.0
    %2307 = vmatprep.subr.mxu0 0.0
    %2308 = vmatpush2.msra.mxu0 0.0
    %2309 = vmatprep.subr.mxu0 0.0
    %2310 = vmatpush2.msra.mxu0 0.0
    %2311 = vmatprep.subr.mxu0 0.0
    %2312 = vmatpush2.msra.mxu0 0.0
    %2313 = vmatprep.subr.mxu0 0.0
    %2314 = vmatpush2.msra.mxu0 0.0
    %2315 = vmatprep.subr.mxu0 0.0
    %2316 = vmatpush2.msra.mxu0 0.0
    %2317 = vmatprep.subr.mxu0 0.0
    %2318 = vmatpush2.msra.mxu0 0.0
    %2319 = vmatprep.subr.mxu0 0.0
    %2320 = vmatpush2.msra.mxu0 0.0
    %2321 = vmatprep.subr.mxu0 0.0
    %2322 = vmatpush2.msra.mxu0 0.0
    %2323 = vmatprep.mubr.f32.mxu0 0.0
    %2324 = vmatmul.mubr.f32.gmra.mxu0 %v1629
    %v2325 = vpop.f32.mrf.mxu0
    %v2326 = vadd.f32 %v2258, %v2325
    %v2327 = vpop.f32.mrf.mxu0
    %2328 = vmatprep.mubr.f32.mxu0 0.0
    %2329 = vmatmul.mubr.f32.gmra.mxu0 %v1632
    %v2330 = vpop.f32.mrf.mxu0
    %v2331 = vadd.f32 %v2258, %v2330
    %v2332 = vpop.f32.mrf.mxu0
    %2333 = vdwg.mxu0
    %v2335 = vsel %vm505, %v2156, 0
    %v2338 = vsel %vm505, %v2161, 0
    %v2341 = vsel %vm505, %v2241, 0
    %v2344 = vsel %vm505, %v2246, 0
    %2346 = vmatprep.subr.mxu0 0.0
    %2347 = vmatpush1.xpose.msra.mxu0 0.0
    %2348 = vmatprep.subr.mxu0 0.0
    %2349 = vmatpush1.xpose.msra.mxu0 0.0
    %2350 = vmatprep.subr.mxu0 0.0
    %2351 = vmatpush1.xpose.msra.mxu0 0.0
    %2352 = vmatprep.subr.mxu0 0.0
    %2353 = vmatpush1.xpose.msra.mxu0 0.0
    %2354 = vmatprep.subr.mxu0 0.0
    %2355 = vmatpush1.xpose.msra.mxu0 0.0
    %2356 = vmatprep.subr.mxu0 0.0
    %2357 = vmatpush1.xpose.msra.mxu0 0.0
    %2358 = vmatprep.subr.mxu0 0.0
    %2359 = vmatpush1.xpose.msra.mxu0 0.0
    %2360 = vmatprep.subr.mxu0 0.0
    %2361 = vmatpush1.xpose.msra.mxu0 0.0
    %2362 = vmatprep.subr.mxu0 0.0
    %2363 = vmatpush1.xpose.msra.mxu0 0.0
    %2364 = vmatprep.subr.mxu0 0.0
    %2365 = vmatpush1.xpose.msra.mxu0 0.0
    %2366 = vmatprep.subr.mxu0 0.0
    %2367 = vmatpush1.xpose.msra.mxu0 0.0
    %2368 = vmatprep.subr.mxu0 0.0
    %2369 = vmatpush1.xpose.msra.mxu0 0.0
    %2370 = vmatprep.subr.mxu0 0.0
    %2371 = vmatpush1.xpose.msra.mxu0 0.0
    %2372 = vmatprep.subr.mxu0 0.0
    %2373 = vmatpush1.xpose.msra.mxu0 0.0
    %2374 = vmatprep.subr.mxu0 0.0
    %2375 = vmatpush1.xpose.msra.mxu0 %v2344
    %2376 = vmatprep.subr.mxu0 0.0
    %2377 = vmatpush1.xpose.msra.mxu0 %v2341
    %2378 = vmatprep.subr.mxu0 0.0
    %2379 = vmatpush2.xpose.msra.mxu0 0.0
    %2380 = vmatprep.subr.mxu0 0.0
    %2381 = vmatpush2.xpose.msra.mxu0 0.0
    %2382 = vmatprep.subr.mxu0 0.0
    %2383 = vmatpush2.xpose.msra.mxu0 0.0
    %2384 = vmatprep.subr.mxu0 0.0
    %2385 = vmatpush2.xpose.msra.mxu0 0.0
    %2386 = vmatprep.subr.mxu0 0.0
    %2387 = vmatpush2.xpose.msra.mxu0 0.0
    %2388 = vmatprep.subr.mxu0 0.0
    %2389 = vmatpush2.xpose.msra.mxu0 0.0
    %2390 = vmatprep.subr.mxu0 0.0
    %2391 = vmatpush2.xpose.msra.mxu0 0.0
    %2392 = vmatprep.subr.mxu0 0.0
    %2393 = vmatpush2.xpose.msra.mxu0 0.0
    %2394 = vmatprep.subr.mxu0 0.0
    %2395 = vmatpush2.xpose.msra.mxu0 0.0
    %2396 = vmatprep.subr.mxu0 0.0
    %2397 = vmatpush2.xpose.msra.mxu0 0.0
    %2398 = vmatprep.subr.mxu0 0.0
    %2399 = vmatpush2.xpose.msra.mxu0 0.0
    %2400 = vmatprep.subr.mxu0 0.0
    %2401 = vmatpush2.xpose.msra.mxu0 0.0
    %2402 = vmatprep.subr.mxu0 0.0
    %2403 = vmatpush2.xpose.msra.mxu0 0.0
    %2404 = vmatprep.subr.mxu0 0.0
    %2405 = vmatpush2.xpose.msra.mxu0 0.0
    %2406 = vmatprep.subr.mxu0 0.0
    %2407 = vmatpush2.xpose.msra.mxu0 0.0
    %2408 = vmatprep.subr.mxu0 0.0
    %2409 = vmatpush2.xpose.msra.mxu0 0.0
    %2410 = vmatprep.mubr.f32.mxu0 0.0
    %2411 = vmatmul.mubr.f32.gmra.mxu0 %v2335
    %v2412 = vpop.f32.mrf.mxu0
    %v2413 = vadd.f32 0.0, %v2412
    %v2414 = vpop.f32.mrf.mxu0
    %2415 = vmatprep.mubr.f32.mxu0 0.0
    %2416 = vmatmul.mubr.f32.gmra.mxu0 %v2338
    %v2417 = vpop.f32.mrf.mxu0
    %v2418 = vadd.f32 0.0, %v2417
    %v2419 = vpop.f32.mrf.mxu0
    %2420 = vdwg.mxu0
    %v2421 = vmul.f32 %v2413, 0.25
    %v2422 = vmul.f32 %v2418, 0.25
    %v2423 = vadd.f32 %v2421, %v203
    %v2424 = vadd.f32 %v2422, %v204
    %v2425 = vsel %vm597, %v2423, -inf
    %2426 = vmax.xlane.f32.xlu0 %v2425
    %v2427 = vpop.xlane.xlu0 %2426
    %v2428 = vsel %vm601, %v2424, -inf
    %2429 = vmax.xlane.f32.xlu0 %v2428
    %v2430 = vpop.xlane.xlu0 %2429
    %v2431 = vsub.f32 %v2423, %v2427
    %v2432 = vsub.f32 %v2424, %v2430
    %v2433 = vmul.f32 %v2431, 1.442695
    %v2434 = vpow.pop %v2433
    %v2435 = vmul.f32 %v2432, 1.442695
    %v2436 = vpow.pop %v2435
    %v2437 = vsel %vm597, %v2434, 0.0
    %2438 = vadd.xlane.f32.xlu0 %v2437
    %v2439 = vpop.xlane.xlu0 %2438
    %v2440 = vsel %vm601, %v2436, 0.0
    %2441 = vadd.xlane.f32.xlu0 %v2440
    %v2442 = vpop.xlane.xlu0 %2441
    %v2443 = vrcp.pop %v2439
    %v2444 = vrcp.pop %v2442
    %v2445 = vmul.f32 %v2434, %v2443
    %v2446 = vmul.f32 %v2436, %v2444
    %v2448 = vsel %vm597, %v2445, 0
    %v2451 = vsel %vm597, %v2446, 0
    %v2454 = vsel %vm627, %v2331, 0
    %2456 = vmatprep.subr.mxu0 0.0
    %2457 = vmatpush1.msra.mxu0 0.0
    %2458 = vmatprep.subr.mxu0 0.0
    %2459 = vmatpush1.msra.mxu0 0.0
    %2460 = vmatprep.subr.mxu0 0.0
    %2461 = vmatpush1.msra.mxu0 0.0
    %2462 = vmatprep.subr.mxu0 0.0
    %2463 = vmatpush1.msra.mxu0 0.0
    %2464 = vmatprep.subr.mxu0 0.0
    %2465 = vmatpush1.msra.mxu0 0.0
    %2466 = vmatprep.subr.mxu0 0.0
    %2467 = vmatpush1.msra.mxu0 0.0
    %2468 = vmatprep.subr.mxu0 0.0
    %2469 = vmatpush1.msra.mxu0 0.0
    %2470 = vmatprep.subr.mxu0 0.0
    %2471 = vmatpush1.msra.mxu0 0.0
    %2472 = vmatprep.subr.mxu0 0.0
    %2473 = vmatpush1.msra.mxu0 0.0
    %2474 = vmatprep.subr.mxu0 0.0
    %2475 = vmatpush1.msra.mxu0 0.0
    %2476 = vmatprep.subr.mxu0 0.0
    %2477 = vmatpush1.msra.mxu0 0.0
    %2478 = vmatprep.subr.mxu0 0.0
    %2479 = vmatpush1.msra.mxu0 0.0
    %2480 = vmatprep.subr.mxu0 0.0
    %2481 = vmatpush1.msra.mxu0 0.0
    %2482 = vmatprep.subr.mxu0 0.0
    %2483 = vmatpush1.msra.mxu0 0.0
    %2484 = vmatprep.subr.mxu0 0.0
    %2485 = vmatpush1.msra.mxu0 %v2454
    %2486 = vmatprep.subr.mxu0 0.0
    %2487 = vmatpush1.msra.mxu0 %v2326
    %2488 = vmatprep.subr.mxu0 0.0
    %2489 = vmatpush2.msra.mxu0 0.0
    %2490 = vmatprep.subr.mxu0 0.0
    %2491 = vmatpush2.msra.mxu0 0.0
    %2492 = vmatprep.subr.mxu0 0.0
    %2493 = vmatpush2.msra.mxu0 0.0
    %2494 = vmatprep.subr.mxu0 0.0
    %2495 = vmatpush2.msra.mxu0 0.0
    %2496 = vmatprep.subr.mxu0 0.0
    %2497 = vmatpush2.msra.mxu0 0.0
    %2498 = vmatprep.subr.mxu0 0.0
    %2499 = vmatpush2.msra.mxu0 0.0
    %2500 = vmatprep.subr.mxu0 0.0
    %2501 = vmatpush2.msra.mxu0 0.0
    %2502 = vmatprep.subr.mxu0 0.0
    %2503 = vmatpush2.msra.mxu0 0.0
    %2504 = vmatprep.subr.mxu0 0.0
    %2505 = vmatpush2.msra.mxu0 0.0
    %2506 = vmatprep.subr.mxu0 0.0
    %2507 = vmatpush2.msra.mxu0 0.0
    %2508 = vmatprep.subr.mxu0 0.0
    %2509 = vmatpush2.msra.mxu0 0.0
    %2510 = vmatprep.subr.mxu0 0.0
    %2511 = vmatpush2.msra.mxu0 0.0
    %2512 = vmatprep.subr.mxu0 0.0
    %2513 = vmatpush2.msra.mxu0 0.0
    %2514 = vmatprep.subr.mxu0 0.0
    %2515 = vmatpush2.msra.mxu0 0.0
    %2516 = vmatprep.subr.mxu0 0.0
    %2517 = vmatpush2.msra.mxu0 0.0
    %2518 = vmatprep.subr.mxu0 0.0
    %2519 = vmatpush2.msra.mxu0 0.0
    %2520 = vmatprep.mubr.f32.mxu0 0.0
    %2521 = vmatmul.mubr.f32.gmra.mxu0 %v2448
    %v2522 = vpop.f32.mrf.mxu0
    %v2523 = vadd.f32 0.0, %v2522
    %v2524 = vpop.f32.mrf.mxu0
    %2525 = vmatprep.mubr.f32.mxu0 0.0
    %2526 = vmatmul.mubr.f32.gmra.mxu0 %v2451
    %v2527 = vpop.f32.mrf.mxu0
    %v2528 = vadd.f32 0.0, %v2527
    %v2529 = vpop.f32.mrf.mxu0
    %2530 = vdwg.mxu0
    %s2531 = scalar_lea.vmem %s8, 48
    %v2532 = vld [vmem:[%s2531] sm:$0xff]
    %v2533 = vld [vmem:[%s2531 + $0x8] sm:$0xff]
    %v2535 = vsel %vm505, %v2523, 0
    %v2538 = vsel %vm505, %v2528, 0
    %2540 = vmatprep.subr.mxu0 0.0
    %2541 = vmatpush1.msra.mxu0 0.0
    %2542 = vmatprep.subr.mxu0 0.0
    %2543 = vmatpush1.msra.mxu0 0.0
    %2544 = vmatprep.subr.mxu0 0.0
    %2545 = vmatpush1.msra.mxu0 0.0
    %2546 = vmatprep.subr.mxu0 0.0
    %2547 = vmatpush1.msra.mxu0 0.0
    %2548 = vmatprep.subr.mxu0 0.0
    %2549 = vmatpush1.msra.mxu0 0.0
    %2550 = vmatprep.subr.mxu0 0.0
    %2551 = vmatpush1.msra.mxu0 0.0
    %2552 = vmatprep.subr.mxu0 0.0
    %2553 = vmatpush1.msra.mxu0 0.0
    %2554 = vmatprep.subr.mxu0 0.0
    %2555 = vmatpush1.msra.mxu0 0.0
    %2556 = vmatprep.subr.mxu0 0.0
    %2557 = vmatpush1.msra.mxu0 0.0
    %2558 = vmatprep.subr.mxu0 0.0
    %2559 = vmatpush1.msra.mxu0 0.0
    %2560 = vmatprep.subr.mxu0 0.0
    %2561 = vmatpush1.msra.mxu0 0.0
    %2562 = vmatprep.subr.mxu0 0.0
    %2563 = vmatpush1.msra.mxu0 0.0
    %2564 = vmatprep.subr.mxu0 0.0
    %2565 = vmatpush1.msra.mxu0 0.0
    %2566 = vmatprep.subr.mxu0 0.0
    %2567 = vmatpush1.msra.mxu0 0.0
    %2568 = vmatprep.subr.mxu0 0.0
    %2569 = vmatpush1.msra.mxu0 %v2533
    %2570 = vmatprep.subr.mxu0 0.0
    %2571 = vmatpush1.msra.mxu0 %v2532
    %2572 = vmatprep.subr.mxu0 0.0
    %2573 = vmatpush2.msra.mxu0 0.0
    %2574 = vmatprep.subr.mxu0 0.0
    %2575 = vmatpush2.msra.mxu0 0.0
    %2576 = vmatprep.subr.mxu0 0.0
    %2577 = vmatpush2.msra.mxu0 0.0
    %2578 = vmatprep.subr.mxu0 0.0
    %2579 = vmatpush2.msra.mxu0 0.0
    %2580 = vmatprep.subr.mxu0 0.0
    %2581 = vmatpush2.msra.mxu0 0.0
    %2582 = vmatprep.subr.mxu0 0.0
    %2583 = vmatpush2.msra.mxu0 0.0
    %2584 = vmatprep.subr.mxu0 0.0
    %2585 = vmatpush2.msra.mxu0 0.0
    %2586 = vmatprep.subr.mxu0 0.0
    %2587 = vmatpush2.msra.mxu0 0.0
    %2588 = vmatprep.subr.mxu0 0.0
    %2589 = vmatpush2.msra.mxu0 0.0
    %2590 = vmatprep.subr.mxu0 0.0
    %2591 = vmatpush2.msra.mxu0 0.0
    %2592 = vmatprep.subr.mxu0 0.0
    %2593 = vmatpush2.msra.mxu0 0.0
    %2594 = vmatprep.subr.mxu0 0.0
    %2595 = vmatpush2.msra.mxu0 0.0
    %2596 = vmatprep.subr.mxu0 0.0
    %2597 = vmatpush2.msra.mxu0 0.0
    %2598 = vmatprep.subr.mxu0 0.0
    %2599 = vmatpush2.msra.mxu0 0.0
    %2600 = vmatprep.subr.mxu0 0.0
    %2601 = vmatpush2.msra.mxu0 0.0
    %2602 = vmatprep.subr.mxu0 0.0
    %2603 = vmatpush2.msra.mxu0 0.0
    %2604 = vmatprep.mubr.f32.mxu0 0.0
    %2605 = vmatmul.mubr.f32.gmra.mxu0 %v2535
    %v2606 = vpop.f32.mrf.mxu0
    %v2607 = vadd.f32 0.0, %v2606
    %v2608 = vpop.f32.mrf.mxu0
    %2609 = vmatprep.mubr.f32.mxu0 0.0
    %2610 = vmatmul.mubr.f32.gmra.mxu0 %v2538
    %v2611 = vpop.f32.mrf.mxu0
    %v2612 = vadd.f32 0.0, %v2611
    %v2613 = vpop.f32.mrf.mxu0
    %2614 = vdwg.mxu0
    %v2616 = vsel %vm505, %v2068, 0
    %v2619 = vsel %vm505, %v2073, 0
    %2621 = vmatprep.subr.mxu0 0.0
    %2622 = vmatpush1.msra.mxu0 0.0
    %2623 = vmatprep.subr.mxu0 0.0
    %2624 = vmatpush1.msra.mxu0 0.0
    %2625 = vmatprep.subr.mxu0 0.0
    %2626 = vmatpush1.msra.mxu0 0.0
    %2627 = vmatprep.subr.mxu0 0.0
    %2628 = vmatpush1.msra.mxu0 0.0
    %2629 = vmatprep.subr.mxu0 0.0
    %2630 = vmatpush1.msra.mxu0 0.0
    %2631 = vmatprep.subr.mxu0 0.0
    %2632 = vmatpush1.msra.mxu0 0.0
    %2633 = vmatprep.subr.mxu0 0.0
    %2634 = vmatpush1.msra.mxu0 0.0
    %2635 = vmatprep.subr.mxu0 0.0
    %2636 = vmatpush1.msra.mxu0 0.0
    %2637 = vmatprep.subr.mxu0 0.0
    %2638 = vmatpush1.msra.mxu0 0.0
    %2639 = vmatprep.subr.mxu0 0.0
    %2640 = vmatpush1.msra.mxu0 0.0
    %2641 = vmatprep.subr.mxu0 0.0
    %2642 = vmatpush1.msra.mxu0 0.0
    %2643 = vmatprep.subr.mxu0 0.0
    %2644 = vmatpush1.msra.mxu0 0.0
    %2645 = vmatprep.subr.mxu0 0.0
    %2646 = vmatpush1.msra.mxu0 0.0
    %2647 = vmatprep.subr.mxu0 0.0
    %2648 = vmatpush1.msra.mxu0 0.0
    %2649 = vmatprep.subr.mxu0 0.0
    %2650 = vmatpush1.msra.mxu0 %v2078
    %2651 = vmatprep.subr.mxu0 0.0
    %2652 = vmatpush1.msra.mxu0 %v2077
    %2653 = vmatprep.subr.mxu0 0.0
    %2654 = vmatpush2.msra.mxu0 0.0
    %2655 = vmatprep.subr.mxu0 0.0
    %2656 = vmatpush2.msra.mxu0 0.0
    %2657 = vmatprep.subr.mxu0 0.0
    %2658 = vmatpush2.msra.mxu0 0.0
    %2659 = vmatprep.subr.mxu0 0.0
    %2660 = vmatpush2.msra.mxu0 0.0
    %2661 = vmatprep.subr.mxu0 0.0
    %2662 = vmatpush2.msra.mxu0 0.0
    %2663 = vmatprep.subr.mxu0 0.0
    %2664 = vmatpush2.msra.mxu0 0.0
    %2665 = vmatprep.subr.mxu0 0.0
    %2666 = vmatpush2.msra.mxu0 0.0
    %2667 = vmatprep.subr.mxu0 0.0
    %2668 = vmatpush2.msra.mxu0 0.0
    %2669 = vmatprep.subr.mxu0 0.0
    %2670 = vmatpush2.msra.mxu0 0.0
    %2671 = vmatprep.subr.mxu0 0.0
    %2672 = vmatpush2.msra.mxu0 0.0
    %2673 = vmatprep.subr.mxu0 0.0
    %2674 = vmatpush2.msra.mxu0 0.0
    %2675 = vmatprep.subr.mxu0 0.0
    %2676 = vmatpush2.msra.mxu0 0.0
    %2677 = vmatprep.subr.mxu0 0.0
    %2678 = vmatpush2.msra.mxu0 0.0
    %2679 = vmatprep.subr.mxu0 0.0
    %2680 = vmatpush2.msra.mxu0 0.0
    %2681 = vmatprep.subr.mxu0 0.0
    %2682 = vmatpush2.msra.mxu0 0.0
    %2683 = vmatprep.subr.mxu0 0.0
    %2684 = vmatpush2.msra.mxu0 0.0
    %2685 = vmatprep.mubr.f32.mxu0 0.0
    %2686 = vmatmul.mubr.f32.gmra.mxu0 %v2616
    %v2687 = vpop.f32.mrf.mxu0
    %v2688 = vadd.f32 %v2607, %v2687
    %v2689 = vpop.f32.mrf.mxu0
    %2690 = vmatprep.mubr.f32.mxu0 0.0
    %2691 = vmatmul.mubr.f32.gmra.mxu0 %v2619
    %v2692 = vpop.f32.mrf.mxu0
    %v2693 = vadd.f32 %v2612, %v2692
    %v2694 = vpop.f32.mrf.mxu0
    %2695 = vdwg.mxu0
    %v2696 = vadd.f32 %v1576, %v2688
    %v2697 = vadd.f32 %v1577, %v2693
    %v2698 = vld [vmem:[%s9 + $0x8] sm:$0x1]
    %v2699 = vlaneseq
    %v2700 = vshrl.u32 %v2699, 7
    %v2701 = vsub.s32 0, %v2700
    %v2702 = vrot.slane %v2698, %v2701
    %v2703 = vadd.f32 %v2696, %v2702
    %v2704 = vadd.f32 %v2697, %v2702
    %v2705 = vld [vmem:[%s9 + $0x9] sm:$0x1]
    %v2706 = vld [vmem:[%s9 + $0xa] sm:$0x1]
    %v2707 = vsel %vm162, %v2703, 0.0
    %2708 = vadd.xlane.f32.xlu0 %v2707
    %v2709 = vpop.xlane.xlu0 %2708
    %v2710 = vsel %vm166, %v2704, 0.0
    %2711 = vadd.xlane.f32.xlu0 %v2710
    %v2712 = vpop.xlane.xlu0 %2711
    %v2713 = vmul.f32 %v2709, %v170
    %v2714 = vmul.f32 %v2712, %v170
    %v2715 = vsub.f32 %v2703, %v2713
    %v2716 = vsub.f32 %v2704, %v2714
    %v2717 = vmul.f32 %v2715, %v2715
    %v2718 = vmul.f32 %v2716, %v2716
    %v2719 = vsel %vm162, %v2717, 0.0
    %2720 = vadd.xlane.f32.xlu0 %v2719
    %v2721 = vpop.xlane.xlu0 %2720
    %v2722 = vsel %vm166, %v2718, 0.0
    %2723 = vadd.xlane.f32.xlu0 %v2722
    %v2724 = vpop.xlane.xlu0 %2723
    %v2725 = vmul.f32 %v2721, %v170
    %v2726 = vmul.f32 %v2724, %v170
    %v2727 = vadd.f32 %v2725, 1e-05
    %v2728 = vadd.f32 %v2726, 1e-05
    %v2729 = vrsqrt.pop %v2727
    %v2730 = vrsqrt.pop %v2728
    %v2731 = vmul.f32 %v2715, %v2729
    %v2732 = vmul.f32 %v2716, %v2730
    %v2733 = vlaneseq
    %v2734 = vshrl.u32 %v2733, 7
    %v2735 = vsub.s32 0, %v2734
    %v2736 = vrot.slane %v2705, %v2735
    %v2737 = vmul.f32 %v2731, %v2736
    %v2738 = vmul.f32 %v2732, %v2736
    %v2739 = vlaneseq
    %v2740 = vshrl.u32 %v2739, 7
    %v2741 = vsub.s32 0, %v2740
    %v2742 = vrot.slane %v2706, %v2741
    %v2743 = vadd.f32 %v2737, %v2742
    %v2744 = vadd.f32 %v2738, %v2742
    %s2745 = scalar_lea.vmem %s10, 32
    %v2746 = vld [vmem:[%s2745] sm:$0xff]
    %v2747 = vld [vmem:[%s2745 + $0x8] sm:$0xff]
    %v2748 = vld [vmem:[%s2745 + $0x10] sm:$0xff]
    %v2749 = vld [vmem:[%s2745 + $0x18] sm:$0xff]
    %v2750 = vld [vmem:[%s11 + $0x1] sm:$0x1]
    %v2751 = vlaneseq
    %v2752 = vshrl.u32 %v2751, 7
    %v2753 = vsub.s32 0, %v2752
    %v2754 = vrot.slane %v2750, %v2753
    %v2756 = vsel %vm162, %v2743, 0
    %v2759 = vsel %vm162, %v2744, 0
    %2761 = vmatprep.subr.mxu0 0.0
    %2762 = vmatpush1.msra.mxu0 0.0
    %2763 = vmatprep.subr.mxu0 0.0
    %2764 = vmatpush1.msra.mxu0 0.0
    %2765 = vmatprep.subr.mxu0 0.0
    %2766 = vmatpush1.msra.mxu0 0.0
    %2767 = vmatprep.subr.mxu0 0.0
    %2768 = vmatpush1.msra.mxu0 0.0
    %2769 = vmatprep.subr.mxu0 0.0
    %2770 = vmatpush1.msra.mxu0 0.0
    %2771 = vmatprep.subr.mxu0 0.0
    %2772 = vmatpush1.msra.mxu0 0.0
    %2773 = vmatprep.subr.mxu0 0.0
    %2774 = vmatpush1.msra.mxu0 0.0
    %2775 = vmatprep.subr.mxu0 0.0
    %2776 = vmatpush1.msra.mxu0 0.0
    %2777 = vmatprep.subr.mxu0 0.0
    %2778 = vmatpush1.msra.mxu0 0.0
    %2779 = vmatprep.subr.mxu0 0.0
    %2780 = vmatpush1.msra.mxu0 0.0
    %2781 = vmatprep.subr.mxu0 0.0
    %2782 = vmatpush1.msra.mxu0 0.0
    %2783 = vmatprep.subr.mxu0 0.0
    %2784 = vmatpush1.msra.mxu0 0.0
    %2785 = vmatprep.subr.mxu0 0.0
    %2786 = vmatpush1.msra.mxu0 %v2749
    %2787 = vmatprep.subr.mxu0 0.0
    %2788 = vmatpush1.msra.mxu0 %v2748
    %2789 = vmatprep.subr.mxu0 0.0
    %2790 = vmatpush1.msra.mxu0 %v2747
    %2791 = vmatprep.subr.mxu0 0.0
    %2792 = vmatpush1.msra.mxu0 %v2746
    %2793 = vmatprep.subr.mxu0 0.0
    %2794 = vmatpush2.msra.mxu0 0.0
    %2795 = vmatprep.subr.mxu0 0.0
    %2796 = vmatpush2.msra.mxu0 0.0
    %2797 = vmatprep.subr.mxu0 0.0
    %2798 = vmatpush2.msra.mxu0 0.0
    %2799 = vmatprep.subr.mxu0 0.0
    %2800 = vmatpush2.msra.mxu0 0.0
    %2801 = vmatprep.subr.mxu0 0.0
    %2802 = vmatpush2.msra.mxu0 0.0
    %2803 = vmatprep.subr.mxu0 0.0
    %2804 = vmatpush2.msra.mxu0 0.0
    %2805 = vmatprep.subr.mxu0 0.0
    %2806 = vmatpush2.msra.mxu0 0.0
    %2807 = vmatprep.subr.mxu0 0.0
    %2808 = vmatpush2.msra.mxu0 0.0
    %2809 = vmatprep.subr.mxu0 0.0
    %2810 = vmatpush2.msra.mxu0 0.0
    %2811 = vmatprep.subr.mxu0 0.0
    %2812 = vmatpush2.msra.mxu0 0.0
    %2813 = vmatprep.subr.mxu0 0.0
    %2814 = vmatpush2.msra.mxu0 0.0
    %2815 = vmatprep.subr.mxu0 0.0
    %2816 = vmatpush2.msra.mxu0 0.0
    %2817 = vmatprep.subr.mxu0 0.0
    %2818 = vmatpush2.msra.mxu0 0.0
    %2819 = vmatprep.subr.mxu0 0.0
    %2820 = vmatpush2.msra.mxu0 0.0
    %2821 = vmatprep.subr.mxu0 0.0
    %2822 = vmatpush2.msra.mxu0 0.0
    %2823 = vmatprep.subr.mxu0 0.0
    %2824 = vmatpush2.msra.mxu0 0.0
    %2825 = vmatprep.mubr.f32.mxu0 0.0
    %2826 = vmatmul.mubr.f32.gmra.mxu0 %v2756
    %v2827 = vpop.f32.mrf.mxu0
    %v2828 = vadd.f32 %v2754, %v2827
    %v2829 = vpop.f32.mrf.mxu0
    %2830 = vmatprep.mubr.f32.mxu0 0.0
    %2831 = vmatmul.mubr.f32.gmra.mxu0 %v2759
    %v2832 = vpop.f32.mrf.mxu0
    %v2833 = vadd.f32 %v2754, %v2832
    %v2834 = vpop.f32.mrf.mxu0
    %2835 = vdwg.mxu0
    %v2836 = vmul.f32 %v2828, 1.702
    %v2837 = vmul.f32 %v2833, 1.702
    %v2838 = vxor.u32 %v2836, 2147483648
    %v2839 = vxor.u32 %v2837, 2147483648
    %v2840 = vmul.f32 %v2838, 1.442695
    %v2841 = vpow.pop %v2840
    %v2842 = vmul.f32 %v2839, 1.442695
    %v2843 = vpow.pop %v2842
    %v2844 = vadd.f32 %v2841, 1.0
    %v2845 = vadd.f32 %v2843, 1.0
    %v2846 = vrcp.pop %v2844
    %v2847 = vmul.f32 1.0, %v2846
    %v2848 = vrcp.pop %v2845
    %v2849 = vmul.f32 1.0, %v2848
    %v2850 = vmul.f32 %v2828, %v2847
    %v2851 = vmul.f32 %v2833, %v2849
    %s2852 = scalar_lea.vmem %s12, 128
    %v2853 = vld [vmem:[%s2852] sm:$0xff]
    %v2854 = vld [vmem:[%s2852 + $0x8] sm:$0xff]
    %v2855 = vld [vmem:[%s2852 + $0x10] sm:$0xff]
    %v2856 = vld [vmem:[%s2852 + $0x18] sm:$0xff]
    %v2857 = vld [vmem:[%s2852 + $0x20] sm:$0xff]
    %v2858 = vld [vmem:[%s2852 + $0x28] sm:$0xff]
    %v2859 = vld [vmem:[%s2852 + $0x30] sm:$0xff]
    %v2860 = vld [vmem:[%s2852 + $0x38] sm:$0xff]
    %v2861 = vld [vmem:[%s2852 + $0x40] sm:$0xff]
    %v2862 = vld [vmem:[%s2852 + $0x48] sm:$0xff]
    %v2863 = vld [vmem:[%s2852 + $0x50] sm:$0xff]
    %v2864 = vld [vmem:[%s2852 + $0x58] sm:$0xff]
    %v2865 = vld [vmem:[%s2852 + $0x60] sm:$0xff]
    %v2866 = vld [vmem:[%s2852 + $0x68] sm:$0xff]
    %v2867 = vld [vmem:[%s2852 + $0x70] sm:$0xff]
    %v2868 = vld [vmem:[%s2852 + $0x78] sm:$0xff]
    %v2869 = vld [vmem:[%s9 + $0xb] sm:$0x1]
    %v2870 = vlaneseq
    %v2871 = vshrl.u32 %v2870, 7
    %v2872 = vsub.s32 0, %v2871
    %v2873 = vrot.slane %v2869, %v2872
    %2874 = vmatprep.subr.mxu0 0.0
    %2875 = vmatpush1.msra.mxu0 %v2868
    %2876 = vmatprep.subr.mxu0 0.0
    %2877 = vmatpush1.msra.mxu0 %v2867
    %2878 = vmatprep.subr.mxu0 0.0
    %2879 = vmatpush1.msra.mxu0 %v2866
    %2880 = vmatprep.subr.mxu0 0.0
    %2881 = vmatpush1.msra.mxu0 %v2865
    %2882 = vmatprep.subr.mxu0 0.0
    %2883 = vmatpush1.msra.mxu0 %v2864
    %2884 = vmatprep.subr.mxu0 0.0
    %2885 = vmatpush1.msra.mxu0 %v2863
    %2886 = vmatprep.subr.mxu0 0.0
    %2887 = vmatpush1.msra.mxu0 %v2862
    %2888 = vmatprep.subr.mxu0 0.0
    %2889 = vmatpush1.msra.mxu0 %v2861
    %2890 = vmatprep.subr.mxu0 0.0
    %2891 = vmatpush1.msra.mxu0 %v2860
    %2892 = vmatprep.subr.mxu0 0.0
    %2893 = vmatpush1.msra.mxu0 %v2859
    %2894 = vmatprep.subr.mxu0 0.0
    %2895 = vmatpush1.msra.mxu0 %v2858
    %2896 = vmatprep.subr.mxu0 0.0
    %2897 = vmatpush1.msra.mxu0 %v2857
    %2898 = vmatprep.subr.mxu0 0.0
    %2899 = vmatpush1.msra.mxu0 %v2856
    %2900 = vmatprep.subr.mxu0 0.0
    %2901 = vmatpush1.msra.mxu0 %v2855
    %2902 = vmatprep.subr.mxu0 0.0
    %2903 = vmatpush1.msra.mxu0 %v2854
    %2904 = vmatprep.subr.mxu0 0.0
    %2905 = vmatpush1.msra.mxu0 %v2853
    %2906 = vmatprep.subr.mxu0 0.0
    %2907 = vmatpush2.msra.mxu0 0.0
    %2908 = vmatprep.subr.mxu0 0.0
    %2909 = vmatpush2.msra.mxu0 0.0
    %2910 = vmatprep.subr.mxu0 0.0
    %2911 = vmatpush2.msra.mxu0 0.0
    %2912 = vmatprep.subr.mxu0 0.0
    %2913 = vmatpush2.msra.mxu0 0.0
    %2914 = vmatprep.subr.mxu0 0.0
    %2915 = vmatpush2.msra.mxu0 0.0
    %2916 = vmatprep.subr.mxu0 0.0
    %2917 = vmatpush2.msra.mxu0 0.0
    %2918 = vmatprep.subr.mxu0 0.0
    %2919 = vmatpush2.msra.mxu0 0.0
    %2920 = vmatprep.subr.mxu0 0.0
    %2921 = vmatpush2.msra.mxu0 0.0
    %2922 = vmatprep.subr.mxu0 0.0
    %2923 = vmatpush2.msra.mxu0 0.0
    %2924 = vmatprep.subr.mxu0 0.0
    %2925 = vmatpush2.msra.mxu0 0.0
    %2926 = vmatprep.subr.mxu0 0.0
    %2927 = vmatpush2.msra.mxu0 0.0
    %2928 = vmatprep.subr.mxu0 0.0
    %2929 = vmatpush2.msra.mxu0 0.0
    %2930 = vmatprep.subr.mxu0 0.0
    %2931 = vmatpush2.msra.mxu0 0.0
    %2932 = vmatprep.subr.mxu0 0.0
    %2933 = vmatpush2.msra.mxu0 0.0
    %2934 = vmatprep.subr.mxu0 0.0
    %2935 = vmatpush2.msra.mxu0 0.0
    %2936 = vmatprep.subr.mxu0 0.0
    %2937 = vmatpush2.msra.mxu0 0.0
    %2938 = vmatprep.mubr.f32.mxu0 0.0
    %2939 = vmatmul.mubr.f32.gmra.mxu0 %v2850
    %v2940 = vpop.f32.mrf.mxu0
    %v2941 = vadd.f32 %v2873, %v2940
    %v2942 = vpop.f32.mrf.mxu0
    %2943 = vmatprep.mubr.f32.mxu0 0.0
    %2944 = vmatmul.mubr.f32.gmra.mxu0 %v2851
    %v2945 = vpop.f32.mrf.mxu0
    %v2946 = vadd.f32 %v2873, %v2945
    %v2947 = vpop.f32.mrf.mxu0
    %2948 = vdwg.mxu0
    %v2949 = vadd.f32 %v2703, %v2941
    %v2950 = vadd.f32 %v2704, %v2946
    %v2951 = vld [vmem:[%s5] sm:$0x3]
    %v2953 = vsel %vm597, %v2951, 0
    %v2956 = vsel %vm627, %v2950, 0
    %2958 = vmatprep.subr.mxu0 0.0
    %2959 = vmatpush1.msra.mxu0 0.0
    %2960 = vmatprep.subr.mxu0 0.0
    %2961 = vmatpush1.msra.mxu0 0.0
    %2962 = vmatprep.subr.mxu0 0.0
    %2963 = vmatpush1.msra.mxu0 0.0
    %2964 = vmatprep.subr.mxu0 0.0
    %2965 = vmatpush1.msra.mxu0 0.0
    %2966 = vmatprep.subr.mxu0 0.0
    %2967 = vmatpush1.msra.mxu0 0.0
    %2968 = vmatprep.subr.mxu0 0.0
    %2969 = vmatpush1.msra.mxu0 0.0
    %2970 = vmatprep.subr.mxu0 0.0
    %2971 = vmatpush1.msra.mxu0 0.0
    %2972 = vmatprep.subr.mxu0 0.0
    %2973 = vmatpush1.msra.mxu0 0.0
    %2974 = vmatprep.subr.mxu0 0.0
    %2975 = vmatpush1.msra.mxu0 0.0
    %2976 = vmatprep.subr.mxu0 0.0
    %2977 = vmatpush1.msra.mxu0 0.0
    %2978 = vmatprep.subr.mxu0 0.0
    %2979 = vmatpush1.msra.mxu0 0.0
    %2980 = vmatprep.subr.mxu0 0.0
    %2981 = vmatpush1.msra.mxu0 0.0
    %2982 = vmatprep.subr.mxu0 0.0
    %2983 = vmatpush1.msra.mxu0 0.0
    %2984 = vmatprep.subr.mxu0 0.0
    %2985 = vmatpush1.msra.mxu0 0.0
    %2986 = vmatprep.subr.mxu0 0.0
    %2987 = vmatpush1.msra.mxu0 %v2956
    %2988 = vmatprep.subr.mxu0 0.0
    %2989 = vmatpush1.msra.mxu0 %v2949
    %2990 = vmatprep.subr.mxu0 0.0
    %2991 = vmatpush2.msra.mxu0 0.0
    %2992 = vmatprep.subr.mxu0 0.0
    %2993 = vmatpush2.msra.mxu0 0.0
    %2994 = vmatprep.subr.mxu0 0.0
    %2995 = vmatpush2.msra.mxu0 0.0
    %2996 = vmatprep.subr.mxu0 0.0
    %2997 = vmatpush2.msra.mxu0 0.0
    %2998 = vmatprep.subr.mxu0 0.0
    %2999 = vmatpush2.msra.mxu0 0.0
    %3000 = vmatprep.subr.mxu0 0.0
    %3001 = vmatpush2.msra.mxu0 0.0
    %3002 = vmatprep.subr.mxu0 0.0
    %3003 = vmatpush2.msra.mxu0 0.0
    %3004 = vmatprep.subr.mxu0 0.0
    %3005 = vmatpush2.msra.mxu0 0.0
    %3006 = vmatprep.subr.mxu0 0.0
    %3007 = vmatpush2.msra.mxu0 0.0
    %3008 = vmatprep.subr.mxu0 0.0
    %3009 = vmatpush2.msra.mxu0 0.0
    %3010 = vmatprep.subr.mxu0 0.0
    %3011 = vmatpush2.msra.mxu0 0.0
    %3012 = vmatprep.subr.mxu0 0.0
    %3013 = vmatpush2.msra.mxu0 0.0
    %3014 = vmatprep.subr.mxu0 0.0
    %3015 = vmatpush2.msra.mxu0 0.0
    %3016 = vmatprep.subr.mxu0 0.0
    %3017 = vmatpush2.msra.mxu0 0.0
    %3018 = vmatprep.subr.mxu0 0.0
    %3019 = vmatpush2.msra.mxu0 0.0
    %3020 = vmatprep.subr.mxu0 0.0
    %3021 = vmatpush2.msra.mxu0 0.0
    %3022 = vmatprep.mubr.f32.mxu0 0.0
    %3023 = vmatmul.mubr.f32.gmra.mxu0 %v2953
    %v3024 = vpop.f32.mrf.mxu0
    %v3025 = vadd.f32 0.0, %v3024
    %v3026 = vpop.f32.mrf.mxu0
    %3027 = vdwg.mxu0
    %v3028 = vld [vmem:[%s3 + $0x2] sm:$0x1]
    %v3029 = vld [vmem:[%s3 + $0x3] sm:$0x1]
    %v3030 = vsel %vm166, %v3025, 0.0
    %3031 = vadd.xlane.f32.xlu0 %v3030
    %v3032 = vpop.xlane.xlu0 %3031
    %v3033 = vmul.f32 %v3032, %v170
    %v3034 = vsub.f32 %v3025, %v3033
    %v3035 = vmul.f32 %v3034, %v3034
    %v3036 = vsel %vm166, %v3035, 0.0
    %3037 = vadd.xlane.f32.xlu0 %v3036
    %v3038 = vpop.xlane.xlu0 %3037
    %v3039 = vmul.f32 %v3038, %v170
    %v3040 = vadd.f32 %v3039, 1e-05
    %v3041 = vrsqrt.pop %v3040
    %v3042 = vmul.f32 %v3034, %v3041
    %v3043 = vlaneseq
    %v3044 = vshrl.u32 %v3043, 7
    %v3045 = vsub.s32 0, %v3044
    %v3046 = vrot.slane %v3028, %v3045
    %v3047 = vmul.f32 %v3042, %v3046
    %v3048 = vlaneseq
    %v3049 = vshrl.u32 %v3048, 7
    %v3050 = vsub.s32 0, %v3049
    %v3051 = vrot.slane %v3029, %v3050
    %v3052 = vadd.f32 %v3047, %v3051
    %v3053 = vld [vmem:[%s13] sm:$0xff]
    %v3054 = vld [vmem:[%s13 + $0x8] sm:$0xff]
    %v3055 = vld [vmem:[%s13 + $0x10] sm:$0xff]
    %v3056 = vld [vmem:[%s13 + $0x18] sm:$0xff]
    %v3058 = vsel %vm162, %v3052, 0
    %3060 = vmatprep.subr.mxu0 0.0
    %3061 = vmatpush1.msra.mxu0 0.0
    %3062 = vmatprep.subr.mxu0 0.0
    %3063 = vmatpush1.msra.mxu0 0.0
    %3064 = vmatprep.subr.mxu0 0.0
    %3065 = vmatpush1.msra.mxu0 0.0
    %3066 = vmatprep.subr.mxu0 0.0
    %3067 = vmatpush1.msra.mxu0 0.0
    %3068 = vmatprep.subr.mxu0 0.0
    %3069 = vmatpush1.msra.mxu0 0.0
    %3070 = vmatprep.subr.mxu0 0.0
    %3071 = vmatpush1.msra.mxu0 0.0
    %3072 = vmatprep.subr.mxu0 0.0
    %3073 = vmatpush1.msra.mxu0 0.0
    %3074 = vmatprep.subr.mxu0 0.0
    %3075 = vmatpush1.msra.mxu0 0.0
    %3076 = vmatprep.subr.mxu0 0.0
    %3077 = vmatpush1.msra.mxu0 0.0
    %3078 = vmatprep.subr.mxu0 0.0
    %3079 = vmatpush1.msra.mxu0 0.0
    %3080 = vmatprep.subr.mxu0 0.0
    %3081 = vmatpush1.msra.mxu0 0.0
    %3082 = vmatprep.subr.mxu0 0.0
    %3083 = vmatpush1.msra.mxu0 0.0
    %3084 = vmatprep.subr.mxu0 0.0
    %3085 = vmatpush1.msra.mxu0 %v3056
    %3086 = vmatprep.subr.mxu0 0.0
    %3087 = vmatpush1.msra.mxu0 %v3055
    %3088 = vmatprep.subr.mxu0 0.0
    %3089 = vmatpush1.msra.mxu0 %v3054
    %3090 = vmatprep.subr.mxu0 0.0
    %3091 = vmatpush1.msra.mxu0 %v3053
    %3092 = vmatprep.subr.mxu0 0.0
    %3093 = vmatpush2.msra.mxu0 0.0
    %3094 = vmatprep.subr.mxu0 0.0
    %3095 = vmatpush2.msra.mxu0 0.0
    %3096 = vmatprep.subr.mxu0 0.0
    %3097 = vmatpush2.msra.mxu0 0.0
    %3098 = vmatprep.subr.mxu0 0.0
    %3099 = vmatpush2.msra.mxu0 0.0
    %3100 = vmatprep.subr.mxu0 0.0
    %3101 = vmatpush2.msra.mxu0 0.0
    %3102 = vmatprep.subr.mxu0 0.0
    %3103 = vmatpush2.msra.mxu0 0.0
    %3104 = vmatprep.subr.mxu0 0.0
    %3105 = vmatpush2.msra.mxu0 0.0
    %3106 = vmatprep.subr.mxu0 0.0
    %3107 = vmatpush2.msra.mxu0 0.0
    %3108 = vmatprep.subr.mxu0 0.0
    %3109 = vmatpush2.msra.mxu0 0.0
    %3110 = vmatprep.subr.mxu0 0.0
    %3111 = vmatpush2.msra.mxu0 0.0
    %3112 = vmatprep.subr.mxu0 0.0
    %3113 = vmatpush2.msra.mxu0 0.0
    %3114 = vmatprep.subr.mxu0 0.0
    %3115 = vmatpush2.msra.mxu0 0.0
    %3116 = vmatprep.subr.mxu0 0.0
    %3117 = vmatpush2.msra.mxu0 0.0
    %3118 = vmatprep.subr.mxu0 0.0
    %3119 = vmatpush2.msra.mxu0 0.0
    %3120 = vmatprep.subr.mxu0 0.0
    %3121 = vmatpush2.msra.mxu0 0.0
    %3122 = vmatprep.subr.mxu0 0.0
    %3123 = vmatpush2.msra.mxu0 0.0
    %3124 = vmatprep.mubr.f32.mxu0 0.0
    %3125 = vmatmul.mubr.f32.gmra.mxu0 %v3058
    %v3126 = vpop.f32.mrf.mxu0
    %v3127 = vadd.f32 0.0, %v3126
    %v3128 = vpop.f32.mrf.mxu0
    %3129 = vdwg.mxu0
    %vm3130 = vcmask 123904
    %3131 = vst.msk [vmem:[#allocation2] sm:$0x3] %vm3130, %v3127
    // Predicated region
    $region58: #{encode_image.1} parent=1 // pred_check
      _
    $region59: #{encode_image.1} parent=1 // pred_check_branch
      %3133 = sbr.rel (0) target = $region61
    $region60: #{encode_image.1} parent=1 // pred_region
      %s3135 = ssub.s32 32, 32
      %3136 = vsyncadd [#allocation3], %s3135
      %s3138 = sshll.u32 [#allocation2], 4
      %s3139 = int_to_ptr.vmem [resolvable:$true] %s3138
      %3141 = dma.vmem_to_hbm [thread:$0]  %s3139, 32, %s14, [#allocation3]
    $region61: #{encode_image.1} parent=1 // pred_fallthru
      _
    // Predicated region
    $region62: #{encode_image.1} parent=1 // pred_check
      _
    $region63: #{encode_image.1} parent=1 // pred_check_branch
      %3143 = sbr.rel (0) target = $region65
    $region64: #{encode_image.1} parent=1 // pred_region
      %3144 = dma.done [#allocation3], 32
    $region65: #{encode_image.1} parent=1 // pred_fallthru
      _
    %3145 = vsyncpa [#allocation3], 1

</llo_original>
